<compile_context>
chip_gen: v7x
topology: tpu7x:2x2x1
jax: 0.10.0
libtpu: 0.0.40
codegen_flags: <defaults>
</compile_context>

<pallas_src>
import numpy as np
import jax
import jax.numpy as jnp
from jax.experimental import pallas as pl
from jax.experimental.pallas import tpu as pltpu

TB = 8  # batch tile per grid step; multiple of 8 so all reshapes are tile-aligned


# ------------------------------ fused kernel --------------------------------

def _lenet5_kernel(x_ref, m1a_ref, m1b_ref, b1_ref, m2a_ref, m2b_ref, b2_ref,
                   m3_ref, b3_ref, wf1_ref, bf1_ref, wf2_ref, bf2_ref, out_ref):
    """One batch tile (TB images) per grid step.

    x_ref  : (32, TB, 32)   raw image, [h, b, w]
    m1a/b  : (5, 32, 84)    conv1 Toeplitz weights, W-pool (even/odd cols) folded
    m2a/b  : (5, 84, 80)    conv2 Toeplitz weights, W-pool folded
    m3     : (5, 80, 120)   conv3 per-kh weights
    wf1    : (120, 84)  wf2: (84, 128) (lane padded)
    out_ref: (TB, 128)      lane-dense logits block
    """
    f32 = jnp.float32

    def conv_stage(inp, hout, kin, m_ref):
        # 5 accumulating MXU dots; TB folded into M via tile-aligned reshape.
        acc = None
        for kh in range(5):
            lhs = inp[kh:kh + hout].reshape(hout * TB, kin)
            d = jnp.dot(lhs, m_ref[kh], preferred_element_type=f32)
            acc = d if acc is None else acc + d
        return acc

    # ---- conv1 + ReLU + 2x2 maxpool (W-pool folded into weights) -----------
    ca = conv_stage(x_ref, 28, 32, m1a_ref)                 # (224, 84) even cols
    cb = conv_stage(x_ref, 28, 32, m1b_ref)                 # (224, 84) odd cols
    m = jnp.maximum(jnp.maximum(ca, cb) + b1_ref[...], 0.0)  # bias + ReLU
    mr = m.reshape(14, 2, TB, 84)                            # split H row pairs
    a2 = jnp.maximum(mr[:, 0], mr[:, 1])                     # (14, TB, 84)

    # ---- conv2 + ReLU + 2x2 maxpool ----------------------------------------
    ca = conv_stage(a2, 10, 84, m2a_ref)                     # (80, 80)
    cb = conv_stage(a2, 10, 84, m2b_ref)
    m = jnp.maximum(jnp.maximum(ca, cb) + b2_ref[...], 0.0)
    mr = m.reshape(5, 2, TB, 80)
    a3 = jnp.maximum(mr[:, 0], mr[:, 1])                     # (5, TB, 80)

    # ---- conv3 (1x1 spatial output) + ReLU ----------------------------------
    acc = None
    for kh in range(5):
        d = jnp.dot(a3[kh], m3_ref[kh], preferred_element_type=f32)
        acc = d if acc is None else acc + d
    h3 = jnp.maximum(acc + b3_ref[...], 0.0)                 # (TB, 120)

    # ---- fc1 + ReLU, fc2 (128-lane padded) -----------------------------------
    h4 = jnp.maximum(
        jnp.dot(h3, wf1_ref[...], preferred_element_type=f32) + bf1_ref[...], 0.0)
    out_ref[...] = (jnp.dot(h4, wf2_ref[...], preferred_element_type=f32)
                    + bf2_ref[...])


# ------------------------------ forward wrapper ------------------------------

def lenet5_forward(x_nchw, kp):
    """x_nchw: (B, 1, 32, 32) -> logits (B, 10)."""
    B = x_nchw.shape[0]
    x = x_nchw.reshape(B, 32, 32).astype(jnp.float32)
    Bp = ((B + TB - 1) // TB) * TB
    if Bp != B:
        x = jnp.pad(x, ((0, Bp - B), (0, 0), (0, 0)))
    x_t = jnp.transpose(x, (1, 0, 2))                        # (32, Bp, 32) [h, b, w]

    out = pl.pallas_call(
        _lenet5_kernel,
        out_shape=jax.ShapeDtypeStruct((Bp, 128), jnp.float32),
        grid=(Bp // TB,),
        in_specs=[
            pl.BlockSpec((32, TB, 32), lambda b: (0, b, 0)),   # image tile
            pl.BlockSpec((5, 32, 84), lambda b: (0, 0, 0)),    # m1a
            pl.BlockSpec((5, 32, 84), lambda b: (0, 0, 0)),    # m1b
            pl.BlockSpec((1, 84), lambda b: (0, 0)),           # b1 (lane tiled)
            pl.BlockSpec((5, 84, 80), lambda b: (0, 0, 0)),    # m2a
            pl.BlockSpec((5, 84, 80), lambda b: (0, 0, 0)),    # m2b
            pl.BlockSpec((1, 80), lambda b: (0, 0)),           # b2 (lane tiled)
            pl.BlockSpec((5, 80, 120), lambda b: (0, 0, 0)),   # m3
            pl.BlockSpec((1, 120), lambda b: (0, 0)),          # b3
            pl.BlockSpec((120, 84), lambda b: (0, 0)),         # wf1
            pl.BlockSpec((1, 84), lambda b: (0, 0)),           # bf1
            pl.BlockSpec((84, 128), lambda b: (0, 0)),         # wf2 (padded)
            pl.BlockSpec((1, 128), lambda b: (0, 0)),          # bf2 (padded)
        ],
        out_specs=pl.BlockSpec((TB, 128), lambda b: (b, 0)),
        compiler_params=pltpu.CompilerParams(
            dimension_semantics=("parallel",),   # batch tiles across v7x TCs
            vmem_limit_bytes=32 * 1024 * 1024,
        ),
    )(x_t, kp["m1a"], kp["m1b"], kp["b1"], kp["m2a"], kp["m2b"], kp["b2"],
      kp["m3"], kp["b3"], kp["wf1"], kp["bf1"], kp["wf2"], kp["bf2"])

    return out[:B, :10]


# ------------------------------- parameters ----------------------------------

def init_params(key):
    """PyTorch-layout parameters with PyTorch's default U(+-1/sqrt(fan_in)) init."""
    def uniform(k, shape, fan_in):
        bound = 1.0 / jnp.sqrt(jnp.float32(fan_in))
        return jax.random.uniform(k, shape, jnp.float32, -bound, bound)

    ks = jax.random.split(key, 10)
    return {
        "c1_w": uniform(ks[0], (6, 1, 5, 5), 1 * 5 * 5),
        "c1_b": uniform(ks[1], (6,), 1 * 5 * 5),
        "c2_w": uniform(ks[2], (16, 6, 5, 5), 6 * 5 * 5),
        "c2_b": uniform(ks[3], (16,), 6 * 5 * 5),
        "c3_w": uniform(ks[4], (120, 16, 5, 5), 16 * 5 * 5),
        "c3_b": uniform(ks[5], (120,), 16 * 5 * 5),
        "fc1_w": uniform(ks[6], (84, 120), 120),     # PyTorch Linear: (out, in)
        "fc1_b": uniform(ks[7], (84,), 120),
        "fc2_w": uniform(ks[8], (10, 84), 84),
        "fc2_b": uniform(ks[9], (10,), 84),
    }


def pack_params(p):
    """One-time repack of PyTorch-layout weights into kernel-ready matrices.

    conv1/conv2 become Toeplitz ("shift-folded") matrices so each conv stage is
    5 accumulating dots; the stride-2 W max-pool is folded in as separate
    even-column ('a') and odd-column ('b') weight sets.  All transposes/padding
    happen here, never per forward call.
    """
    w1 = np.asarray(p["c1_w"], np.float32)[:, 0]       # (6, 5, 5)   [co, kh, kw]
    w2 = np.asarray(p["c2_w"], np.float32)             # (16, 6, 5, 5)
    w3 = np.asarray(p["c3_w"], np.float32)             # (120, 16, 5, 5)

    # conv1: out lane = j*6 + co   (j = pooled column),  K = input width (32)
    m1a = np.zeros((5, 32, 84), np.float32)
    m1b = np.zeros((5, 32, 84), np.float32)
    for kh in range(5):
        for j in range(14):
            for kw in range(5):
                m1a[kh, 2 * j + kw,     j * 6:(j + 1) * 6] = w1[:, kh, kw]
                m1b[kh, 2 * j + 1 + kw, j * 6:(j + 1) * 6] = w1[:, kh, kw]

    # conv2: in lane = xw*6 + ci, out lane = j*16 + co,  K = 84
    m2a = np.zeros((5, 84, 80), np.float32)
    m2b = np.zeros((5, 84, 80), np.float32)
    for kh in range(5):
        for j in range(5):
            for kw in range(5):
                blk = w2[:, :, kh, kw].T                          # (ci, co)
                xa, xb = 2 * j + kw, 2 * j + 1 + kw
                m2a[kh, xa * 6:(xa + 1) * 6, j * 16:(j + 1) * 16] = blk
                m2b[kh, xb * 6:(xb + 1) * 6, j * 16:(j + 1) * 16] = blk

    # conv3: in lane = kw*16 + ci, out lane = co,  K = 80
    m3 = np.zeros((5, 80, 120), np.float32)
    for kh in range(5):
        for kw in range(5):
            m3[kh, kw * 16:(kw + 1) * 16, :] = w3[:, :, kh, kw].T  # (ci, co)

    b1l = np.tile(np.asarray(p["c1_b"], np.float32), 14).reshape(1, 84)
    b2l = np.tile(np.asarray(p["c2_b"], np.float32), 5).reshape(1, 80)
    b3l = np.asarray(p["c3_b"], np.float32).reshape(1, 120)

    wf1 = np.asarray(p["fc1_w"], np.float32).T                     # (120, 84)
    bf1 = np.asarray(p["fc1_b"], np.float32).reshape(1, 84)
    wf2 = np.zeros((84, 128), np.float32)
    wf2[:, :10] = np.asarray(p["fc2_w"], np.float32).T             # zero-padded lanes
    bf2 = np.zeros((1, 128), np.float32)
    bf2[0, :10] = np.asarray(p["fc2_b"], np.float32)

    packed = dict(m1a=m1a, m1b=m1b, b1=b1l, m2a=m2a, m2b=m2b, b2=b2l,
                  m3=m3, b3=b3l, wf1=wf1, bf1=bf1, wf2=wf2, bf2=bf2)
    return {k: jnp.asarray(v) for k, v in packed.items()}


# ---------------------------------- main --------------------------------------

if __name__ == "__main__":
    key = jax.random.PRNGKey(0)
    k_param, k_x = jax.random.split(key)

    params = pack_params(init_params(k_param))   # all weight repacking hoisted here
    # LeNet-5 needs 32x32 single-channel input; batch 16 = 2 grid steps of TB=8.
    x = jax.random.normal(k_x, (16, 1, 32, 32), dtype=jnp.float32)

    fwd = jax.jit(lenet5_forward)
    out = jax.block_until_ready(fwd(x, params))
    assert out.shape == (16, 10), out.shape
    print("KERNEL_OK")
</pallas_src>

<mosaic_0001>
module attributes {stable_mosaic.version = 11 : i64} {
  func.func @_lenet5_kernel(%arg0: i32, %arg1: memref<32x8x32xf32, #tpu.memory_space<vmem>>, %arg2: memref<5x32x84xf32, #tpu.memory_space<vmem>>, %arg3: memref<5x32x84xf32, #tpu.memory_space<vmem>>, %arg4: memref<1x84xf32, #tpu.memory_space<vmem>>, %arg5: memref<5x84x80xf32, #tpu.memory_space<vmem>>, %arg6: memref<5x84x80xf32, #tpu.memory_space<vmem>>, %arg7: memref<1x80xf32, #tpu.memory_space<vmem>>, %arg8: memref<5x80x120xf32, #tpu.memory_space<vmem>>, %arg9: memref<1x120xf32, #tpu.memory_space<vmem>>, %arg10: memref<120x84xf32, #tpu.memory_space<vmem>>, %arg11: memref<1x84xf32, #tpu.memory_space<vmem>>, %arg12: memref<84x128xf32, #tpu.memory_space<vmem>>, %arg13: memref<1x128xf32, #tpu.memory_space<vmem>>, %arg14: memref<8x128xf32, #tpu.memory_space<vmem>>) attributes {dimension_semantics = [#tpu.dimension_semantics<parallel>], iteration_bounds = array<i64: 2>, scalar_prefetch = 0 : i64, scratch_operands = 0 : i64, tpu.core_type = #tpu.core_type<tc>, window_params = [{transform_indices = @transform_0, window_bounds = array<i64: 32, 8, 32>}, {pipeline_mode = #tpu.pipeline_mode<synchronous>, transform_indices = @transform_1, window_bounds = array<i64: 5, 32, 84>}, {pipeline_mode = #tpu.pipeline_mode<synchronous>, transform_indices = @transform_2, window_bounds = array<i64: 5, 32, 84>}, {pipeline_mode = #tpu.pipeline_mode<synchronous>, transform_indices = @transform_3, window_bounds = array<i64: 1, 84>}, {pipeline_mode = #tpu.pipeline_mode<synchronous>, transform_indices = @transform_4, window_bounds = array<i64: 5, 84, 80>}, {pipeline_mode = #tpu.pipeline_mode<synchronous>, transform_indices = @transform_5, window_bounds = array<i64: 5, 84, 80>}, {pipeline_mode = #tpu.pipeline_mode<synchronous>, transform_indices = @transform_6, window_bounds = array<i64: 1, 80>}, {pipeline_mode = #tpu.pipeline_mode<synchronous>, transform_indices = @transform_7, window_bounds = array<i64: 5, 80, 120>}, {pipeline_mode = #tpu.pipeline_mode<synchronous>, transform_indices = @transform_8, window_bounds = array<i64: 1, 120>}, {pipeline_mode = #tpu.pipeline_mode<synchronous>, transform_indices = @transform_9, window_bounds = array<i64: 120, 84>}, {pipeline_mode = #tpu.pipeline_mode<synchronous>, transform_indices = @transform_10, window_bounds = array<i64: 1, 84>}, {pipeline_mode = #tpu.pipeline_mode<synchronous>, transform_indices = @transform_11, window_bounds = array<i64: 84, 128>}, {pipeline_mode = #tpu.pipeline_mode<synchronous>, transform_indices = @transform_12, window_bounds = array<i64: 1, 128>}, {transform_indices = @transform_13, window_bounds = array<i64: 8, 128>}]} {
    %c0 = arith.constant 0 : index
    %c0_0 = arith.constant 0 : index
    %c0_1 = arith.constant 0 : index
    %0 = vector.load %arg1[%c0, %c0_0, %c0_1] : memref<32x8x32xf32, #tpu.memory_space<vmem>>, vector<28x8x32xf32>
    %1 = vector.shape_cast %0 : vector<28x8x32xf32> to vector<224x32xf32>
    %c0_2 = arith.constant 0 : index
    %c0_3 = arith.constant 0 : index
    %c0_4 = arith.constant 0 : index
    %2 = vector.load %arg2[%c0_2, %c0_3, %c0_4] : memref<5x32x84xf32, #tpu.memory_space<vmem>>, vector<1x32x84xf32>
    %3 = vector.shape_cast %2 : vector<1x32x84xf32> to vector<32x84xf32>
    %cst = arith.constant dense<0.000000e+00> : vector<224x84xf32>
    %4 = tpu.matmul %1, %3, %cst {dimension_numbers = #tpu.dot_dimension_numbers<[1], [0], [0], [1], [0, 0, 1, 1], [], []>} : vector<224x32xf32>, vector<32x84xf32>, vector<224x84xf32> -> vector<224x84xf32>
    %c1 = arith.constant 1 : index
    %c0_5 = arith.constant 0 : index
    %c0_6 = arith.constant 0 : index
    %5 = vector.load %arg1[%c1, %c0_5, %c0_6] : memref<32x8x32xf32, #tpu.memory_space<vmem>>, vector<28x8x32xf32>
    %6 = vector.shape_cast %5 : vector<28x8x32xf32> to vector<224x32xf32>
    %c1_7 = arith.constant 1 : index
    %c0_8 = arith.constant 0 : index
    %c0_9 = arith.constant 0 : index
    %7 = vector.load %arg2[%c1_7, %c0_8, %c0_9] : memref<5x32x84xf32, #tpu.memory_space<vmem>>, vector<1x32x84xf32>
    %8 = vector.shape_cast %7 : vector<1x32x84xf32> to vector<32x84xf32>
    %cst_10 = arith.constant dense<0.000000e+00> : vector<224x84xf32>
    %9 = tpu.matmul %6, %8, %cst_10 {dimension_numbers = #tpu.dot_dimension_numbers<[1], [0], [0], [1], [0, 0, 1, 1], [], []>} : vector<224x32xf32>, vector<32x84xf32>, vector<224x84xf32> -> vector<224x84xf32>
    %10 = arith.addf %4, %9 : vector<224x84xf32>
    %c2 = arith.constant 2 : index
    %c0_11 = arith.constant 0 : index
    %c0_12 = arith.constant 0 : index
    %11 = vector.load %arg1[%c2, %c0_11, %c0_12] : memref<32x8x32xf32, #tpu.memory_space<vmem>>, vector<28x8x32xf32>
    %12 = vector.shape_cast %11 : vector<28x8x32xf32> to vector<224x32xf32>
    %c2_13 = arith.constant 2 : index
    %c0_14 = arith.constant 0 : index
    %c0_15 = arith.constant 0 : index
    %13 = vector.load %arg2[%c2_13, %c0_14, %c0_15] : memref<5x32x84xf32, #tpu.memory_space<vmem>>, vector<1x32x84xf32>
    %14 = vector.shape_cast %13 : vector<1x32x84xf32> to vector<32x84xf32>
    %cst_16 = arith.constant dense<0.000000e+00> : vector<224x84xf32>
    %15 = tpu.matmul %12, %14, %cst_16 {dimension_numbers = #tpu.dot_dimension_numbers<[1], [0], [0], [1], [0, 0, 1, 1], [], []>} : vector<224x32xf32>, vector<32x84xf32>, vector<224x84xf32> -> vector<224x84xf32>
    %16 = arith.addf %10, %15 : vector<224x84xf32>
    %c3 = arith.constant 3 : index
    %c0_17 = arith.constant 0 : index
    %c0_18 = arith.constant 0 : index
    %17 = vector.load %arg1[%c3, %c0_17, %c0_18] : memref<32x8x32xf32, #tpu.memory_space<vmem>>, vector<28x8x32xf32>
    %18 = vector.shape_cast %17 : vector<28x8x32xf32> to vector<224x32xf32>
    %c3_19 = arith.constant 3 : index
    %c0_20 = arith.constant 0 : index
    %c0_21 = arith.constant 0 : index
    %19 = vector.load %arg2[%c3_19, %c0_20, %c0_21] : memref<5x32x84xf32, #tpu.memory_space<vmem>>, vector<1x32x84xf32>
    %20 = vector.shape_cast %19 : vector<1x32x84xf32> to vector<32x84xf32>
    %cst_22 = arith.constant dense<0.000000e+00> : vector<224x84xf32>
    %21 = tpu.matmul %18, %20, %cst_22 {dimension_numbers = #tpu.dot_dimension_numbers<[1], [0], [0], [1], [0, 0, 1, 1], [], []>} : vector<224x32xf32>, vector<32x84xf32>, vector<224x84xf32> -> vector<224x84xf32>
    %22 = arith.addf %16, %21 : vector<224x84xf32>
    %c4 = arith.constant 4 : index
    %c0_23 = arith.constant 0 : index
    %c0_24 = arith.constant 0 : index
    %23 = vector.load %arg1[%c4, %c0_23, %c0_24] : memref<32x8x32xf32, #tpu.memory_space<vmem>>, vector<28x8x32xf32>
    %24 = vector.shape_cast %23 : vector<28x8x32xf32> to vector<224x32xf32>
    %c4_25 = arith.constant 4 : index
    %c0_26 = arith.constant 0 : index
    %c0_27 = arith.constant 0 : index
    %25 = vector.load %arg2[%c4_25, %c0_26, %c0_27] : memref<5x32x84xf32, #tpu.memory_space<vmem>>, vector<1x32x84xf32>
    %26 = vector.shape_cast %25 : vector<1x32x84xf32> to vector<32x84xf32>
    %cst_28 = arith.constant dense<0.000000e+00> : vector<224x84xf32>
    %27 = tpu.matmul %24, %26, %cst_28 {dimension_numbers = #tpu.dot_dimension_numbers<[1], [0], [0], [1], [0, 0, 1, 1], [], []>} : vector<224x32xf32>, vector<32x84xf32>, vector<224x84xf32> -> vector<224x84xf32>
    %28 = arith.addf %22, %27 : vector<224x84xf32>
    %c0_29 = arith.constant 0 : index
    %c0_30 = arith.constant 0 : index
    %c0_31 = arith.constant 0 : index
    %29 = vector.load %arg1[%c0_29, %c0_30, %c0_31] : memref<32x8x32xf32, #tpu.memory_space<vmem>>, vector<28x8x32xf32>
    %30 = vector.shape_cast %29 : vector<28x8x32xf32> to vector<224x32xf32>
    %c0_32 = arith.constant 0 : index
    %c0_33 = arith.constant 0 : index
    %c0_34 = arith.constant 0 : index
    %31 = vector.load %arg3[%c0_32, %c0_33, %c0_34] : memref<5x32x84xf32, #tpu.memory_space<vmem>>, vector<1x32x84xf32>
    %32 = vector.shape_cast %31 : vector<1x32x84xf32> to vector<32x84xf32>
    %cst_35 = arith.constant dense<0.000000e+00> : vector<224x84xf32>
    %33 = tpu.matmul %30, %32, %cst_35 {dimension_numbers = #tpu.dot_dimension_numbers<[1], [0], [0], [1], [0, 0, 1, 1], [], []>} : vector<224x32xf32>, vector<32x84xf32>, vector<224x84xf32> -> vector<224x84xf32>
    %c1_36 = arith.constant 1 : index
    %c0_37 = arith.constant 0 : index
    %c0_38 = arith.constant 0 : index
    %34 = vector.load %arg1[%c1_36, %c0_37, %c0_38] : memref<32x8x32xf32, #tpu.memory_space<vmem>>, vector<28x8x32xf32>
    %35 = vector.shape_cast %34 : vector<28x8x32xf32> to vector<224x32xf32>
    %c1_39 = arith.constant 1 : index
    %c0_40 = arith.constant 0 : index
    %c0_41 = arith.constant 0 : index
    %36 = vector.load %arg3[%c1_39, %c0_40, %c0_41] : memref<5x32x84xf32, #tpu.memory_space<vmem>>, vector<1x32x84xf32>
    %37 = vector.shape_cast %36 : vector<1x32x84xf32> to vector<32x84xf32>
    %cst_42 = arith.constant dense<0.000000e+00> : vector<224x84xf32>
    %38 = tpu.matmul %35, %37, %cst_42 {dimension_numbers = #tpu.dot_dimension_numbers<[1], [0], [0], [1], [0, 0, 1, 1], [], []>} : vector<224x32xf32>, vector<32x84xf32>, vector<224x84xf32> -> vector<224x84xf32>
    %39 = arith.addf %33, %38 : vector<224x84xf32>
    %c2_43 = arith.constant 2 : index
    %c0_44 = arith.constant 0 : index
    %c0_45 = arith.constant 0 : index
    %40 = vector.load %arg1[%c2_43, %c0_44, %c0_45] : memref<32x8x32xf32, #tpu.memory_space<vmem>>, vector<28x8x32xf32>
    %41 = vector.shape_cast %40 : vector<28x8x32xf32> to vector<224x32xf32>
    %c2_46 = arith.constant 2 : index
    %c0_47 = arith.constant 0 : index
    %c0_48 = arith.constant 0 : index
    %42 = vector.load %arg3[%c2_46, %c0_47, %c0_48] : memref<5x32x84xf32, #tpu.memory_space<vmem>>, vector<1x32x84xf32>
    %43 = vector.shape_cast %42 : vector<1x32x84xf32> to vector<32x84xf32>
    %cst_49 = arith.constant dense<0.000000e+00> : vector<224x84xf32>
    %44 = tpu.matmul %41, %43, %cst_49 {dimension_numbers = #tpu.dot_dimension_numbers<[1], [0], [0], [1], [0, 0, 1, 1], [], []>} : vector<224x32xf32>, vector<32x84xf32>, vector<224x84xf32> -> vector<224x84xf32>
    %45 = arith.addf %39, %44 : vector<224x84xf32>
    %c3_50 = arith.constant 3 : index
    %c0_51 = arith.constant 0 : index
    %c0_52 = arith.constant 0 : index
    %46 = vector.load %arg1[%c3_50, %c0_51, %c0_52] : memref<32x8x32xf32, #tpu.memory_space<vmem>>, vector<28x8x32xf32>
    %47 = vector.shape_cast %46 : vector<28x8x32xf32> to vector<224x32xf32>
    %c3_53 = arith.constant 3 : index
    %c0_54 = arith.constant 0 : index
    %c0_55 = arith.constant 0 : index
    %48 = vector.load %arg3[%c3_53, %c0_54, %c0_55] : memref<5x32x84xf32, #tpu.memory_space<vmem>>, vector<1x32x84xf32>
    %49 = vector.shape_cast %48 : vector<1x32x84xf32> to vector<32x84xf32>
    %cst_56 = arith.constant dense<0.000000e+00> : vector<224x84xf32>
    %50 = tpu.matmul %47, %49, %cst_56 {dimension_numbers = #tpu.dot_dimension_numbers<[1], [0], [0], [1], [0, 0, 1, 1], [], []>} : vector<224x32xf32>, vector<32x84xf32>, vector<224x84xf32> -> vector<224x84xf32>
    %51 = arith.addf %45, %50 : vector<224x84xf32>
    %c4_57 = arith.constant 4 : index
    %c0_58 = arith.constant 0 : index
    %c0_59 = arith.constant 0 : index
    %52 = vector.load %arg1[%c4_57, %c0_58, %c0_59] : memref<32x8x32xf32, #tpu.memory_space<vmem>>, vector<28x8x32xf32>
    %53 = vector.shape_cast %52 : vector<28x8x32xf32> to vector<224x32xf32>
    %c4_60 = arith.constant 4 : index
    %c0_61 = arith.constant 0 : index
    %c0_62 = arith.constant 0 : index
    %54 = vector.load %arg3[%c4_60, %c0_61, %c0_62] : memref<5x32x84xf32, #tpu.memory_space<vmem>>, vector<1x32x84xf32>
    %55 = vector.shape_cast %54 : vector<1x32x84xf32> to vector<32x84xf32>
    %cst_63 = arith.constant dense<0.000000e+00> : vector<224x84xf32>
    %56 = tpu.matmul %53, %55, %cst_63 {dimension_numbers = #tpu.dot_dimension_numbers<[1], [0], [0], [1], [0, 0, 1, 1], [], []>} : vector<224x32xf32>, vector<32x84xf32>, vector<224x84xf32> -> vector<224x84xf32>
    %57 = arith.addf %51, %56 : vector<224x84xf32>
    %58 = arith.maximumf %28, %57 : vector<224x84xf32>
    %c0_64 = arith.constant 0 : index
    %c0_65 = arith.constant 0 : index
    %59 = vector.load %arg4[%c0_64, %c0_65] : memref<1x84xf32, #tpu.memory_space<vmem>>, vector<1x84xf32>
    %60 = vector.broadcast %59 : vector<1x84xf32> to vector<224x84xf32>
    %61 = arith.addf %58, %60 : vector<224x84xf32>
    %cst_66 = arith.constant 0.000000e+00 : f32
    %62 = vector.broadcast %cst_66 : f32 to vector<224x84xf32>
    %63 = arith.maximumf %61, %62 : vector<224x84xf32>
    %64 = vector.shape_cast %63 : vector<224x84xf32> to vector<14x2x8x84xf32>
    %65 = vector.extract_strided_slice %64 {offsets = [0, 0, 0, 0], sizes = [14, 1, 8, 84], strides = [1, 1, 1, 1]} : vector<14x2x8x84xf32> to vector<14x1x8x84xf32>
    %66 = vector.shape_cast %65 : vector<14x1x8x84xf32> to vector<14x8x84xf32>
    %67 = vector.extract_strided_slice %64 {offsets = [0, 1, 0, 0], sizes = [14, 1, 8, 84], strides = [1, 1, 1, 1]} : vector<14x2x8x84xf32> to vector<14x1x8x84xf32>
    %68 = vector.shape_cast %67 : vector<14x1x8x84xf32> to vector<14x8x84xf32>
    %69 = arith.maximumf %66, %68 : vector<14x8x84xf32>
    %70 = vector.extract_strided_slice %69 {offsets = [0, 0, 0], sizes = [10, 8, 84], strides = [1, 1, 1]} : vector<14x8x84xf32> to vector<10x8x84xf32>
    %71 = vector.shape_cast %70 : vector<10x8x84xf32> to vector<80x84xf32>
    %c0_67 = arith.constant 0 : index
    %c0_68 = arith.constant 0 : index
    %c0_69 = arith.constant 0 : index
    %72 = vector.load %arg5[%c0_67, %c0_68, %c0_69] : memref<5x84x80xf32, #tpu.memory_space<vmem>>, vector<1x84x80xf32>
    %73 = vector.shape_cast %72 : vector<1x84x80xf32> to vector<84x80xf32>
    %cst_70 = arith.constant dense<0.000000e+00> : vector<80x80xf32>
    %74 = tpu.matmul %71, %73, %cst_70 {dimension_numbers = #tpu.dot_dimension_numbers<[1], [0], [0], [1], [0, 0, 1, 1], [], []>} : vector<80x84xf32>, vector<84x80xf32>, vector<80x80xf32> -> vector<80x80xf32>
    %75 = vector.extract_strided_slice %69 {offsets = [1, 0, 0], sizes = [10, 8, 84], strides = [1, 1, 1]} : vector<14x8x84xf32> to vector<10x8x84xf32>
    %76 = vector.shape_cast %75 : vector<10x8x84xf32> to vector<80x84xf32>
    %c1_71 = arith.constant 1 : index
    %c0_72 = arith.constant 0 : index
    %c0_73 = arith.constant 0 : index
    %77 = vector.load %arg5[%c1_71, %c0_72, %c0_73] : memref<5x84x80xf32, #tpu.memory_space<vmem>>, vector<1x84x80xf32>
    %78 = vector.shape_cast %77 : vector<1x84x80xf32> to vector<84x80xf32>
    %cst_74 = arith.constant dense<0.000000e+00> : vector<80x80xf32>
    %79 = tpu.matmul %76, %78, %cst_74 {dimension_numbers = #tpu.dot_dimension_numbers<[1], [0], [0], [1], [0, 0, 1, 1], [], []>} : vector<80x84xf32>, vector<84x80xf32>, vector<80x80xf32> -> vector<80x80xf32>
    %80 = arith.addf %74, %79 : vector<80x80xf32>
    %81 = vector.extract_strided_slice %69 {offsets = [2, 0, 0], sizes = [10, 8, 84], strides = [1, 1, 1]} : vector<14x8x84xf32> to vector<10x8x84xf32>
    %82 = vector.shape_cast %81 : vector<10x8x84xf32> to vector<80x84xf32>
    %c2_75 = arith.constant 2 : index
    %c0_76 = arith.constant 0 : index
    %c0_77 = arith.constant 0 : index
    %83 = vector.load %arg5[%c2_75, %c0_76, %c0_77] : memref<5x84x80xf32, #tpu.memory_space<vmem>>, vector<1x84x80xf32>
    %84 = vector.shape_cast %83 : vector<1x84x80xf32> to vector<84x80xf32>
    %cst_78 = arith.constant dense<0.000000e+00> : vector<80x80xf32>
    %85 = tpu.matmul %82, %84, %cst_78 {dimension_numbers = #tpu.dot_dimension_numbers<[1], [0], [0], [1], [0, 0, 1, 1], [], []>} : vector<80x84xf32>, vector<84x80xf32>, vector<80x80xf32> -> vector<80x80xf32>
    %86 = arith.addf %80, %85 : vector<80x80xf32>
    %87 = vector.extract_strided_slice %69 {offsets = [3, 0, 0], sizes = [10, 8, 84], strides = [1, 1, 1]} : vector<14x8x84xf32> to vector<10x8x84xf32>
    %88 = vector.shape_cast %87 : vector<10x8x84xf32> to vector<80x84xf32>
    %c3_79 = arith.constant 3 : index
    %c0_80 = arith.constant 0 : index
    %c0_81 = arith.constant 0 : index
    %89 = vector.load %arg5[%c3_79, %c0_80, %c0_81] : memref<5x84x80xf32, #tpu.memory_space<vmem>>, vector<1x84x80xf32>
    %90 = vector.shape_cast %89 : vector<1x84x80xf32> to vector<84x80xf32>
    %cst_82 = arith.constant dense<0.000000e+00> : vector<80x80xf32>
    %91 = tpu.matmul %88, %90, %cst_82 {dimension_numbers = #tpu.dot_dimension_numbers<[1], [0], [0], [1], [0, 0, 1, 1], [], []>} : vector<80x84xf32>, vector<84x80xf32>, vector<80x80xf32> -> vector<80x80xf32>
    %92 = arith.addf %86, %91 : vector<80x80xf32>
    %93 = vector.extract_strided_slice %69 {offsets = [4, 0, 0], sizes = [10, 8, 84], strides = [1, 1, 1]} : vector<14x8x84xf32> to vector<10x8x84xf32>
    %94 = vector.shape_cast %93 : vector<10x8x84xf32> to vector<80x84xf32>
    %c4_83 = arith.constant 4 : index
    %c0_84 = arith.constant 0 : index
    %c0_85 = arith.constant 0 : index
    %95 = vector.load %arg5[%c4_83, %c0_84, %c0_85] : memref<5x84x80xf32, #tpu.memory_space<vmem>>, vector<1x84x80xf32>
    %96 = vector.shape_cast %95 : vector<1x84x80xf32> to vector<84x80xf32>
    %cst_86 = arith.constant dense<0.000000e+00> : vector<80x80xf32>
    %97 = tpu.matmul %94, %96, %cst_86 {dimension_numbers = #tpu.dot_dimension_numbers<[1], [0], [0], [1], [0, 0, 1, 1], [], []>} : vector<80x84xf32>, vector<84x80xf32>, vector<80x80xf32> -> vector<80x80xf32>
    %98 = arith.addf %92, %97 : vector<80x80xf32>
    %99 = vector.extract_strided_slice %69 {offsets = [0, 0, 0], sizes = [10, 8, 84], strides = [1, 1, 1]} : vector<14x8x84xf32> to vector<10x8x84xf32>
    %100 = vector.shape_cast %99 : vector<10x8x84xf32> to vector<80x84xf32>
    %c0_87 = arith.constant 0 : index
    %c0_88 = arith.constant 0 : index
    %c0_89 = arith.constant 0 : index
    %101 = vector.load %arg6[%c0_87, %c0_88, %c0_89] : memref<5x84x80xf32, #tpu.memory_space<vmem>>, vector<1x84x80xf32>
    %102 = vector.shape_cast %101 : vector<1x84x80xf32> to vector<84x80xf32>
    %cst_90 = arith.constant dense<0.000000e+00> : vector<80x80xf32>
    %103 = tpu.matmul %100, %102, %cst_90 {dimension_numbers = #tpu.dot_dimension_numbers<[1], [0], [0], [1], [0, 0, 1, 1], [], []>} : vector<80x84xf32>, vector<84x80xf32>, vector<80x80xf32> -> vector<80x80xf32>
    %104 = vector.extract_strided_slice %69 {offsets = [1, 0, 0], sizes = [10, 8, 84], strides = [1, 1, 1]} : vector<14x8x84xf32> to vector<10x8x84xf32>
    %105 = vector.shape_cast %104 : vector<10x8x84xf32> to vector<80x84xf32>
    %c1_91 = arith.constant 1 : index
    %c0_92 = arith.constant 0 : index
    %c0_93 = arith.constant 0 : index
    %106 = vector.load %arg6[%c1_91, %c0_92, %c0_93] : memref<5x84x80xf32, #tpu.memory_space<vmem>>, vector<1x84x80xf32>
    %107 = vector.shape_cast %106 : vector<1x84x80xf32> to vector<84x80xf32>
    %cst_94 = arith.constant dense<0.000000e+00> : vector<80x80xf32>
    %108 = tpu.matmul %105, %107, %cst_94 {dimension_numbers = #tpu.dot_dimension_numbers<[1], [0], [0], [1], [0, 0, 1, 1], [], []>} : vector<80x84xf32>, vector<84x80xf32>, vector<80x80xf32> -> vector<80x80xf32>
    %109 = arith.addf %103, %108 : vector<80x80xf32>
    %110 = vector.extract_strided_slice %69 {offsets = [2, 0, 0], sizes = [10, 8, 84], strides = [1, 1, 1]} : vector<14x8x84xf32> to vector<10x8x84xf32>
    %111 = vector.shape_cast %110 : vector<10x8x84xf32> to vector<80x84xf32>
    %c2_95 = arith.constant 2 : index
    %c0_96 = arith.constant 0 : index
    %c0_97 = arith.constant 0 : index
    %112 = vector.load %arg6[%c2_95, %c0_96, %c0_97] : memref<5x84x80xf32, #tpu.memory_space<vmem>>, vector<1x84x80xf32>
    %113 = vector.shape_cast %112 : vector<1x84x80xf32> to vector<84x80xf32>
    %cst_98 = arith.constant dense<0.000000e+00> : vector<80x80xf32>
    %114 = tpu.matmul %111, %113, %cst_98 {dimension_numbers = #tpu.dot_dimension_numbers<[1], [0], [0], [1], [0, 0, 1, 1], [], []>} : vector<80x84xf32>, vector<84x80xf32>, vector<80x80xf32> -> vector<80x80xf32>
    %115 = arith.addf %109, %114 : vector<80x80xf32>
    %116 = vector.extract_strided_slice %69 {offsets = [3, 0, 0], sizes = [10, 8, 84], strides = [1, 1, 1]} : vector<14x8x84xf32> to vector<10x8x84xf32>
    %117 = vector.shape_cast %116 : vector<10x8x84xf32> to vector<80x84xf32>
    %c3_99 = arith.constant 3 : index
    %c0_100 = arith.constant 0 : index
    %c0_101 = arith.constant 0 : index
    %118 = vector.load %arg6[%c3_99, %c0_100, %c0_101] : memref<5x84x80xf32, #tpu.memory_space<vmem>>, vector<1x84x80xf32>
    %119 = vector.shape_cast %118 : vector<1x84x80xf32> to vector<84x80xf32>
    %cst_102 = arith.constant dense<0.000000e+00> : vector<80x80xf32>
    %120 = tpu.matmul %117, %119, %cst_102 {dimension_numbers = #tpu.dot_dimension_numbers<[1], [0], [0], [1], [0, 0, 1, 1], [], []>} : vector<80x84xf32>, vector<84x80xf32>, vector<80x80xf32> -> vector<80x80xf32>
    %121 = arith.addf %115, %120 : vector<80x80xf32>
    %122 = vector.extract_strided_slice %69 {offsets = [4, 0, 0], sizes = [10, 8, 84], strides = [1, 1, 1]} : vector<14x8x84xf32> to vector<10x8x84xf32>
    %123 = vector.shape_cast %122 : vector<10x8x84xf32> to vector<80x84xf32>
    %c4_103 = arith.constant 4 : index
    %c0_104 = arith.constant 0 : index
    %c0_105 = arith.constant 0 : index
    %124 = vector.load %arg6[%c4_103, %c0_104, %c0_105] : memref<5x84x80xf32, #tpu.memory_space<vmem>>, vector<1x84x80xf32>
    %125 = vector.shape_cast %124 : vector<1x84x80xf32> to vector<84x80xf32>
    %cst_106 = arith.constant dense<0.000000e+00> : vector<80x80xf32>
    %126 = tpu.matmul %123, %125, %cst_106 {dimension_numbers = #tpu.dot_dimension_numbers<[1], [0], [0], [1], [0, 0, 1, 1], [], []>} : vector<80x84xf32>, vector<84x80xf32>, vector<80x80xf32> -> vector<80x80xf32>
    %127 = arith.addf %121, %126 : vector<80x80xf32>
    %128 = arith.maximumf %98, %127 : vector<80x80xf32>
    %c0_107 = arith.constant 0 : index
    %c0_108 = arith.constant 0 : index
    %129 = vector.load %arg7[%c0_107, %c0_108] : memref<1x80xf32, #tpu.memory_space<vmem>>, vector<1x80xf32>
    %130 = vector.broadcast %129 : vector<1x80xf32> to vector<80x80xf32>
    %131 = arith.addf %128, %130 : vector<80x80xf32>
    %cst_109 = arith.constant 0.000000e+00 : f32
    %132 = vector.broadcast %cst_109 : f32 to vector<80x80xf32>
    %133 = arith.maximumf %131, %132 : vector<80x80xf32>
    %134 = vector.shape_cast %133 : vector<80x80xf32> to vector<5x2x8x80xf32>
    %135 = vector.extract_strided_slice %134 {offsets = [0, 0, 0, 0], sizes = [5, 1, 8, 80], strides = [1, 1, 1, 1]} : vector<5x2x8x80xf32> to vector<5x1x8x80xf32>
    %136 = vector.shape_cast %135 : vector<5x1x8x80xf32> to vector<5x8x80xf32>
    %137 = vector.extract_strided_slice %134 {offsets = [0, 1, 0, 0], sizes = [5, 1, 8, 80], strides = [1, 1, 1, 1]} : vector<5x2x8x80xf32> to vector<5x1x8x80xf32>
    %138 = vector.shape_cast %137 : vector<5x1x8x80xf32> to vector<5x8x80xf32>
    %139 = arith.maximumf %136, %138 : vector<5x8x80xf32>
    %140 = vector.extract_strided_slice %139 {offsets = [0, 0, 0], sizes = [1, 8, 80], strides = [1, 1, 1]} : vector<5x8x80xf32> to vector<1x8x80xf32>
    %141 = vector.shape_cast %140 : vector<1x8x80xf32> to vector<8x80xf32>
    %c0_110 = arith.constant 0 : index
    %c0_111 = arith.constant 0 : index
    %c0_112 = arith.constant 0 : index
    %142 = vector.load %arg8[%c0_110, %c0_111, %c0_112] : memref<5x80x120xf32, #tpu.memory_space<vmem>>, vector<1x80x120xf32>
    %143 = vector.shape_cast %142 : vector<1x80x120xf32> to vector<80x120xf32>
    %cst_113 = arith.constant dense<0.000000e+00> : vector<8x120xf32>
    %144 = tpu.matmul %141, %143, %cst_113 {dimension_numbers = #tpu.dot_dimension_numbers<[1], [0], [0], [1], [0, 0, 1, 1], [], []>} : vector<8x80xf32>, vector<80x120xf32>, vector<8x120xf32> -> vector<8x120xf32>
    %145 = vector.extract_strided_slice %139 {offsets = [1, 0, 0], sizes = [1, 8, 80], strides = [1, 1, 1]} : vector<5x8x80xf32> to vector<1x8x80xf32>
    %146 = vector.shape_cast %145 : vector<1x8x80xf32> to vector<8x80xf32>
    %c1_114 = arith.constant 1 : index
    %c0_115 = arith.constant 0 : index
    %c0_116 = arith.constant 0 : index
    %147 = vector.load %arg8[%c1_114, %c0_115, %c0_116] : memref<5x80x120xf32, #tpu.memory_space<vmem>>, vector<1x80x120xf32>
    %148 = vector.shape_cast %147 : vector<1x80x120xf32> to vector<80x120xf32>
    %cst_117 = arith.constant dense<0.000000e+00> : vector<8x120xf32>
    %149 = tpu.matmul %146, %148, %cst_117 {dimension_numbers = #tpu.dot_dimension_numbers<[1], [0], [0], [1], [0, 0, 1, 1], [], []>} : vector<8x80xf32>, vector<80x120xf32>, vector<8x120xf32> -> vector<8x120xf32>
    %150 = arith.addf %144, %149 : vector<8x120xf32>
    %151 = vector.extract_strided_slice %139 {offsets = [2, 0, 0], sizes = [1, 8, 80], strides = [1, 1, 1]} : vector<5x8x80xf32> to vector<1x8x80xf32>
    %152 = vector.shape_cast %151 : vector<1x8x80xf32> to vector<8x80xf32>
    %c2_118 = arith.constant 2 : index
    %c0_119 = arith.constant 0 : index
    %c0_120 = arith.constant 0 : index
    %153 = vector.load %arg8[%c2_118, %c0_119, %c0_120] : memref<5x80x120xf32, #tpu.memory_space<vmem>>, vector<1x80x120xf32>
    %154 = vector.shape_cast %153 : vector<1x80x120xf32> to vector<80x120xf32>
    %cst_121 = arith.constant dense<0.000000e+00> : vector<8x120xf32>
    %155 = tpu.matmul %152, %154, %cst_121 {dimension_numbers = #tpu.dot_dimension_numbers<[1], [0], [0], [1], [0, 0, 1, 1], [], []>} : vector<8x80xf32>, vector<80x120xf32>, vector<8x120xf32> -> vector<8x120xf32>
    %156 = arith.addf %150, %155 : vector<8x120xf32>
    %157 = vector.extract_strided_slice %139 {offsets = [3, 0, 0], sizes = [1, 8, 80], strides = [1, 1, 1]} : vector<5x8x80xf32> to vector<1x8x80xf32>
    %158 = vector.shape_cast %157 : vector<1x8x80xf32> to vector<8x80xf32>
    %c3_122 = arith.constant 3 : index
    %c0_123 = arith.constant 0 : index
    %c0_124 = arith.constant 0 : index
    %159 = vector.load %arg8[%c3_122, %c0_123, %c0_124] : memref<5x80x120xf32, #tpu.memory_space<vmem>>, vector<1x80x120xf32>
    %160 = vector.shape_cast %159 : vector<1x80x120xf32> to vector<80x120xf32>
    %cst_125 = arith.constant dense<0.000000e+00> : vector<8x120xf32>
    %161 = tpu.matmul %158, %160, %cst_125 {dimension_numbers = #tpu.dot_dimension_numbers<[1], [0], [0], [1], [0, 0, 1, 1], [], []>} : vector<8x80xf32>, vector<80x120xf32>, vector<8x120xf32> -> vector<8x120xf32>
    %162 = arith.addf %156, %161 : vector<8x120xf32>
    %163 = vector.extract_strided_slice %139 {offsets = [4, 0, 0], sizes = [1, 8, 80], strides = [1, 1, 1]} : vector<5x8x80xf32> to vector<1x8x80xf32>
    %164 = vector.shape_cast %163 : vector<1x8x80xf32> to vector<8x80xf32>
    %c4_126 = arith.constant 4 : index
    %c0_127 = arith.constant 0 : index
    %c0_128 = arith.constant 0 : index
    %165 = vector.load %arg8[%c4_126, %c0_127, %c0_128] : memref<5x80x120xf32, #tpu.memory_space<vmem>>, vector<1x80x120xf32>
    %166 = vector.shape_cast %165 : vector<1x80x120xf32> to vector<80x120xf32>
    %cst_129 = arith.constant dense<0.000000e+00> : vector<8x120xf32>
    %167 = tpu.matmul %164, %166, %cst_129 {dimension_numbers = #tpu.dot_dimension_numbers<[1], [0], [0], [1], [0, 0, 1, 1], [], []>} : vector<8x80xf32>, vector<80x120xf32>, vector<8x120xf32> -> vector<8x120xf32>
    %168 = arith.addf %162, %167 : vector<8x120xf32>
    %c0_130 = arith.constant 0 : index
    %c0_131 = arith.constant 0 : index
    %169 = vector.load %arg9[%c0_130, %c0_131] : memref<1x120xf32, #tpu.memory_space<vmem>>, vector<1x120xf32>
    %170 = vector.broadcast %169 : vector<1x120xf32> to vector<8x120xf32>
    %171 = arith.addf %168, %170 : vector<8x120xf32>
    %cst_132 = arith.constant 0.000000e+00 : f32
    %172 = vector.broadcast %cst_132 : f32 to vector<8x120xf32>
    %173 = arith.maximumf %171, %172 : vector<8x120xf32>
    %c0_133 = arith.constant 0 : index
    %c0_134 = arith.constant 0 : index
    %174 = vector.load %arg10[%c0_133, %c0_134] : memref<120x84xf32, #tpu.memory_space<vmem>>, vector<120x84xf32>
    %cst_135 = arith.constant dense<0.000000e+00> : vector<8x84xf32>
    %175 = tpu.matmul %173, %174, %cst_135 {dimension_numbers = #tpu.dot_dimension_numbers<[1], [0], [0], [1], [0, 0, 1, 1], [], []>} : vector<8x120xf32>, vector<120x84xf32>, vector<8x84xf32> -> vector<8x84xf32>
    %c0_136 = arith.constant 0 : index
    %c0_137 = arith.constant 0 : index
    %176 = vector.load %arg11[%c0_136, %c0_137] : memref<1x84xf32, #tpu.memory_space<vmem>>, vector<1x84xf32>
    %177 = vector.broadcast %176 : vector<1x84xf32> to vector<8x84xf32>
    %178 = arith.addf %175, %177 : vector<8x84xf32>
    %cst_138 = arith.constant 0.000000e+00 : f32
    %179 = vector.broadcast %cst_138 : f32 to vector<8x84xf32>
    %180 = arith.maximumf %178, %179 : vector<8x84xf32>
    %c0_139 = arith.constant 0 : index
    %c0_140 = arith.constant 0 : index
    %181 = vector.load %arg12[%c0_139, %c0_140] : memref<84x128xf32, #tpu.memory_space<vmem>>, vector<84x128xf32>
    %cst_141 = arith.constant dense<0.000000e+00> : vector<8x128xf32>
    %182 = tpu.matmul %180, %181, %cst_141 {dimension_numbers = #tpu.dot_dimension_numbers<[1], [0], [0], [1], [0, 0, 1, 1], [], []>} : vector<8x84xf32>, vector<84x128xf32>, vector<8x128xf32> -> vector<8x128xf32>
    %c0_142 = arith.constant 0 : index
    %c0_143 = arith.constant 0 : index
    %183 = vector.load %arg13[%c0_142, %c0_143] : memref<1x128xf32, #tpu.memory_space<vmem>>, vector<1x128xf32>
    %184 = vector.broadcast %183 : vector<1x128xf32> to vector<8x128xf32>
    %185 = arith.addf %182, %184 : vector<8x128xf32>
    %c0_144 = arith.constant 0 : index
    %c0_145 = arith.constant 0 : index
    %186 = vector.load %arg14[%c0_144, %c0_145] : memref<8x128xf32, #tpu.memory_space<vmem>>, vector<8x128xf32>
    tpu.vector_store %arg14[%c0_144, %c0_145], %185 {strides = array<i32>} : memref<8x128xf32, #tpu.memory_space<vmem>>, vector<8x128xf32>,
    return
  }
  func.func @transform_0(%arg0: i32) -> (i32, i32, i32) {
    %c0_i32 = arith.constant 0 : i32
    %c0_i32_0 = arith.constant 0 : i32
    %c0_i32_1 = arith.constant 0 : i32
    return %c0_i32, %arg0, %c0_i32_0 : i32, i32, i32
  }
  func.func @transform_1(%arg0: i32) -> (i32, i32, i32) {
    %c0_i32 = arith.constant 0 : i32
    %c0_i32_0 = arith.constant 0 : i32
    %c0_i32_1 = arith.constant 0 : i32
    %c0_i32_2 = arith.constant 0 : i32
    return %c0_i32, %c0_i32_0, %c0_i32_1 : i32, i32, i32
  }
  func.func @transform_2(%arg0: i32) -> (i32, i32, i32) {
    %c0_i32 = arith.constant 0 : i32
    %c0_i32_0 = arith.constant 0 : i32
    %c0_i32_1 = arith.constant 0 : i32
    %c0_i32_2 = arith.constant 0 : i32
    return %c0_i32, %c0_i32_0, %c0_i32_1 : i32, i32, i32
  }
  func.func @transform_3(%arg0: i32) -> (i32, i32) {
    %c0_i32 = arith.constant 0 : i32
    %c0_i32_0 = arith.constant 0 : i32
    %c0_i32_1 = arith.constant 0 : i32
    return %c0_i32, %c0_i32_0 : i32, i32
  }
  func.func @transform_4(%arg0: i32) -> (i32, i32, i32) {
    %c0_i32 = arith.constant 0 : i32
    %c0_i32_0 = arith.constant 0 : i32
    %c0_i32_1 = arith.constant 0 : i32
    %c0_i32_2 = arith.constant 0 : i32
    return %c0_i32, %c0_i32_0, %c0_i32_1 : i32, i32, i32
  }
  func.func @transform_5(%arg0: i32) -> (i32, i32, i32) {
    %c0_i32 = arith.constant 0 : i32
    %c0_i32_0 = arith.constant 0 : i32
    %c0_i32_1 = arith.constant 0 : i32
    %c0_i32_2 = arith.constant 0 : i32
    return %c0_i32, %c0_i32_0, %c0_i32_1 : i32, i32, i32
  }
  func.func @transform_6(%arg0: i32) -> (i32, i32) {
    %c0_i32 = arith.constant 0 : i32
    %c0_i32_0 = arith.constant 0 : i32
    %c0_i32_1 = arith.constant 0 : i32
    return %c0_i32, %c0_i32_0 : i32, i32
  }
  func.func @transform_7(%arg0: i32) -> (i32, i32, i32) {
    %c0_i32 = arith.constant 0 : i32
    %c0_i32_0 = arith.constant 0 : i32
    %c0_i32_1 = arith.constant 0 : i32
    %c0_i32_2 = arith.constant 0 : i32
    return %c0_i32, %c0_i32_0, %c0_i32_1 : i32, i32, i32
  }
  func.func @transform_8(%arg0: i32) -> (i32, i32) {
    %c0_i32 = arith.constant 0 : i32
    %c0_i32_0 = arith.constant 0 : i32
    %c0_i32_1 = arith.constant 0 : i32
    return %c0_i32, %c0_i32_0 : i32, i32
  }
  func.func @transform_9(%arg0: i32) -> (i32, i32) {
    %c0_i32 = arith.constant 0 : i32
    %c0_i32_0 = arith.constant 0 : i32
    %c0_i32_1 = arith.constant 0 : i32
    return %c0_i32, %c0_i32_0 : i32, i32
  }
  func.func @transform_10(%arg0: i32) -> (i32, i32) {
    %c0_i32 = arith.constant 0 : i32
    %c0_i32_0 = arith.constant 0 : i32
    %c0_i32_1 = arith.constant 0 : i32
    return %c0_i32, %c0_i32_0 : i32, i32
  }
  func.func @transform_11(%arg0: i32) -> (i32, i32) {
    %c0_i32 = arith.constant 0 : i32
    %c0_i32_0 = arith.constant 0 : i32
    %c0_i32_1 = arith.constant 0 : i32
    return %c0_i32, %c0_i32_0 : i32, i32
  }
  func.func @transform_12(%arg0: i32) -> (i32, i32) {
    %c0_i32 = arith.constant 0 : i32
    %c0_i32_0 = arith.constant 0 : i32
    %c0_i32_1 = arith.constant 0 : i32
    return %c0_i32, %c0_i32_0 : i32, i32
  }
  func.func @transform_13(%arg0: i32) -> (i32, i32) {
    %c0_i32 = arith.constant 0 : i32
    %c0_i32_0 = arith.constant 0 : i32
    return %arg0, %c0_i32 : i32, i32
  }
}

</mosaic_0001>

<llo_original>
// kernel: lenet5_forward.1
$region0: #{lenet5_forward.1}
  #allocation0 [shape = 'u32[]', space=smem, size = 0x4, offset = 0x4, fixed_abs, tag = 'smem constant byte address 0x4 - core index']
  #allocation1 [shape = 'u32[144,128]{1,0:T(1,128)}', space=vmem, size = 0x12000, scoped, tag = 'internal scratch']
  %s0 = inlined_call_operand.vmem [shape: f32[32,16,32], index: 0, kind: input, shape index: {}]
  %s1 = inlined_call_operand.vmem [shape: f32[5,32,84], index: 1, kind: input, shape index: {}]
  %s2 = inlined_call_operand.vmem [shape: f32[5,32,84], index: 2, kind: input, shape index: {}]
  %s3 = inlined_call_operand.vmem [shape: f32[1,84], index: 3, kind: input, shape index: {}]
  %s4 = inlined_call_operand.vmem [shape: f32[5,84,80], index: 4, kind: input, shape index: {}]
  %s5 = inlined_call_operand.vmem [shape: f32[5,84,80], index: 5, kind: input, shape index: {}]
  %s6 = inlined_call_operand.vmem [shape: f32[1,80], index: 6, kind: input, shape index: {}]
  %s7 = inlined_call_operand.vmem [shape: f32[5,80,120], index: 7, kind: input, shape index: {}]
  %s8 = inlined_call_operand.vmem [shape: f32[1,120], index: 8, kind: input, shape index: {}]
  %s9 = inlined_call_operand.vmem [shape: f32[120,84], index: 9, kind: input, shape index: {}]
  %s10 = inlined_call_operand.vmem [shape: f32[1,84], index: 10, kind: input, shape index: {}]
  %s11 = inlined_call_operand.vmem [shape: f32[84,128], index: 11, kind: input, shape index: {}]
  %s12 = inlined_call_operand.vmem [shape: f32[1,128], index: 12, kind: input, shape index: {}]
  %s13 = inlined_call_operand.hbm [shape: f32[16,128], index: 13, kind: output, shape index: {}]
  %s14 = sld [smem:[#allocation0]]
  $region123: #{lenet5_forward.1} parent=0
    _
  %s16 = ssub.s32 1, %s14
  %s17 = scalar_select 0, %s16, %s14
  $region1: #{lenet5_forward.1} parent=0
    #allocation2 [shape = 'u8[262144]{0}', space=vmem, size = 0x40000, scoped, tag = 'input window, operand 0']
    #allocation3 [shape = 'u8[8192]{0}', space=vmem, size = 0x2000, scoped, tag = 'output window, operand 0']
    #allocation4 [shape = 's32[2]{0}', space=sflag, size = 0x8, scoped, tag = 'scoped memory for lenet5_forward.1']
    %18 = vsyncpa [#allocation4], 0
    %s19 = scalar_lea.sflag [#allocation4], 1
    %20 = vsyncpa %s19, 0
    loop: start=0, step=1, limit=4
    $region2: #{lenet5_forward.1} parent=1 // loop_pre_header
      _
    $region3: #{lenet5_forward.1} parent=1 // loop_header
      %s22 = sphi 0, %s26
      %p23 = scmp.ge.s32.totalorder %s22, 4
      %s32 = sphi 0, %s34
      %s35 = sphi 0, %s32
      %s36 = sphi 0, %s35
      %s52 = sphi 0, %s36
      %s56 = sphi 0, %s56
      %s58 = sphi 0, %s56
      %s59 = sphi 0, %s58
      %s73 = sphi 0, %s59
      %s77 = sphi 0, %s77
      %s79 = sphi 0, %s77
      %s80 = sphi 0, %s79
      %s94 = sphi 0, %s80
      %s98 = sphi 0, %s98
      %s100 = sphi 0, %s98
      %s101 = sphi 0, %s100
      %s115 = sphi 0, %s101
      %s119 = sphi 0, %s119
      %s121 = sphi 0, %s119
      %s122 = sphi 0, %s121
      %s136 = sphi 0, %s122
      %s140 = sphi 0, %s140
      %s142 = sphi 0, %s140
      %s143 = sphi 0, %s142
      %s157 = sphi 0, %s143
      %s161 = sphi 0, %s161
      %s163 = sphi 0, %s161
      %s164 = sphi 0, %s163
      %s178 = sphi 0, %s164
      %s182 = sphi 0, %s182
      %s184 = sphi 0, %s182
      %s185 = sphi 0, %s184
      %s199 = sphi 0, %s185
      %s203 = sphi 0, %s203
      %s205 = sphi 0, %s203
      %s206 = sphi 0, %s205
      %s220 = sphi 0, %s206
      %s224 = sphi 0, %s224
      %s226 = sphi 0, %s224
      %s227 = sphi 0, %s226
      %s241 = sphi 0, %s227
      %s245 = sphi 0, %s245
      %s247 = sphi 0, %s245
      %s248 = sphi 0, %s247
      %s262 = sphi 0, %s248
      %s266 = sphi 0, %s266
      %s268 = sphi 0, %s266
      %s269 = sphi 0, %s268
      %s283 = sphi 0, %s269
      %s287 = sphi 0, %s287
      %s289 = sphi 0, %s287
      %s290 = sphi 0, %s289
      %s304 = sphi 0, %s290
      %s310 = sphi 0, %s312
      %s313 = sphi 0, %s310
      %s314 = sphi 0, %s313
      %s330 = sphi 0, %s314
    $region4: #{lenet5_forward.1} parent=1 // loop_header_branch
      %25 = sbr.rel (%p23) target = $region8
    $region5: #{lenet5_forward.1} parent=1 // loop_body
      %s27 = ssub.s32 %s22, 1
      %s28 = ssub.s32 %s22, 2
      %s29 = sadd.s32 %s22, 1
      %s30 = ssub.s32 %s22, %s29
      %p31 = scmp.eq.s32.totalorder %s30, 0
      %s33 = sadd.s32 %s32, 1
      %s34 = scalar_select %p31, %s32, %s33
      %p37 = pneg %p31
      %p38 = scmp.eq.s32.totalorder %s22, 1
      %p39 = por %p37, %p38
      %p40 = scmp.ne.s32.totalorder %s32, %s35
      %p41 = scmp.eq.s32.totalorder %s22, 0
      %p42 = por %p40, %p41
      %p43 = scmp.ne.s32.totalorder %s32, %s35
      %p44 = scmp.eq.s32.totalorder %s27, 1
      %p45 = por %p43, %p44
      %p46 = scmp.ne.s32.totalorder %s35, %s36
      %p47 = scmp.eq.s32.totalorder %s27, 0
      %p48 = por %p46, %p47
      %p49 = scmp.ne.s32.totalorder %s35, %s36
      %p50 = scmp.eq.s32.totalorder %s28, 1
      %p51 = por %p49, %p50
      %p53 = scmp.ne.s32.totalorder %s36, %s52
      %p54 = scmp.eq.s32.totalorder %s28, 0
      %p55 = por %p53, %p54
      %s57 = sadd.s32 %s56, 1
      %p60 = scmp.eq.s32.totalorder %s22, 1
      %p61 = scmp.ne.s32.totalorder %s56, %s58
      %p62 = scmp.eq.s32.totalorder %s22, 0
      %p63 = por %p61, %p62
      %p64 = scmp.ne.s32.totalorder %s56, %s58
      %p65 = scmp.eq.s32.totalorder %s27, 1
      %p66 = por %p64, %p65
      %p67 = scmp.ne.s32.totalorder %s58, %s59
      %p68 = scmp.eq.s32.totalorder %s27, 0
      %p69 = por %p67, %p68
      %p70 = scmp.ne.s32.totalorder %s58, %s59
      %p71 = scmp.eq.s32.totalorder %s28, 1
      %p72 = por %p70, %p71
      %p74 = scmp.ne.s32.totalorder %s59, %s73
      %p75 = scmp.eq.s32.totalorder %s28, 0
      %p76 = por %p74, %p75
      %s78 = sadd.s32 %s77, 1
      %p81 = scmp.eq.s32.totalorder %s22, 1
      %p82 = scmp.ne.s32.totalorder %s77, %s79
      %p83 = scmp.eq.s32.totalorder %s22, 0
      %p84 = por %p82, %p83
      %p85 = scmp.ne.s32.totalorder %s77, %s79
      %p86 = scmp.eq.s32.totalorder %s27, 1
      %p87 = por %p85, %p86
      %p88 = scmp.ne.s32.totalorder %s79, %s80
      %p89 = scmp.eq.s32.totalorder %s27, 0
      %p90 = por %p88, %p89
      %p91 = scmp.ne.s32.totalorder %s79, %s80
      %p92 = scmp.eq.s32.totalorder %s28, 1
      %p93 = por %p91, %p92
      %p95 = scmp.ne.s32.totalorder %s80, %s94
      %p96 = scmp.eq.s32.totalorder %s28, 0
      %p97 = por %p95, %p96
      %s99 = sadd.s32 %s98, 1
      %p102 = scmp.eq.s32.totalorder %s22, 1
      %p103 = scmp.ne.s32.totalorder %s98, %s100
      %p104 = scmp.eq.s32.totalorder %s22, 0
      %p105 = por %p103, %p104
      %p106 = scmp.ne.s32.totalorder %s98, %s100
      %p107 = scmp.eq.s32.totalorder %s27, 1
      %p108 = por %p106, %p107
      %p109 = scmp.ne.s32.totalorder %s100, %s101
      %p110 = scmp.eq.s32.totalorder %s27, 0
      %p111 = por %p109, %p110
      %p112 = scmp.ne.s32.totalorder %s100, %s101
      %p113 = scmp.eq.s32.totalorder %s28, 1
      %p114 = por %p112, %p113
      %p116 = scmp.ne.s32.totalorder %s101, %s115
      %p117 = scmp.eq.s32.totalorder %s28, 0
      %p118 = por %p116, %p117
      %s120 = sadd.s32 %s119, 1
      %p123 = scmp.eq.s32.totalorder %s22, 1
      %p124 = scmp.ne.s32.totalorder %s119, %s121
      %p125 = scmp.eq.s32.totalorder %s22, 0
      %p126 = por %p124, %p125
      %p127 = scmp.ne.s32.totalorder %s119, %s121
      %p128 = scmp.eq.s32.totalorder %s27, 1
      %p129 = por %p127, %p128
      %p130 = scmp.ne.s32.totalorder %s121, %s122
      %p131 = scmp.eq.s32.totalorder %s27, 0
      %p132 = por %p130, %p131
      %p133 = scmp.ne.s32.totalorder %s121, %s122
      %p134 = scmp.eq.s32.totalorder %s28, 1
      %p135 = por %p133, %p134
      %p137 = scmp.ne.s32.totalorder %s122, %s136
      %p138 = scmp.eq.s32.totalorder %s28, 0
      %p139 = por %p137, %p138
      %s141 = sadd.s32 %s140, 1
      %p144 = scmp.eq.s32.totalorder %s22, 1
      %p145 = scmp.ne.s32.totalorder %s140, %s142
      %p146 = scmp.eq.s32.totalorder %s22, 0
      %p147 = por %p145, %p146
      %p148 = scmp.ne.s32.totalorder %s140, %s142
      %p149 = scmp.eq.s32.totalorder %s27, 1
      %p150 = por %p148, %p149
      %p151 = scmp.ne.s32.totalorder %s142, %s143
      %p152 = scmp.eq.s32.totalorder %s27, 0
      %p153 = por %p151, %p152
      %p154 = scmp.ne.s32.totalorder %s142, %s143
      %p155 = scmp.eq.s32.totalorder %s28, 1
      %p156 = por %p154, %p155
      %p158 = scmp.ne.s32.totalorder %s143, %s157
      %p159 = scmp.eq.s32.totalorder %s28, 0
      %p160 = por %p158, %p159
      %s162 = sadd.s32 %s161, 1
      %p165 = scmp.eq.s32.totalorder %s22, 1
      %p166 = scmp.ne.s32.totalorder %s161, %s163
      %p167 = scmp.eq.s32.totalorder %s22, 0
      %p168 = por %p166, %p167
      %p169 = scmp.ne.s32.totalorder %s161, %s163
      %p170 = scmp.eq.s32.totalorder %s27, 1
      %p171 = por %p169, %p170
      %p172 = scmp.ne.s32.totalorder %s163, %s164
      %p173 = scmp.eq.s32.totalorder %s27, 0
      %p174 = por %p172, %p173
      %p175 = scmp.ne.s32.totalorder %s163, %s164
      %p176 = scmp.eq.s32.totalorder %s28, 1
      %p177 = por %p175, %p176
      %p179 = scmp.ne.s32.totalorder %s164, %s178
      %p180 = scmp.eq.s32.totalorder %s28, 0
      %p181 = por %p179, %p180
      %s183 = sadd.s32 %s182, 1
      %p186 = scmp.eq.s32.totalorder %s22, 1
      %p187 = scmp.ne.s32.totalorder %s182, %s184
      %p188 = scmp.eq.s32.totalorder %s22, 0
      %p189 = por %p187, %p188
      %p190 = scmp.ne.s32.totalorder %s182, %s184
      %p191 = scmp.eq.s32.totalorder %s27, 1
      %p192 = por %p190, %p191
      %p193 = scmp.ne.s32.totalorder %s184, %s185
      %p194 = scmp.eq.s32.totalorder %s27, 0
      %p195 = por %p193, %p194
      %p196 = scmp.ne.s32.totalorder %s184, %s185
      %p197 = scmp.eq.s32.totalorder %s28, 1
      %p198 = por %p196, %p197
      %p200 = scmp.ne.s32.totalorder %s185, %s199
      %p201 = scmp.eq.s32.totalorder %s28, 0
      %p202 = por %p200, %p201
      %s204 = sadd.s32 %s203, 1
      %p207 = scmp.eq.s32.totalorder %s22, 1
      %p208 = scmp.ne.s32.totalorder %s203, %s205
      %p209 = scmp.eq.s32.totalorder %s22, 0
      %p210 = por %p208, %p209
      %p211 = scmp.ne.s32.totalorder %s203, %s205
      %p212 = scmp.eq.s32.totalorder %s27, 1
      %p213 = por %p211, %p212
      %p214 = scmp.ne.s32.totalorder %s205, %s206
      %p215 = scmp.eq.s32.totalorder %s27, 0
      %p216 = por %p214, %p215
      %p217 = scmp.ne.s32.totalorder %s205, %s206
      %p218 = scmp.eq.s32.totalorder %s28, 1
      %p219 = por %p217, %p218
      %p221 = scmp.ne.s32.totalorder %s206, %s220
      %p222 = scmp.eq.s32.totalorder %s28, 0
      %p223 = por %p221, %p222
      %s225 = sadd.s32 %s224, 1
      %p228 = scmp.eq.s32.totalorder %s22, 1
      %p229 = scmp.ne.s32.totalorder %s224, %s226
      %p230 = scmp.eq.s32.totalorder %s22, 0
      %p231 = por %p229, %p230
      %p232 = scmp.ne.s32.totalorder %s224, %s226
      %p233 = scmp.eq.s32.totalorder %s27, 1
      %p234 = por %p232, %p233
      %p235 = scmp.ne.s32.totalorder %s226, %s227
      %p236 = scmp.eq.s32.totalorder %s27, 0
      %p237 = por %p235, %p236
      %p238 = scmp.ne.s32.totalorder %s226, %s227
      %p239 = scmp.eq.s32.totalorder %s28, 1
      %p240 = por %p238, %p239
      %p242 = scmp.ne.s32.totalorder %s227, %s241
      %p243 = scmp.eq.s32.totalorder %s28, 0
      %p244 = por %p242, %p243
      %s246 = sadd.s32 %s245, 1
      %p249 = scmp.eq.s32.totalorder %s22, 1
      %p250 = scmp.ne.s32.totalorder %s245, %s247
      %p251 = scmp.eq.s32.totalorder %s22, 0
      %p252 = por %p250, %p251
      %p253 = scmp.ne.s32.totalorder %s245, %s247
      %p254 = scmp.eq.s32.totalorder %s27, 1
      %p255 = por %p253, %p254
      %p256 = scmp.ne.s32.totalorder %s247, %s248
      %p257 = scmp.eq.s32.totalorder %s27, 0
      %p258 = por %p256, %p257
      %p259 = scmp.ne.s32.totalorder %s247, %s248
      %p260 = scmp.eq.s32.totalorder %s28, 1
      %p261 = por %p259, %p260
      %p263 = scmp.ne.s32.totalorder %s248, %s262
      %p264 = scmp.eq.s32.totalorder %s28, 0
      %p265 = por %p263, %p264
      %s267 = sadd.s32 %s266, 1
      %p270 = scmp.eq.s32.totalorder %s22, 1
      %p271 = scmp.ne.s32.totalorder %s266, %s268
      %p272 = scmp.eq.s32.totalorder %s22, 0
      %p273 = por %p271, %p272
      %p274 = scmp.ne.s32.totalorder %s266, %s268
      %p275 = scmp.eq.s32.totalorder %s27, 1
      %p276 = por %p274, %p275
      %p277 = scmp.ne.s32.totalorder %s268, %s269
      %p278 = scmp.eq.s32.totalorder %s27, 0
      %p279 = por %p277, %p278
      %p280 = scmp.ne.s32.totalorder %s268, %s269
      %p281 = scmp.eq.s32.totalorder %s28, 1
      %p282 = por %p280, %p281
      %p284 = scmp.ne.s32.totalorder %s269, %s283
      %p285 = scmp.eq.s32.totalorder %s28, 0
      %p286 = por %p284, %p285
      %s288 = sadd.s32 %s287, 1
      %p291 = scmp.eq.s32.totalorder %s22, 1
      %p292 = scmp.ne.s32.totalorder %s287, %s289
      %p293 = scmp.eq.s32.totalorder %s22, 0
      %p294 = por %p292, %p293
      %p295 = scmp.ne.s32.totalorder %s287, %s289
      %p296 = scmp.eq.s32.totalorder %s27, 1
      %p297 = por %p295, %p296
      %p298 = scmp.ne.s32.totalorder %s289, %s290
      %p299 = scmp.eq.s32.totalorder %s27, 0
      %p300 = por %p298, %p299
      %p301 = scmp.ne.s32.totalorder %s289, %s290
      %p302 = scmp.eq.s32.totalorder %s28, 1
      %p303 = por %p301, %p302
      %p305 = scmp.ne.s32.totalorder %s290, %s304
      %p306 = scmp.eq.s32.totalorder %s28, 0
      %p307 = por %p305, %p306
      %s308 = ssub.s32 %s22, %s29
      %p309 = scmp.eq.s32.totalorder %s308, 0
      %s311 = sadd.s32 %s310, 1
      %s312 = scalar_select %p309, %s310, %s311
      %p315 = pneg %p309
      %p316 = scmp.eq.s32.totalorder %s22, 1
      %p317 = por %p315, %p316
      %p318 = scmp.ne.s32.totalorder %s310, %s313
      %p319 = scmp.eq.s32.totalorder %s22, 0
      %p320 = por %p318, %p319
      %p321 = scmp.ne.s32.totalorder %s310, %s313
      %p322 = scmp.eq.s32.totalorder %s27, 1
      %p323 = por %p321, %p322
      %p324 = scmp.ne.s32.totalorder %s313, %s314
      %p325 = scmp.eq.s32.totalorder %s27, 0
      %p326 = por %p324, %p325
      %p327 = scmp.ne.s32.totalorder %s313, %s314
      %p328 = scmp.eq.s32.totalorder %s28, 1
      %p329 = por %p327, %p328
      %p331 = scmp.ne.s32.totalorder %s314, %s330
      %p332 = scmp.eq.s32.totalorder %s28, 0
      %p333 = por %p331, %p332
      %p334 = scmp.le.s32.totalorder 1, %s22
      %p335 = scmp.lt.s32.totalorder %s22, 3
      %p336 = pnand %p334, %p335
      %p337 = pneg %p336
      // Predicated region
      $region9: #{lenet5_forward.1} parent=5 // pred_check
        _
      $region10: #{lenet5_forward.1} parent=5 // pred_check_branch
        %339 = sbr.rel (%p336) target = $region12
      $region11: #{lenet5_forward.1} parent=5 // pred_region
        %s340 = ssub.s32 %s22, 1
        // Predicated region
        $region13: #{lenet5_forward.1} parent=11 // pred_check
          %p341 = pneg %p69
        $region14: #{lenet5_forward.1} parent=11 // pred_check_branch
          %343 = sbr.rel (%p341) target = $region16
        $region15: #{lenet5_forward.1} parent=11 // pred_region
          _
        $region16: #{lenet5_forward.1} parent=11 // pred_fallthru
          _
        // Predicated region
        $region17: #{lenet5_forward.1} parent=11 // pred_check
          %p344 = pneg %p90
        $region18: #{lenet5_forward.1} parent=11 // pred_check_branch
          %346 = sbr.rel (%p344) target = $region20
        $region19: #{lenet5_forward.1} parent=11 // pred_region
          _
        $region20: #{lenet5_forward.1} parent=11 // pred_fallthru
          _
        // Predicated region
        $region21: #{lenet5_forward.1} parent=11 // pred_check
          %p347 = pneg %p111
        $region22: #{lenet5_forward.1} parent=11 // pred_check_branch
          %349 = sbr.rel (%p347) target = $region24
        $region23: #{lenet5_forward.1} parent=11 // pred_region
          _
        $region24: #{lenet5_forward.1} parent=11 // pred_fallthru
          _
        // Predicated region
        $region25: #{lenet5_forward.1} parent=11 // pred_check
          %p350 = pneg %p132
        $region26: #{lenet5_forward.1} parent=11 // pred_check_branch
          %352 = sbr.rel (%p350) target = $region28
        $region27: #{lenet5_forward.1} parent=11 // pred_region
          _
        $region28: #{lenet5_forward.1} parent=11 // pred_fallthru
          _
        // Predicated region
        $region29: #{lenet5_forward.1} parent=11 // pred_check
          %p353 = pneg %p153
        $region30: #{lenet5_forward.1} parent=11 // pred_check_branch
          %355 = sbr.rel (%p353) target = $region32
        $region31: #{lenet5_forward.1} parent=11 // pred_region
          _
        $region32: #{lenet5_forward.1} parent=11 // pred_fallthru
          _
        // Predicated region
        $region33: #{lenet5_forward.1} parent=11 // pred_check
          %p356 = pneg %p174
        $region34: #{lenet5_forward.1} parent=11 // pred_check_branch
          %358 = sbr.rel (%p356) target = $region36
        $region35: #{lenet5_forward.1} parent=11 // pred_region
          _
        $region36: #{lenet5_forward.1} parent=11 // pred_fallthru
          _
        // Predicated region
        $region37: #{lenet5_forward.1} parent=11 // pred_check
          %p359 = pneg %p195
        $region38: #{lenet5_forward.1} parent=11 // pred_check_branch
          %361 = sbr.rel (%p359) target = $region40
        $region39: #{lenet5_forward.1} parent=11 // pred_region
          _
        $region40: #{lenet5_forward.1} parent=11 // pred_fallthru
          _
        // Predicated region
        $region41: #{lenet5_forward.1} parent=11 // pred_check
          %p362 = pneg %p216
        $region42: #{lenet5_forward.1} parent=11 // pred_check_branch
          %364 = sbr.rel (%p362) target = $region44
        $region43: #{lenet5_forward.1} parent=11 // pred_region
          _
        $region44: #{lenet5_forward.1} parent=11 // pred_fallthru
          _
        // Predicated region
        $region45: #{lenet5_forward.1} parent=11 // pred_check
          %p365 = pneg %p237
        $region46: #{lenet5_forward.1} parent=11 // pred_check_branch
          %367 = sbr.rel (%p365) target = $region48
        $region47: #{lenet5_forward.1} parent=11 // pred_region
          _
        $region48: #{lenet5_forward.1} parent=11 // pred_fallthru
          _
        // Predicated region
        $region49: #{lenet5_forward.1} parent=11 // pred_check
          %p368 = pneg %p258
        $region50: #{lenet5_forward.1} parent=11 // pred_check_branch
          %370 = sbr.rel (%p368) target = $region52
        $region51: #{lenet5_forward.1} parent=11 // pred_region
          _
        $region52: #{lenet5_forward.1} parent=11 // pred_fallthru
          _
        // Predicated region
        $region53: #{lenet5_forward.1} parent=11 // pred_check
          %p371 = pneg %p279
        $region54: #{lenet5_forward.1} parent=11 // pred_check_branch
          %373 = sbr.rel (%p371) target = $region56
        $region55: #{lenet5_forward.1} parent=11 // pred_region
          _
        $region56: #{lenet5_forward.1} parent=11 // pred_fallthru
          _
        // Predicated region
        $region57: #{lenet5_forward.1} parent=11 // pred_check
          %p374 = pneg %p300
        $region58: #{lenet5_forward.1} parent=11 // pred_check_branch
          %376 = sbr.rel (%p374) target = $region60
        $region59: #{lenet5_forward.1} parent=11 // pred_region
          _
        $region60: #{lenet5_forward.1} parent=11 // pred_fallthru
          _
      $region12: #{lenet5_forward.1} parent=5 // pred_fallthru
        _
      %p377 = scmp.lt.s32.totalorder %s22, 2
      // Predicated region
      $region61: #{lenet5_forward.1} parent=5 // pred_check
        %p378 = pneg %p377
      $region62: #{lenet5_forward.1} parent=5 // pred_check_branch
        %380 = sbr.rel (%p378) target = $region64
      $region63: #{lenet5_forward.1} parent=5 // pred_region
        // Predicated region
        $region65: #{lenet5_forward.1} parent=63 // pred_check
          %p381 = pneg %p42
        $region66: #{lenet5_forward.1} parent=63 // pred_check_branch
          %383 = sbr.rel (%p381) target = $region68
        $region67: #{lenet5_forward.1} parent=63 // pred_region
          %s384 = sand.u32 %s32, 1
          %s385 = sand.u32 %s32, 1
          %s386 = smul.addr %s385, 256
          %s387 = scalar_lea.vmem [#allocation2], %s386
          %s388 = smul.addr %s22, 8
          %s389 = scalar_lea.vmem %s0, %s388
          // Predicated region
          $region69: #{lenet5_forward.1} parent=67 // pred_check
            _
          $region70: #{lenet5_forward.1} parent=67 // pred_check_branch
            %391 = sbr.rel (0) target = $region72
          $region71: #{lenet5_forward.1} parent=67 // pred_region
            // Predicated region
            $region73: #{lenet5_forward.1} parent=71 // pred_check
              _
            $region74: #{lenet5_forward.1} parent=71 // pred_check_branch
              %393 = sbr.rel (0) target = $region76
            $region75: #{lenet5_forward.1} parent=71 // pred_region
              // Predicated region
              $region88: #{lenet5_forward.1} parent=75 // pred_check
                _
              $region89: #{lenet5_forward.1} parent=75 // pred_check_branch
                %470 = sbr.rel (0) target = $region91
              $region90: #{lenet5_forward.1} parent=75 // pred_region
                loop: start=0, step=1, limit=1
                $region92: #{lenet5_forward.1} parent=90 // loop_pre_header
                  _
                $region93: #{lenet5_forward.1} parent=90 // loop_header
                  %s472 = sphi 0, %s476
                  %p473 = scmp.ge.s32.totalorder %s472, 1
                  %s477 = sphi %s389, %s389
                  %s478 = sphi %s387, %s387
                $region94: #{lenet5_forward.1} parent=90 // loop_header_branch
                  %475 = sbr.rel (%p473) target = $region98
                $region95: #{lenet5_forward.1} parent=90 // loop_body
                  %v479 = vld [vmem:[%s477] sm:$0xff]
                  %480 = vst [vmem:[%s478] sm:$0xff] %v479
                  %v481 = vld [vmem:[%s477 + $0x10] sm:$0xff]
                  %482 = vst [vmem:[%s478 + $0x8] sm:$0xff] %v481
                  %v483 = vld [vmem:[%s477 + $0x20] sm:$0xff]
                  %484 = vst [vmem:[%s478 + $0x10] sm:$0xff] %v483
                  %v485 = vld [vmem:[%s477 + $0x30] sm:$0xff]
                  %486 = vst [vmem:[%s478 + $0x18] sm:$0xff] %v485
                  %v487 = vld [vmem:[%s477 + $0x40] sm:$0xff]
                  %488 = vst [vmem:[%s478 + $0x20] sm:$0xff] %v487
                  %v489 = vld [vmem:[%s477 + $0x50] sm:$0xff]
                  %490 = vst [vmem:[%s478 + $0x28] sm:$0xff] %v489
                  %v491 = vld [vmem:[%s477 + $0x60] sm:$0xff]
                  %492 = vst [vmem:[%s478 + $0x30] sm:$0xff] %v491
                  %v493 = vld [vmem:[%s477 + $0x70] sm:$0xff]
                  %494 = vst [vmem:[%s478 + $0x38] sm:$0xff] %v493
                  %v495 = vld [vmem:[%s477 + $0x80] sm:$0xff]
                  %496 = vst [vmem:[%s478 + $0x40] sm:$0xff] %v495
                  %v497 = vld [vmem:[%s477 + $0x90] sm:$0xff]
                  %498 = vst [vmem:[%s478 + $0x48] sm:$0xff] %v497
                  %v499 = vld [vmem:[%s477 + $0xa0] sm:$0xff]
                  %500 = vst [vmem:[%s478 + $0x50] sm:$0xff] %v499
                  %v501 = vld [vmem:[%s477 + $0xb0] sm:$0xff]
                  %502 = vst [vmem:[%s478 + $0x58] sm:$0xff] %v501
                  %v503 = vld [vmem:[%s477 + $0xc0] sm:$0xff]
                  %504 = vst [vmem:[%s478 + $0x60] sm:$0xff] %v503
                  %v505 = vld [vmem:[%s477 + $0xd0] sm:$0xff]
                  %506 = vst [vmem:[%s478 + $0x68] sm:$0xff] %v505
                  %v507 = vld [vmem:[%s477 + $0xe0] sm:$0xff]
                  %508 = vst [vmem:[%s478 + $0x70] sm:$0xff] %v507
                  %v509 = vld [vmem:[%s477 + $0xf0] sm:$0xff]
                  %510 = vst [vmem:[%s478 + $0x78] sm:$0xff] %v509
                  %v511 = vld [vmem:[%s477 + $0x100] sm:$0xff]
                  %512 = vst [vmem:[%s478 + $0x80] sm:$0xff] %v511
                  %v513 = vld [vmem:[%s477 + $0x110] sm:$0xff]
                  %514 = vst [vmem:[%s478 + $0x88] sm:$0xff] %v513
                  %v515 = vld [vmem:[%s477 + $0x120] sm:$0xff]
                  %516 = vst [vmem:[%s478 + $0x90] sm:$0xff] %v515
                  %v517 = vld [vmem:[%s477 + $0x130] sm:$0xff]
                  %518 = vst [vmem:[%s478 + $0x98] sm:$0xff] %v517
                  %v519 = vld [vmem:[%s477 + $0x140] sm:$0xff]
                  %520 = vst [vmem:[%s478 + $0xa0] sm:$0xff] %v519
                  %v521 = vld [vmem:[%s477 + $0x150] sm:$0xff]
                  %522 = vst [vmem:[%s478 + $0xa8] sm:$0xff] %v521
                  %v523 = vld [vmem:[%s477 + $0x160] sm:$0xff]
                  %524 = vst [vmem:[%s478 + $0xb0] sm:$0xff] %v523
                  %v525 = vld [vmem:[%s477 + $0x170] sm:$0xff]
                  %526 = vst [vmem:[%s478 + $0xb8] sm:$0xff] %v525
                  %v527 = vld [vmem:[%s477 + $0x180] sm:$0xff]
                  %528 = vst [vmem:[%s478 + $0xc0] sm:$0xff] %v527
                  %v529 = vld [vmem:[%s477 + $0x190] sm:$0xff]
                  %530 = vst [vmem:[%s478 + $0xc8] sm:$0xff] %v529
                  %v531 = vld [vmem:[%s477 + $0x1a0] sm:$0xff]
                  %532 = vst [vmem:[%s478 + $0xd0] sm:$0xff] %v531
                  %v533 = vld [vmem:[%s477 + $0x1b0] sm:$0xff]
                  %534 = vst [vmem:[%s478 + $0xd8] sm:$0xff] %v533
                  %v535 = vld [vmem:[%s477 + $0x1c0] sm:$0xff]
                  %536 = vst [vmem:[%s478 + $0xe0] sm:$0xff] %v535
                  %v537 = vld [vmem:[%s477 + $0x1d0] sm:$0xff]
                  %538 = vst [vmem:[%s478 + $0xe8] sm:$0xff] %v537
                  %v539 = vld [vmem:[%s477 + $0x1e0] sm:$0xff]
                  %540 = vst [vmem:[%s478 + $0xf0] sm:$0xff] %v539
                  %v541 = vld [vmem:[%s477 + $0x1f0] sm:$0xff]
                  %542 = vst [vmem:[%s478 + $0xf8] sm:$0xff] %v541
                $region96: #{lenet5_forward.1} parent=90 // loop_footer
                  %s476 = sadd.s32 1, %s472
                $region97: #{lenet5_forward.1} parent=90 // loop_footer_branch
                  %471 = sbr.rel target = $region93
                $region98: #{lenet5_forward.1} parent=90 // loop_exit
                  _
              $region91: #{lenet5_forward.1} parent=75 // pred_fallthru
                _
              // Predicated region
              $region99: #{lenet5_forward.1} parent=75 // pred_check
                _
              $region100: #{lenet5_forward.1} parent=75 // pred_check_branch
                %544 = sbr.rel target = $region102
              $region101: #{lenet5_forward.1} parent=75 // pred_region
                _
              $region102: #{lenet5_forward.1} parent=75 // pred_fallthru
                _
            $region76: #{lenet5_forward.1} parent=71 // pred_fallthru
              _
            // Predicated region
            $region77: #{lenet5_forward.1} parent=71 // pred_check
              _
            $region78: #{lenet5_forward.1} parent=71 // pred_check_branch
              %395 = sbr.rel target = $region80
            $region79: #{lenet5_forward.1} parent=71 // pred_region
              loop: start=0, step=1, limit=1
              $region81: #{lenet5_forward.1} parent=79 // loop_pre_header
                _
              $region82: #{lenet5_forward.1} parent=79 // loop_header
                %s398 = sphi 0, %s402
                %p399 = scmp.ge.s32.totalorder %s398, 1
                %s403 = sphi %s389, %s389
                %s404 = sphi %s387, %s387
              $region83: #{lenet5_forward.1} parent=79 // loop_header_branch
                %401 = sbr.rel (%p399) target = $region87
              $region84: #{lenet5_forward.1} parent=79 // loop_body
                %v405 = vld [vmem:[%s403] sm:$0xff]
                %406 = vst [vmem:[%s404] sm:$0xff] %v405
                %v407 = vld [vmem:[%s403 + $0x10] sm:$0xff]
                %408 = vst [vmem:[%s404 + $0x8] sm:$0xff] %v407
                %v409 = vld [vmem:[%s403 + $0x20] sm:$0xff]
                %410 = vst [vmem:[%s404 + $0x10] sm:$0xff] %v409
                %v411 = vld [vmem:[%s403 + $0x30] sm:$0xff]
                %412 = vst [vmem:[%s404 + $0x18] sm:$0xff] %v411
                %v413 = vld [vmem:[%s403 + $0x40] sm:$0xff]
                %414 = vst [vmem:[%s404 + $0x20] sm:$0xff] %v413
                %v415 = vld [vmem:[%s403 + $0x50] sm:$0xff]
                %416 = vst [vmem:[%s404 + $0x28] sm:$0xff] %v415
                %v417 = vld [vmem:[%s403 + $0x60] sm:$0xff]
                %418 = vst [vmem:[%s404 + $0x30] sm:$0xff] %v417
                %v419 = vld [vmem:[%s403 + $0x70] sm:$0xff]
                %420 = vst [vmem:[%s404 + $0x38] sm:$0xff] %v419
                %v421 = vld [vmem:[%s403 + $0x80] sm:$0xff]
                %422 = vst [vmem:[%s404 + $0x40] sm:$0xff] %v421
                %v423 = vld [vmem:[%s403 + $0x90] sm:$0xff]
                %424 = vst [vmem:[%s404 + $0x48] sm:$0xff] %v423
                %v425 = vld [vmem:[%s403 + $0xa0] sm:$0xff]
                %426 = vst [vmem:[%s404 + $0x50] sm:$0xff] %v425
                %v427 = vld [vmem:[%s403 + $0xb0] sm:$0xff]
                %428 = vst [vmem:[%s404 + $0x58] sm:$0xff] %v427
                %v429 = vld [vmem:[%s403 + $0xc0] sm:$0xff]
                %430 = vst [vmem:[%s404 + $0x60] sm:$0xff] %v429
                %v431 = vld [vmem:[%s403 + $0xd0] sm:$0xff]
                %432 = vst [vmem:[%s404 + $0x68] sm:$0xff] %v431
                %v433 = vld [vmem:[%s403 + $0xe0] sm:$0xff]
                %434 = vst [vmem:[%s404 + $0x70] sm:$0xff] %v433
                %v435 = vld [vmem:[%s403 + $0xf0] sm:$0xff]
                %436 = vst [vmem:[%s404 + $0x78] sm:$0xff] %v435
                %v437 = vld [vmem:[%s403 + $0x100] sm:$0xff]
                %438 = vst [vmem:[%s404 + $0x80] sm:$0xff] %v437
                %v439 = vld [vmem:[%s403 + $0x110] sm:$0xff]
                %440 = vst [vmem:[%s404 + $0x88] sm:$0xff] %v439
                %v441 = vld [vmem:[%s403 + $0x120] sm:$0xff]
                %442 = vst [vmem:[%s404 + $0x90] sm:$0xff] %v441
                %v443 = vld [vmem:[%s403 + $0x130] sm:$0xff]
                %444 = vst [vmem:[%s404 + $0x98] sm:$0xff] %v443
                %v445 = vld [vmem:[%s403 + $0x140] sm:$0xff]
                %446 = vst [vmem:[%s404 + $0xa0] sm:$0xff] %v445
                %v447 = vld [vmem:[%s403 + $0x150] sm:$0xff]
                %448 = vst [vmem:[%s404 + $0xa8] sm:$0xff] %v447
                %v449 = vld [vmem:[%s403 + $0x160] sm:$0xff]
                %450 = vst [vmem:[%s404 + $0xb0] sm:$0xff] %v449
                %v451 = vld [vmem:[%s403 + $0x170] sm:$0xff]
                %452 = vst [vmem:[%s404 + $0xb8] sm:$0xff] %v451
                %v453 = vld [vmem:[%s403 + $0x180] sm:$0xff]
                %454 = vst [vmem:[%s404 + $0xc0] sm:$0xff] %v453
                %v455 = vld [vmem:[%s403 + $0x190] sm:$0xff]
                %456 = vst [vmem:[%s404 + $0xc8] sm:$0xff] %v455
                %v457 = vld [vmem:[%s403 + $0x1a0] sm:$0xff]
                %458 = vst [vmem:[%s404 + $0xd0] sm:$0xff] %v457
                %v459 = vld [vmem:[%s403 + $0x1b0] sm:$0xff]
                %460 = vst [vmem:[%s404 + $0xd8] sm:$0xff] %v459
                %v461 = vld [vmem:[%s403 + $0x1c0] sm:$0xff]
                %462 = vst [vmem:[%s404 + $0xe0] sm:$0xff] %v461
                %v463 = vld [vmem:[%s403 + $0x1d0] sm:$0xff]
                %464 = vst [vmem:[%s404 + $0xe8] sm:$0xff] %v463
                %v465 = vld [vmem:[%s403 + $0x1e0] sm:$0xff]
                %466 = vst [vmem:[%s404 + $0xf0] sm:$0xff] %v465
                %v467 = vld [vmem:[%s403 + $0x1f0] sm:$0xff]
                %468 = vst [vmem:[%s404 + $0xf8] sm:$0xff] %v467
              $region85: #{lenet5_forward.1} parent=79 // loop_footer
                %s402 = sadd.s32 1, %s398
              $region86: #{lenet5_forward.1} parent=79 // loop_footer_branch
                %397 = sbr.rel target = $region82
              $region87: #{lenet5_forward.1} parent=79 // loop_exit
                _
            $region80: #{lenet5_forward.1} parent=71 // pred_fallthru
              _
          $region72: #{lenet5_forward.1} parent=67 // pred_fallthru
            _
          %545 = vnop
        $region68: #{lenet5_forward.1} parent=63 // pred_fallthru
          _
      $region64: #{lenet5_forward.1} parent=5 // pred_fallthru
        _
      %p546 = scmp.le.s32.totalorder 1, %s22
      %p547 = scmp.lt.s32.totalorder %s22, 3
      %p548 = pnand %p546, %p547
      %p549 = pneg %p548
      // Predicated region
      $region103: #{lenet5_forward.1} parent=5 // pred_check
        _
      $region104: #{lenet5_forward.1} parent=5 // pred_check_branch
        %551 = sbr.rel (%p548) target = $region106
      $region105: #{lenet5_forward.1} parent=5 // pred_region
        %s552 = ssub.s32 %s22, 1
        %s553 = sand.u32 %s35, 1
        %s554 = sand.u32 %s35, 1
        %s555 = smul.addr %s554, 256
        %s556 = scalar_lea.vmem [#allocation2], %s555
        // Predicated region
        $region107: #{lenet5_forward.1} parent=105 // pred_check
          %p557 = pneg %p48
        $region108: #{lenet5_forward.1} parent=105 // pred_check_branch
          %559 = sbr.rel (%p557) target = $region110
        $region109: #{lenet5_forward.1} parent=105 // pred_region
          _
        $region110: #{lenet5_forward.1} parent=105 // pred_fallthru
          _
        %s560 = sand.u32 %s35, 1
        %s561 = sand.u32 %s35, 1
        %s562 = smul.addr %s561, 256
        %s563 = scalar_lea.vmem [#allocation2], %s562
        %p564 = pneg %p48
        %p565 = pneg %p45
        %p566 = pneg %p69
        %p567 = pneg %p66
        %p568 = pneg %p90
        %p569 = pneg %p87
        %p570 = pneg %p111
        %p571 = pneg %p108
        %p572 = pneg %p132
        %p573 = pneg %p129
        %p574 = pneg %p153
        %p575 = pneg %p150
        %p576 = pneg %p174
        %p577 = pneg %p171
        %p578 = pneg %p195
        %p579 = pneg %p192
        %p580 = pneg %p216
        %p581 = pneg %p213
        %p582 = pneg %p237
        %p583 = pneg %p234
        %p584 = pneg %p258
        %p585 = pneg %p255
        %p586 = pneg %p279
        %p587 = pneg %p276
        %p588 = pneg %p300
        %p589 = pneg %p297
        %p590 = pneg %p326
        %p591 = pneg %p323
        %s592 = sand.u32 %s313, 1
        %s593 = scalar_lea.sflag [#allocation4], %s592
        %s594 = sand.u32 %s313, 1
        %s595 = smul.addr %s594, 8
        %s596 = scalar_lea.vmem [#allocation3], %s595
        %v597 = vld [vmem:[%s556] sm:$0xff]
        %v598 = vld [vmem:[%s556 + $0x8] sm:$0xff]
        %v599 = vld [vmem:[%s556 + $0x10] sm:$0xff]
        %v600 = vld [vmem:[%s556 + $0x18] sm:$0xff]
        %v601 = vld [vmem:[%s556 + $0x20] sm:$0xff]
        %v602 = vld [vmem:[%s556 + $0x28] sm:$0xff]
        %v603 = vld [vmem:[%s556 + $0x30] sm:$0xff]
        %v604 = vld [vmem:[%s556 + $0x38] sm:$0xff]
        %v605 = vld [vmem:[%s556 + $0x40] sm:$0xff]
        %v606 = vld [vmem:[%s556 + $0x48] sm:$0xff]
        %v607 = vld [vmem:[%s556 + $0x50] sm:$0xff]
        %v608 = vld [vmem:[%s556 + $0x58] sm:$0xff]
        %v609 = vld [vmem:[%s556 + $0x60] sm:$0xff]
        %v610 = vld [vmem:[%s556 + $0x68] sm:$0xff]
        %v611 = vld [vmem:[%s556 + $0x70] sm:$0xff]
        %v612 = vld [vmem:[%s556 + $0x78] sm:$0xff]
        %v613 = vld [vmem:[%s556 + $0x80] sm:$0xff]
        %v614 = vld [vmem:[%s556 + $0x88] sm:$0xff]
        %v615 = vld [vmem:[%s556 + $0x90] sm:$0xff]
        %v616 = vld [vmem:[%s556 + $0x98] sm:$0xff]
        %v617 = vld [vmem:[%s556 + $0xa0] sm:$0xff]
        %v618 = vld [vmem:[%s556 + $0xa8] sm:$0xff]
        %v619 = vld [vmem:[%s556 + $0xb0] sm:$0xff]
        %v620 = vld [vmem:[%s556 + $0xb8] sm:$0xff]
        %v621 = vld [vmem:[%s556 + $0xc0] sm:$0xff]
        %v622 = vld [vmem:[%s556 + $0xc8] sm:$0xff]
        %v623 = vld [vmem:[%s556 + $0xd0] sm:$0xff]
        %v624 = vld [vmem:[%s556 + $0xd8] sm:$0xff]
        %v625 = vld [vmem:[%s1] sm:$0xff]
        %v626 = vld [vmem:[%s1 + $0x8] sm:$0xff]
        %v627 = vld [vmem:[%s1 + $0x10] sm:$0xff]
        %v628 = vld [vmem:[%s1 + $0x18] sm:$0xff]
        %s629 = scalar_lea.vmem %s556, 8 [#allocation2]
        %v630 = vld [vmem:[%s629] sm:$0xff]
        %v631 = vld [vmem:[%s629 + $0x8] sm:$0xff]
        %v632 = vld [vmem:[%s629 + $0x10] sm:$0xff]
        %v633 = vld [vmem:[%s629 + $0x18] sm:$0xff]
        %v634 = vld [vmem:[%s629 + $0x20] sm:$0xff]
        %v635 = vld [vmem:[%s629 + $0x28] sm:$0xff]
        %v636 = vld [vmem:[%s629 + $0x30] sm:$0xff]
        %v637 = vld [vmem:[%s629 + $0x38] sm:$0xff]
        %v638 = vld [vmem:[%s629 + $0x40] sm:$0xff]
        %v639 = vld [vmem:[%s629 + $0x48] sm:$0xff]
        %v640 = vld [vmem:[%s629 + $0x50] sm:$0xff]
        %v641 = vld [vmem:[%s629 + $0x58] sm:$0xff]
        %v642 = vld [vmem:[%s629 + $0x60] sm:$0xff]
        %v643 = vld [vmem:[%s629 + $0x68] sm:$0xff]
        %v644 = vld [vmem:[%s629 + $0x70] sm:$0xff]
        %v645 = vld [vmem:[%s629 + $0x78] sm:$0xff]
        %v646 = vld [vmem:[%s629 + $0x80] sm:$0xff]
        %v647 = vld [vmem:[%s629 + $0x88] sm:$0xff]
        %v648 = vld [vmem:[%s629 + $0x90] sm:$0xff]
        %v649 = vld [vmem:[%s629 + $0x98] sm:$0xff]
        %v650 = vld [vmem:[%s629 + $0xa0] sm:$0xff]
        %v651 = vld [vmem:[%s629 + $0xa8] sm:$0xff]
        %v652 = vld [vmem:[%s629 + $0xb0] sm:$0xff]
        %v653 = vld [vmem:[%s629 + $0xb8] sm:$0xff]
        %v654 = vld [vmem:[%s629 + $0xc0] sm:$0xff]
        %v655 = vld [vmem:[%s629 + $0xc8] sm:$0xff]
        %v656 = vld [vmem:[%s629 + $0xd0] sm:$0xff]
        %v657 = vld [vmem:[%s629 + $0xd8] sm:$0xff]
        %s658 = scalar_lea.vmem %s1, 32
        %v659 = vld [vmem:[%s658] sm:$0xff]
        %v660 = vld [vmem:[%s658 + $0x8] sm:$0xff]
        %v661 = vld [vmem:[%s658 + $0x10] sm:$0xff]
        %v662 = vld [vmem:[%s658 + $0x18] sm:$0xff]
        %vm663 = vcmask 261120
        %v665 = vsel %vm663, %v630, 0
        %v668 = vsel %vm663, %v631, 0
        %v671 = vsel %vm663, %v632, 0
        %v674 = vsel %vm663, %v633, 0
        %v677 = vsel %vm663, %v634, 0
        %v680 = vsel %vm663, %v635, 0
        %v683 = vsel %vm663, %v636, 0
        %v686 = vsel %vm663, %v637, 0
        %v689 = vsel %vm663, %v638, 0
        %v692 = vsel %vm663, %v639, 0
        %v695 = vsel %vm663, %v640, 0
        %v698 = vsel %vm663, %v641, 0
        %v701 = vsel %vm663, %v642, 0
        %v704 = vsel %vm663, %v643, 0
        %v707 = vsel %vm663, %v644, 0
        %v710 = vsel %vm663, %v645, 0
        %v713 = vsel %vm663, %v646, 0
        %v716 = vsel %vm663, %v647, 0
        %v719 = vsel %vm663, %v648, 0
        %v722 = vsel %vm663, %v649, 0
        %v725 = vsel %vm663, %v650, 0
        %v728 = vsel %vm663, %v651, 0
        %v731 = vsel %vm663, %v652, 0
        %v734 = vsel %vm663, %v653, 0
        %v737 = vsel %vm663, %v654, 0
        %v740 = vsel %vm663, %v655, 0
        %v743 = vsel %vm663, %v656, 0
        %v746 = vsel %vm663, %v657, 0
        %748 = vmatprep.subr.mxu0 0.0
        %749 = vmatpush1.msra.mxu0 %v659
        %750 = vmatprep.subr.mxu0 0.0
        %751 = vmatpush1.msra.mxu0 %v660
        %752 = vmatprep.subr.mxu0 0.0
        %753 = vmatpush1.msra.mxu0 %v661
        %754 = vmatprep.subr.mxu0 0.0
        %755 = vmatpush1.msra.mxu0 %v662
        %756 = vmatprep.subr.mxu0 0.0
        %757 = vmatpush1.msra.mxu0 0.0
        %758 = vmatprep.subr.mxu0 0.0
        %759 = vmatpush1.msra.mxu0 0.0
        %760 = vmatprep.subr.mxu0 0.0
        %761 = vmatpush1.msra.mxu0 0.0
        %762 = vmatprep.subr.mxu0 0.0
        %763 = vmatpush1.msra.mxu0 0.0
        %764 = vmatprep.subr.mxu0 0.0
        %765 = vmatpush1.msra.mxu0 0.0
        %766 = vmatprep.subr.mxu0 0.0
        %767 = vmatpush1.msra.mxu0 0.0
        %768 = vmatprep.subr.mxu0 0.0
        %769 = vmatpush1.msra.mxu0 0.0
        %770 = vmatprep.subr.mxu0 0.0
        %771 = vmatpush1.msra.mxu0 0.0
        %772 = vmatprep.subr.mxu0 0.0
        %773 = vmatpush1.msra.mxu0 0.0
        %774 = vmatprep.subr.mxu0 0.0
        %775 = vmatpush1.msra.mxu0 0.0
        %776 = vmatprep.subr.mxu0 0.0
        %777 = vmatpush1.msra.mxu0 0.0
        %778 = vmatprep.subr.mxu0 0.0
        %779 = vmatpush1.msra.mxu0 0.0
        %780 = vmatprep.subr.mxu0 0.0
        %781 = vmatpush1.msra.mxu0 0.0
        %782 = vmatprep.subr.mxu0 0.0
        %783 = vmatpush1.msra.mxu0 0.0
        %784 = vmatprep.subr.mxu0 0.0
        %785 = vmatpush1.msra.mxu0 0.0
        %786 = vmatprep.subr.mxu0 0.0
        %787 = vmatpush1.msra.mxu0 0.0
        %788 = vmatprep.subr.mxu0 0.0
        %789 = vmatpush1.msra.mxu0 0.0
        %790 = vmatprep.subr.mxu0 0.0
        %791 = vmatpush1.msra.mxu0 0.0
        %792 = vmatprep.subr.mxu0 0.0
        %793 = vmatpush1.msra.mxu0 0.0
        %794 = vmatprep.subr.mxu0 0.0
        %795 = vmatpush1.msra.mxu0 0.0
        %796 = vmatprep.subr.mxu0 0.0
        %797 = vmatpush1.msra.mxu0 0.0
        %798 = vmatprep.subr.mxu0 0.0
        %799 = vmatpush1.msra.mxu0 0.0
        %800 = vmatprep.subr.mxu0 0.0
        %801 = vmatpush1.msra.mxu0 0.0
        %802 = vmatprep.subr.mxu0 0.0
        %803 = vmatpush1.msra.mxu0 0.0
        %804 = vmatprep.subr.mxu0 0.0
        %805 = vmatpush1.msra.mxu0 0.0
        %806 = vmatprep.subr.mxu0 0.0
        %807 = vmatpush1.msra.mxu0 0.0
        %808 = vmatprep.subr.mxu0 0.0
        %809 = vmatpush1.msra.mxu0 0.0
        %810 = vmatprep.subr.mxu0 0.0
        %811 = vmatpush1.msra.mxu0 0.0
        %812 = vmatprep.mubr.f32.mxu0 0.0
        %813 = vmatmul.mubr.f32.gmra.mrb[0].mxu0 %v665
        %v814 = vpop.f32.mrb[0].mxu0
        %v815 = vadd.f32 0.0, %v814
        %v816 = vpop.f32.mrb[0].mxu0
        %817 = vmatprep.mubr.f32.mxu0 0.0
        %818 = vmatmul.mubr.f32.gmra.mrb[0].mxu0 %v668
        %v819 = vpop.f32.mrb[0].mxu0
        %v820 = vadd.f32 0.0, %v819
        %v821 = vpop.f32.mrb[0].mxu0
        %822 = vmatprep.mubr.f32.mxu0 0.0
        %823 = vmatmul.mubr.f32.gmra.mrb[0].mxu0 %v671
        %v824 = vpop.f32.mrb[0].mxu0
        %v825 = vadd.f32 0.0, %v824
        %v826 = vpop.f32.mrb[0].mxu0
        %827 = vmatprep.mubr.f32.mxu0 0.0
        %828 = vmatmul.mubr.f32.gmra.mrb[0].mxu0 %v674
        %v829 = vpop.f32.mrb[0].mxu0
        %v830 = vadd.f32 0.0, %v829
        %v831 = vpop.f32.mrb[0].mxu0
        %832 = vmatprep.mubr.f32.mxu0 0.0
        %833 = vmatmul.mubr.f32.gmra.mrb[0].mxu0 %v677
        %v834 = vpop.f32.mrb[0].mxu0
        %v835 = vadd.f32 0.0, %v834
        %v836 = vpop.f32.mrb[0].mxu0
        %837 = vmatprep.mubr.f32.mxu0 0.0
        %838 = vmatmul.mubr.f32.gmra.mrb[0].mxu0 %v680
        %v839 = vpop.f32.mrb[0].mxu0
        %v840 = vadd.f32 0.0, %v839
        %v841 = vpop.f32.mrb[0].mxu0
        %842 = vmatprep.mubr.f32.mxu0 0.0
        %843 = vmatmul.mubr.f32.gmra.mrb[0].mxu0 %v683
        %v844 = vpop.f32.mrb[0].mxu0
        %v845 = vadd.f32 0.0, %v844
        %v846 = vpop.f32.mrb[0].mxu0
        %847 = vmatprep.mubr.f32.mxu0 0.0
        %848 = vmatmul.mubr.f32.gmra.mrb[0].mxu0 %v686
        %v849 = vpop.f32.mrb[0].mxu0
        %v850 = vadd.f32 0.0, %v849
        %v851 = vpop.f32.mrb[0].mxu0
        %852 = vmatprep.mubr.f32.mxu0 0.0
        %853 = vmatmul.mubr.f32.gmra.mrb[0].mxu0 %v689
        %v854 = vpop.f32.mrb[0].mxu0
        %v855 = vadd.f32 0.0, %v854
        %v856 = vpop.f32.mrb[0].mxu0
        %857 = vmatprep.mubr.f32.mxu0 0.0
        %858 = vmatmul.mubr.f32.gmra.mrb[0].mxu0 %v692
        %v859 = vpop.f32.mrb[0].mxu0
        %v860 = vadd.f32 0.0, %v859
        %v861 = vpop.f32.mrb[0].mxu0
        %862 = vmatprep.mubr.f32.mxu0 0.0
        %863 = vmatmul.mubr.f32.gmra.mrb[0].mxu0 %v695
        %v864 = vpop.f32.mrb[0].mxu0
        %v865 = vadd.f32 0.0, %v864
        %v866 = vpop.f32.mrb[0].mxu0
        %867 = vmatprep.mubr.f32.mxu0 0.0
        %868 = vmatmul.mubr.f32.gmra.mrb[0].mxu0 %v698
        %v869 = vpop.f32.mrb[0].mxu0
        %v870 = vadd.f32 0.0, %v869
        %v871 = vpop.f32.mrb[0].mxu0
        %872 = vmatprep.mubr.f32.mxu0 0.0
        %873 = vmatmul.mubr.f32.gmra.mrb[0].mxu0 %v701
        %v874 = vpop.f32.mrb[0].mxu0
        %v875 = vadd.f32 0.0, %v874
        %v876 = vpop.f32.mrb[0].mxu0
        %877 = vmatprep.mubr.f32.mxu0 0.0
        %878 = vmatmul.mubr.f32.gmra.mrb[0].mxu0 %v704
        %v879 = vpop.f32.mrb[0].mxu0
        %v880 = vadd.f32 0.0, %v879
        %v881 = vpop.f32.mrb[0].mxu0
        %882 = vmatprep.mubr.f32.mxu0 0.0
        %883 = vmatmul.mubr.f32.gmra.mrb[0].mxu0 %v707
        %v884 = vpop.f32.mrb[0].mxu0
        %v885 = vadd.f32 0.0, %v884
        %v886 = vpop.f32.mrb[0].mxu0
        %887 = vmatprep.mubr.f32.mxu0 0.0
        %888 = vmatmul.mubr.f32.gmra.mrb[0].mxu0 %v710
        %v889 = vpop.f32.mrb[0].mxu0
        %v890 = vadd.f32 0.0, %v889
        %v891 = vpop.f32.mrb[0].mxu0
        %892 = vmatprep.mubr.f32.mxu0 0.0
        %893 = vmatmul.mubr.f32.gmra.mrb[0].mxu0 %v713
        %v894 = vpop.f32.mrb[0].mxu0
        %v895 = vadd.f32 0.0, %v894
        %v896 = vpop.f32.mrb[0].mxu0
        %897 = vmatprep.mubr.f32.mxu0 0.0
        %898 = vmatmul.mubr.f32.gmra.mrb[0].mxu0 %v716
        %v899 = vpop.f32.mrb[0].mxu0
        %v900 = vadd.f32 0.0, %v899
        %v901 = vpop.f32.mrb[0].mxu0
        %902 = vmatprep.mubr.f32.mxu0 0.0
        %903 = vmatmul.mubr.f32.gmra.mrb[0].mxu0 %v719
        %v904 = vpop.f32.mrb[0].mxu0
        %v905 = vadd.f32 0.0, %v904
        %v906 = vpop.f32.mrb[0].mxu0
        %907 = vmatprep.mubr.f32.mxu0 0.0
        %908 = vmatmul.mubr.f32.gmra.mrb[0].mxu0 %v722
        %v909 = vpop.f32.mrb[0].mxu0
        %v910 = vadd.f32 0.0, %v909
        %v911 = vpop.f32.mrb[0].mxu0
        %912 = vmatprep.mubr.f32.mxu0 0.0
        %913 = vmatmul.mubr.f32.gmra.mrb[0].mxu0 %v725
        %v914 = vpop.f32.mrb[0].mxu0
        %v915 = vadd.f32 0.0, %v914
        %v916 = vpop.f32.mrb[0].mxu0
        %917 = vmatprep.mubr.f32.mxu0 0.0
        %918 = vmatmul.mubr.f32.gmra.mrb[0].mxu0 %v728
        %v919 = vpop.f32.mrb[0].mxu0
        %v920 = vadd.f32 0.0, %v919
        %v921 = vpop.f32.mrb[0].mxu0
        %922 = vmatprep.mubr.f32.mxu0 0.0
        %923 = vmatmul.mubr.f32.gmra.mrb[0].mxu0 %v731
        %v924 = vpop.f32.mrb[0].mxu0
        %v925 = vadd.f32 0.0, %v924
        %v926 = vpop.f32.mrb[0].mxu0
        %927 = vmatprep.mubr.f32.mxu0 0.0
        %928 = vmatmul.mubr.f32.gmra.mrb[0].mxu0 %v734
        %v929 = vpop.f32.mrb[0].mxu0
        %v930 = vadd.f32 0.0, %v929
        %v931 = vpop.f32.mrb[0].mxu0
        %932 = vmatprep.mubr.f32.mxu0 0.0
        %933 = vmatmul.mubr.f32.gmra.mrb[0].mxu0 %v737
        %v934 = vpop.f32.mrb[0].mxu0
        %v935 = vadd.f32 0.0, %v934
        %v936 = vpop.f32.mrb[0].mxu0
        %937 = vmatprep.mubr.f32.mxu0 0.0
        %938 = vmatmul.mubr.f32.gmra.mrb[0].mxu0 %v740
        %v939 = vpop.f32.mrb[0].mxu0
        %v940 = vadd.f32 0.0, %v939
        %v941 = vpop.f32.mrb[0].mxu0
        %942 = vmatprep.mubr.f32.mxu0 0.0
        %943 = vmatmul.mubr.f32.gmra.mrb[0].mxu0 %v743
        %v944 = vpop.f32.mrb[0].mxu0
        %v945 = vadd.f32 0.0, %v944
        %v946 = vpop.f32.mrb[0].mxu0
        %947 = vmatprep.mubr.f32.mxu0 0.0
        %948 = vmatmul.mubr.f32.gmra.mrb[0].mxu0 %v746
        %v949 = vpop.f32.mrb[0].mxu0
        %v950 = vadd.f32 0.0, %v949
        %v951 = vpop.f32.mrb[0].mxu0
        %952 = vdwg.mxu0
        %v954 = vsel %vm663, %v597, 0
        %v957 = vsel %vm663, %v598, 0
        %v960 = vsel %vm663, %v599, 0
        %v963 = vsel %vm663, %v600, 0
        %v966 = vsel %vm663, %v601, 0
        %v969 = vsel %vm663, %v602, 0
        %v972 = vsel %vm663, %v603, 0
        %v975 = vsel %vm663, %v604, 0
        %v978 = vsel %vm663, %v605, 0
        %v981 = vsel %vm663, %v606, 0
        %v984 = vsel %vm663, %v607, 0
        %v987 = vsel %vm663, %v608, 0
        %v990 = vsel %vm663, %v609, 0
        %v993 = vsel %vm663, %v610, 0
        %v996 = vsel %vm663, %v611, 0
        %v999 = vsel %vm663, %v612, 0
        %v1002 = vsel %vm663, %v613, 0
        %v1005 = vsel %vm663, %v614, 0
        %v1008 = vsel %vm663, %v615, 0
        %v1011 = vsel %vm663, %v616, 0
        %v1014 = vsel %vm663, %v617, 0
        %v1017 = vsel %vm663, %v618, 0
        %v1020 = vsel %vm663, %v619, 0
        %v1023 = vsel %vm663, %v620, 0
        %v1026 = vsel %vm663, %v621, 0
        %v1029 = vsel %vm663, %v622, 0
        %v1032 = vsel %vm663, %v623, 0
        %v1035 = vsel %vm663, %v624, 0
        %1037 = vmatprep.subr.mxu0 0.0
        %1038 = vmatpush1.msra.mxu0 %v625
        %1039 = vmatprep.subr.mxu0 0.0
        %1040 = vmatpush1.msra.mxu0 %v626
        %1041 = vmatprep.subr.mxu0 0.0
        %1042 = vmatpush1.msra.mxu0 %v627
        %1043 = vmatprep.subr.mxu0 0.0
        %1044 = vmatpush1.msra.mxu0 %v628
        %1045 = vmatprep.subr.mxu0 0.0
        %1046 = vmatpush1.msra.mxu0 0.0
        %1047 = vmatprep.subr.mxu0 0.0
        %1048 = vmatpush1.msra.mxu0 0.0
        %1049 = vmatprep.subr.mxu0 0.0
        %1050 = vmatpush1.msra.mxu0 0.0
        %1051 = vmatprep.subr.mxu0 0.0
        %1052 = vmatpush1.msra.mxu0 0.0
        %1053 = vmatprep.subr.mxu0 0.0
        %1054 = vmatpush1.msra.mxu0 0.0
        %1055 = vmatprep.subr.mxu0 0.0
        %1056 = vmatpush1.msra.mxu0 0.0
        %1057 = vmatprep.subr.mxu0 0.0
        %1058 = vmatpush1.msra.mxu0 0.0
        %1059 = vmatprep.subr.mxu0 0.0
        %1060 = vmatpush1.msra.mxu0 0.0
        %1061 = vmatprep.subr.mxu0 0.0
        %1062 = vmatpush1.msra.mxu0 0.0
        %1063 = vmatprep.subr.mxu0 0.0
        %1064 = vmatpush1.msra.mxu0 0.0
        %1065 = vmatprep.subr.mxu0 0.0
        %1066 = vmatpush1.msra.mxu0 0.0
        %1067 = vmatprep.subr.mxu0 0.0
        %1068 = vmatpush1.msra.mxu0 0.0
        %1069 = vmatprep.subr.mxu0 0.0
        %1070 = vmatpush1.msra.mxu0 0.0
        %1071 = vmatprep.subr.mxu0 0.0
        %1072 = vmatpush1.msra.mxu0 0.0
        %1073 = vmatprep.subr.mxu0 0.0
        %1074 = vmatpush1.msra.mxu0 0.0
        %1075 = vmatprep.subr.mxu0 0.0
        %1076 = vmatpush1.msra.mxu0 0.0
        %1077 = vmatprep.subr.mxu0 0.0
        %1078 = vmatpush1.msra.mxu0 0.0
        %1079 = vmatprep.subr.mxu0 0.0
        %1080 = vmatpush1.msra.mxu0 0.0
        %1081 = vmatprep.subr.mxu0 0.0
        %1082 = vmatpush1.msra.mxu0 0.0
        %1083 = vmatprep.subr.mxu0 0.0
        %1084 = vmatpush1.msra.mxu0 0.0
        %1085 = vmatprep.subr.mxu0 0.0
        %1086 = vmatpush1.msra.mxu0 0.0
        %1087 = vmatprep.subr.mxu0 0.0
        %1088 = vmatpush1.msra.mxu0 0.0
        %1089 = vmatprep.subr.mxu0 0.0
        %1090 = vmatpush1.msra.mxu0 0.0
        %1091 = vmatprep.subr.mxu0 0.0
        %1092 = vmatpush1.msra.mxu0 0.0
        %1093 = vmatprep.subr.mxu0 0.0
        %1094 = vmatpush1.msra.mxu0 0.0
        %1095 = vmatprep.subr.mxu0 0.0
        %1096 = vmatpush1.msra.mxu0 0.0
        %1097 = vmatprep.subr.mxu0 0.0
        %1098 = vmatpush1.msra.mxu0 0.0
        %1099 = vmatprep.subr.mxu0 0.0
        %1100 = vmatpush1.msra.mxu0 0.0
        %1101 = vmatprep.mubr.f32.mxu0 0.0
        %1102 = vmatmul.mubr.f32.gmra.mrb[0].mxu0 %v954
        %v1103 = vpop.f32.mrb[0].mxu0
        %v1104 = vadd.f32 %v815, %v1103
        %v1105 = vpop.f32.mrb[0].mxu0
        %1106 = vmatprep.mubr.f32.mxu0 0.0
        %1107 = vmatmul.mubr.f32.gmra.mrb[0].mxu0 %v957
        %v1108 = vpop.f32.mrb[0].mxu0
        %v1109 = vadd.f32 %v820, %v1108
        %v1110 = vpop.f32.mrb[0].mxu0
        %1111 = vmatprep.mubr.f32.mxu0 0.0
        %1112 = vmatmul.mubr.f32.gmra.mrb[0].mxu0 %v960
        %v1113 = vpop.f32.mrb[0].mxu0
        %v1114 = vadd.f32 %v825, %v1113
        %v1115 = vpop.f32.mrb[0].mxu0
        %1116 = vmatprep.mubr.f32.mxu0 0.0
        %1117 = vmatmul.mubr.f32.gmra.mrb[0].mxu0 %v963
        %v1118 = vpop.f32.mrb[0].mxu0
        %v1119 = vadd.f32 %v830, %v1118
        %v1120 = vpop.f32.mrb[0].mxu0
        %1121 = vmatprep.mubr.f32.mxu0 0.0
        %1122 = vmatmul.mubr.f32.gmra.mrb[0].mxu0 %v966
        %v1123 = vpop.f32.mrb[0].mxu0
        %v1124 = vadd.f32 %v835, %v1123
        %v1125 = vpop.f32.mrb[0].mxu0
        %1126 = vmatprep.mubr.f32.mxu0 0.0
        %1127 = vmatmul.mubr.f32.gmra.mrb[0].mxu0 %v969
        %v1128 = vpop.f32.mrb[0].mxu0
        %v1129 = vadd.f32 %v840, %v1128
        %v1130 = vpop.f32.mrb[0].mxu0
        %1131 = vmatprep.mubr.f32.mxu0 0.0
        %1132 = vmatmul.mubr.f32.gmra.mrb[0].mxu0 %v972
        %v1133 = vpop.f32.mrb[0].mxu0
        %v1134 = vadd.f32 %v845, %v1133
        %v1135 = vpop.f32.mrb[0].mxu0
        %1136 = vmatprep.mubr.f32.mxu0 0.0
        %1137 = vmatmul.mubr.f32.gmra.mrb[0].mxu0 %v975
        %v1138 = vpop.f32.mrb[0].mxu0
        %v1139 = vadd.f32 %v850, %v1138
        %v1140 = vpop.f32.mrb[0].mxu0
        %1141 = vmatprep.mubr.f32.mxu0 0.0
        %1142 = vmatmul.mubr.f32.gmra.mrb[0].mxu0 %v978
        %v1143 = vpop.f32.mrb[0].mxu0
        %v1144 = vadd.f32 %v855, %v1143
        %v1145 = vpop.f32.mrb[0].mxu0
        %1146 = vmatprep.mubr.f32.mxu0 0.0
        %1147 = vmatmul.mubr.f32.gmra.mrb[0].mxu0 %v981
        %v1148 = vpop.f32.mrb[0].mxu0
        %v1149 = vadd.f32 %v860, %v1148
        %v1150 = vpop.f32.mrb[0].mxu0
        %1151 = vmatprep.mubr.f32.mxu0 0.0
        %1152 = vmatmul.mubr.f32.gmra.mrb[0].mxu0 %v984
        %v1153 = vpop.f32.mrb[0].mxu0
        %v1154 = vadd.f32 %v865, %v1153
        %v1155 = vpop.f32.mrb[0].mxu0
        %1156 = vmatprep.mubr.f32.mxu0 0.0
        %1157 = vmatmul.mubr.f32.gmra.mrb[0].mxu0 %v987
        %v1158 = vpop.f32.mrb[0].mxu0
        %v1159 = vadd.f32 %v870, %v1158
        %v1160 = vpop.f32.mrb[0].mxu0
        %1161 = vmatprep.mubr.f32.mxu0 0.0
        %1162 = vmatmul.mubr.f32.gmra.mrb[0].mxu0 %v990
        %v1163 = vpop.f32.mrb[0].mxu0
        %v1164 = vadd.f32 %v875, %v1163
        %v1165 = vpop.f32.mrb[0].mxu0
        %1166 = vmatprep.mubr.f32.mxu0 0.0
        %1167 = vmatmul.mubr.f32.gmra.mrb[0].mxu0 %v993
        %v1168 = vpop.f32.mrb[0].mxu0
        %v1169 = vadd.f32 %v880, %v1168
        %v1170 = vpop.f32.mrb[0].mxu0
        %1171 = vmatprep.mubr.f32.mxu0 0.0
        %1172 = vmatmul.mubr.f32.gmra.mrb[0].mxu0 %v996
        %v1173 = vpop.f32.mrb[0].mxu0
        %v1174 = vadd.f32 %v885, %v1173
        %v1175 = vpop.f32.mrb[0].mxu0
        %1176 = vmatprep.mubr.f32.mxu0 0.0
        %1177 = vmatmul.mubr.f32.gmra.mrb[0].mxu0 %v999
        %v1178 = vpop.f32.mrb[0].mxu0
        %v1179 = vadd.f32 %v890, %v1178
        %v1180 = vpop.f32.mrb[0].mxu0
        %1181 = vmatprep.mubr.f32.mxu0 0.0
        %1182 = vmatmul.mubr.f32.gmra.mrb[0].mxu0 %v1002
        %v1183 = vpop.f32.mrb[0].mxu0
        %v1184 = vadd.f32 %v895, %v1183
        %v1185 = vpop.f32.mrb[0].mxu0
        %1186 = vmatprep.mubr.f32.mxu0 0.0
        %1187 = vmatmul.mubr.f32.gmra.mrb[0].mxu0 %v1005
        %v1188 = vpop.f32.mrb[0].mxu0
        %v1189 = vadd.f32 %v900, %v1188
        %v1190 = vpop.f32.mrb[0].mxu0
        %1191 = vmatprep.mubr.f32.mxu0 0.0
        %1192 = vmatmul.mubr.f32.gmra.mrb[0].mxu0 %v1008
        %v1193 = vpop.f32.mrb[0].mxu0
        %v1194 = vadd.f32 %v905, %v1193
        %v1195 = vpop.f32.mrb[0].mxu0
        %1196 = vmatprep.mubr.f32.mxu0 0.0
        %1197 = vmatmul.mubr.f32.gmra.mrb[0].mxu0 %v1011
        %v1198 = vpop.f32.mrb[0].mxu0
        %v1199 = vadd.f32 %v910, %v1198
        %v1200 = vpop.f32.mrb[0].mxu0
        %1201 = vmatprep.mubr.f32.mxu0 0.0
        %1202 = vmatmul.mubr.f32.gmra.mrb[0].mxu0 %v1014
        %v1203 = vpop.f32.mrb[0].mxu0
        %v1204 = vadd.f32 %v915, %v1203
        %v1205 = vpop.f32.mrb[0].mxu0
        %1206 = vmatprep.mubr.f32.mxu0 0.0
        %1207 = vmatmul.mubr.f32.gmra.mrb[0].mxu0 %v1017
        %v1208 = vpop.f32.mrb[0].mxu0
        %v1209 = vadd.f32 %v920, %v1208
        %v1210 = vpop.f32.mrb[0].mxu0
        %1211 = vmatprep.mubr.f32.mxu0 0.0
        %1212 = vmatmul.mubr.f32.gmra.mrb[0].mxu0 %v1020
        %v1213 = vpop.f32.mrb[0].mxu0
        %v1214 = vadd.f32 %v925, %v1213
        %v1215 = vpop.f32.mrb[0].mxu0
        %1216 = vmatprep.mubr.f32.mxu0 0.0
        %1217 = vmatmul.mubr.f32.gmra.mrb[0].mxu0 %v1023
        %v1218 = vpop.f32.mrb[0].mxu0
        %v1219 = vadd.f32 %v930, %v1218
        %v1220 = vpop.f32.mrb[0].mxu0
        %1221 = vmatprep.mubr.f32.mxu0 0.0
        %1222 = vmatmul.mubr.f32.gmra.mrb[0].mxu0 %v1026
        %v1223 = vpop.f32.mrb[0].mxu0
        %v1224 = vadd.f32 %v935, %v1223
        %v1225 = vpop.f32.mrb[0].mxu0
        %1226 = vmatprep.mubr.f32.mxu0 0.0
        %1227 = vmatmul.mubr.f32.gmra.mrb[0].mxu0 %v1029
        %v1228 = vpop.f32.mrb[0].mxu0
        %v1229 = vadd.f32 %v940, %v1228
        %v1230 = vpop.f32.mrb[0].mxu0
        %1231 = vmatprep.mubr.f32.mxu0 0.0
        %1232 = vmatmul.mubr.f32.gmra.mrb[0].mxu0 %v1032
        %v1233 = vpop.f32.mrb[0].mxu0
        %v1234 = vadd.f32 %v945, %v1233
        %v1235 = vpop.f32.mrb[0].mxu0
        %1236 = vmatprep.mubr.f32.mxu0 0.0
        %1237 = vmatmul.mubr.f32.gmra.mrb[0].mxu0 %v1035
        %v1238 = vpop.f32.mrb[0].mxu0
        %v1239 = vadd.f32 %v950, %v1238
        %v1240 = vpop.f32.mrb[0].mxu0
        %1241 = vdwg.mxu0
        %s1242 = scalar_lea.vmem %s556, 16 [#allocation2]
        %v1243 = vld [vmem:[%s1242] sm:$0xff]
        %v1244 = vld [vmem:[%s1242 + $0x8] sm:$0xff]
        %v1245 = vld [vmem:[%s1242 + $0x10] sm:$0xff]
        %v1246 = vld [vmem:[%s1242 + $0x18] sm:$0xff]
        %v1247 = vld [vmem:[%s1242 + $0x20] sm:$0xff]
        %v1248 = vld [vmem:[%s1242 + $0x28] sm:$0xff]
        %v1249 = vld [vmem:[%s1242 + $0x30] sm:$0xff]
        %v1250 = vld [vmem:[%s1242 + $0x38] sm:$0xff]
        %v1251 = vld [vmem:[%s1242 + $0x40] sm:$0xff]
        %v1252 = vld [vmem:[%s1242 + $0x48] sm:$0xff]
        %v1253 = vld [vmem:[%s1242 + $0x50] sm:$0xff]
        %v1254 = vld [vmem:[%s1242 + $0x58] sm:$0xff]
        %v1255 = vld [vmem:[%s1242 + $0x60] sm:$0xff]
        %v1256 = vld [vmem:[%s1242 + $0x68] sm:$0xff]
        %v1257 = vld [vmem:[%s1242 + $0x70] sm:$0xff]
        %v1258 = vld [vmem:[%s1242 + $0x78] sm:$0xff]
        %v1259 = vld [vmem:[%s1242 + $0x80] sm:$0xff]
        %v1260 = vld [vmem:[%s1242 + $0x88] sm:$0xff]
        %v1261 = vld [vmem:[%s1242 + $0x90] sm:$0xff]
        %v1262 = vld [vmem:[%s1242 + $0x98] sm:$0xff]
        %v1263 = vld [vmem:[%s1242 + $0xa0] sm:$0xff]
        %v1264 = vld [vmem:[%s1242 + $0xa8] sm:$0xff]
        %v1265 = vld [vmem:[%s1242 + $0xb0] sm:$0xff]
        %v1266 = vld [vmem:[%s1242 + $0xb8] sm:$0xff]
        %v1267 = vld [vmem:[%s1242 + $0xc0] sm:$0xff]
        %v1268 = vld [vmem:[%s1242 + $0xc8] sm:$0xff]
        %v1269 = vld [vmem:[%s1242 + $0xd0] sm:$0xff]
        %v1270 = vld [vmem:[%s1242 + $0xd8] sm:$0xff]
        %s1271 = scalar_lea.vmem %s1, 64
        %v1272 = vld [vmem:[%s1271] sm:$0xff]
        %v1273 = vld [vmem:[%s1271 + $0x8] sm:$0xff]
        %v1274 = vld [vmem:[%s1271 + $0x10] sm:$0xff]
        %v1275 = vld [vmem:[%s1271 + $0x18] sm:$0xff]
        %v1277 = vsel %vm663, %v1243, 0
        %v1280 = vsel %vm663, %v1244, 0
        %v1283 = vsel %vm663, %v1245, 0
        %v1286 = vsel %vm663, %v1246, 0
        %v1289 = vsel %vm663, %v1247, 0
        %v1292 = vsel %vm663, %v1248, 0
        %v1295 = vsel %vm663, %v1249, 0
        %v1298 = vsel %vm663, %v1250, 0
        %v1301 = vsel %vm663, %v1251, 0
        %v1304 = vsel %vm663, %v1252, 0
        %v1307 = vsel %vm663, %v1253, 0
        %v1310 = vsel %vm663, %v1254, 0
        %v1313 = vsel %vm663, %v1255, 0
        %v1316 = vsel %vm663, %v1256, 0
        %v1319 = vsel %vm663, %v1257, 0
        %v1322 = vsel %vm663, %v1258, 0
        %v1325 = vsel %vm663, %v1259, 0
        %v1328 = vsel %vm663, %v1260, 0
        %v1331 = vsel %vm663, %v1261, 0
        %v1334 = vsel %vm663, %v1262, 0
        %v1337 = vsel %vm663, %v1263, 0
        %v1340 = vsel %vm663, %v1264, 0
        %v1343 = vsel %vm663, %v1265, 0
        %v1346 = vsel %vm663, %v1266, 0
        %v1349 = vsel %vm663, %v1267, 0
        %v1352 = vsel %vm663, %v1268, 0
        %v1355 = vsel %vm663, %v1269, 0
        %v1358 = vsel %vm663, %v1270, 0
        %1360 = vmatprep.subr.mxu0 0.0
        %1361 = vmatpush1.msra.mxu0 %v1272
        %1362 = vmatprep.subr.mxu0 0.0
        %1363 = vmatpush1.msra.mxu0 %v1273
        %1364 = vmatprep.subr.mxu0 0.0
        %1365 = vmatpush1.msra.mxu0 %v1274
        %1366 = vmatprep.subr.mxu0 0.0
        %1367 = vmatpush1.msra.mxu0 %v1275
        %1368 = vmatprep.subr.mxu0 0.0
        %1369 = vmatpush1.msra.mxu0 0.0
        %1370 = vmatprep.subr.mxu0 0.0
        %1371 = vmatpush1.msra.mxu0 0.0
        %1372 = vmatprep.subr.mxu0 0.0
        %1373 = vmatpush1.msra.mxu0 0.0
        %1374 = vmatprep.subr.mxu0 0.0
        %1375 = vmatpush1.msra.mxu0 0.0
        %1376 = vmatprep.subr.mxu0 0.0
        %1377 = vmatpush1.msra.mxu0 0.0
        %1378 = vmatprep.subr.mxu0 0.0
        %1379 = vmatpush1.msra.mxu0 0.0
        %1380 = vmatprep.subr.mxu0 0.0
        %1381 = vmatpush1.msra.mxu0 0.0
        %1382 = vmatprep.subr.mxu0 0.0
        %1383 = vmatpush1.msra.mxu0 0.0
        %1384 = vmatprep.subr.mxu0 0.0
        %1385 = vmatpush1.msra.mxu0 0.0
        %1386 = vmatprep.subr.mxu0 0.0
        %1387 = vmatpush1.msra.mxu0 0.0
        %1388 = vmatprep.subr.mxu0 0.0
        %1389 = vmatpush1.msra.mxu0 0.0
        %1390 = vmatprep.subr.mxu0 0.0
        %1391 = vmatpush1.msra.mxu0 0.0
        %1392 = vmatprep.subr.mxu0 0.0
        %1393 = vmatpush1.msra.mxu0 0.0
        %1394 = vmatprep.subr.mxu0 0.0
        %1395 = vmatpush1.msra.mxu0 0.0
        %1396 = vmatprep.subr.mxu0 0.0
        %1397 = vmatpush1.msra.mxu0 0.0
        %1398 = vmatprep.subr.mxu0 0.0
        %1399 = vmatpush1.msra.mxu0 0.0
        %1400 = vmatprep.subr.mxu0 0.0
        %1401 = vmatpush1.msra.mxu0 0.0
        %1402 = vmatprep.subr.mxu0 0.0
        %1403 = vmatpush1.msra.mxu0 0.0
        %1404 = vmatprep.subr.mxu0 0.0
        %1405 = vmatpush1.msra.mxu0 0.0
        %1406 = vmatprep.subr.mxu0 0.0
        %1407 = vmatpush1.msra.mxu0 0.0
        %1408 = vmatprep.subr.mxu0 0.0
        %1409 = vmatpush1.msra.mxu0 0.0
        %1410 = vmatprep.subr.mxu0 0.0
        %1411 = vmatpush1.msra.mxu0 0.0
        %1412 = vmatprep.subr.mxu0 0.0
        %1413 = vmatpush1.msra.mxu0 0.0
        %1414 = vmatprep.subr.mxu0 0.0
        %1415 = vmatpush1.msra.mxu0 0.0
        %1416 = vmatprep.subr.mxu0 0.0
        %1417 = vmatpush1.msra.mxu0 0.0
        %1418 = vmatprep.subr.mxu0 0.0
        %1419 = vmatpush1.msra.mxu0 0.0
        %1420 = vmatprep.subr.mxu0 0.0
        %1421 = vmatpush1.msra.mxu0 0.0
        %1422 = vmatprep.subr.mxu0 0.0
        %1423 = vmatpush1.msra.mxu0 0.0
        %1424 = vmatprep.mubr.f32.mxu0 0.0
        %1425 = vmatmul.mubr.f32.gmra.mrb[0].mxu0 %v1277
        %v1426 = vpop.f32.mrb[0].mxu0
        %v1427 = vadd.f32 0.0, %v1426
        %v1428 = vpop.f32.mrb[0].mxu0
        %1429 = vmatprep.mubr.f32.mxu0 0.0
        %1430 = vmatmul.mubr.f32.gmra.mrb[0].mxu0 %v1280
        %v1431 = vpop.f32.mrb[0].mxu0
        %v1432 = vadd.f32 0.0, %v1431
        %v1433 = vpop.f32.mrb[0].mxu0
        %1434 = vmatprep.mubr.f32.mxu0 0.0
        %1435 = vmatmul.mubr.f32.gmra.mrb[0].mxu0 %v1283
        %v1436 = vpop.f32.mrb[0].mxu0
        %v1437 = vadd.f32 0.0, %v1436
        %v1438 = vpop.f32.mrb[0].mxu0
        %1439 = vmatprep.mubr.f32.mxu0 0.0
        %1440 = vmatmul.mubr.f32.gmra.mrb[0].mxu0 %v1286
        %v1441 = vpop.f32.mrb[0].mxu0
        %v1442 = vadd.f32 0.0, %v1441
        %v1443 = vpop.f32.mrb[0].mxu0
        %1444 = vmatprep.mubr.f32.mxu0 0.0
        %1445 = vmatmul.mubr.f32.gmra.mrb[0].mxu0 %v1289
        %v1446 = vpop.f32.mrb[0].mxu0
        %v1447 = vadd.f32 0.0, %v1446
        %v1448 = vpop.f32.mrb[0].mxu0
        %1449 = vmatprep.mubr.f32.mxu0 0.0
        %1450 = vmatmul.mubr.f32.gmra.mrb[0].mxu0 %v1292
        %v1451 = vpop.f32.mrb[0].mxu0
        %v1452 = vadd.f32 0.0, %v1451
        %v1453 = vpop.f32.mrb[0].mxu0
        %1454 = vmatprep.mubr.f32.mxu0 0.0
        %1455 = vmatmul.mubr.f32.gmra.mrb[0].mxu0 %v1295
        %v1456 = vpop.f32.mrb[0].mxu0
        %v1457 = vadd.f32 0.0, %v1456
        %v1458 = vpop.f32.mrb[0].mxu0
        %1459 = vmatprep.mubr.f32.mxu0 0.0
        %1460 = vmatmul.mubr.f32.gmra.mrb[0].mxu0 %v1298
        %v1461 = vpop.f32.mrb[0].mxu0
        %v1462 = vadd.f32 0.0, %v1461
        %v1463 = vpop.f32.mrb[0].mxu0
        %1464 = vmatprep.mubr.f32.mxu0 0.0
        %1465 = vmatmul.mubr.f32.gmra.mrb[0].mxu0 %v1301
        %v1466 = vpop.f32.mrb[0].mxu0
        %v1467 = vadd.f32 0.0, %v1466
        %v1468 = vpop.f32.mrb[0].mxu0
        %1469 = vmatprep.mubr.f32.mxu0 0.0
        %1470 = vmatmul.mubr.f32.gmra.mrb[0].mxu0 %v1304
        %v1471 = vpop.f32.mrb[0].mxu0
        %v1472 = vadd.f32 0.0, %v1471
        %v1473 = vpop.f32.mrb[0].mxu0
        %1474 = vmatprep.mubr.f32.mxu0 0.0
        %1475 = vmatmul.mubr.f32.gmra.mrb[0].mxu0 %v1307
        %v1476 = vpop.f32.mrb[0].mxu0
        %v1477 = vadd.f32 0.0, %v1476
        %v1478 = vpop.f32.mrb[0].mxu0
        %1479 = vmatprep.mubr.f32.mxu0 0.0
        %1480 = vmatmul.mubr.f32.gmra.mrb[0].mxu0 %v1310
        %v1481 = vpop.f32.mrb[0].mxu0
        %v1482 = vadd.f32 0.0, %v1481
        %v1483 = vpop.f32.mrb[0].mxu0
        %1484 = vmatprep.mubr.f32.mxu0 0.0
        %1485 = vmatmul.mubr.f32.gmra.mrb[0].mxu0 %v1313
        %v1486 = vpop.f32.mrb[0].mxu0
        %v1487 = vadd.f32 0.0, %v1486
        %v1488 = vpop.f32.mrb[0].mxu0
        %1489 = vmatprep.mubr.f32.mxu0 0.0
        %1490 = vmatmul.mubr.f32.gmra.mrb[0].mxu0 %v1316
        %v1491 = vpop.f32.mrb[0].mxu0
        %v1492 = vadd.f32 0.0, %v1491
        %v1493 = vpop.f32.mrb[0].mxu0
        %1494 = vmatprep.mubr.f32.mxu0 0.0
        %1495 = vmatmul.mubr.f32.gmra.mrb[0].mxu0 %v1319
        %v1496 = vpop.f32.mrb[0].mxu0
        %v1497 = vadd.f32 0.0, %v1496
        %v1498 = vpop.f32.mrb[0].mxu0
        %1499 = vmatprep.mubr.f32.mxu0 0.0
        %1500 = vmatmul.mubr.f32.gmra.mrb[0].mxu0 %v1322
        %v1501 = vpop.f32.mrb[0].mxu0
        %v1502 = vadd.f32 0.0, %v1501
        %v1503 = vpop.f32.mrb[0].mxu0
        %1504 = vmatprep.mubr.f32.mxu0 0.0
        %1505 = vmatmul.mubr.f32.gmra.mrb[0].mxu0 %v1325
        %v1506 = vpop.f32.mrb[0].mxu0
        %v1507 = vadd.f32 0.0, %v1506
        %v1508 = vpop.f32.mrb[0].mxu0
        %1509 = vmatprep.mubr.f32.mxu0 0.0
        %1510 = vmatmul.mubr.f32.gmra.mrb[0].mxu0 %v1328
        %v1511 = vpop.f32.mrb[0].mxu0
        %v1512 = vadd.f32 0.0, %v1511
        %v1513 = vpop.f32.mrb[0].mxu0
        %1514 = vmatprep.mubr.f32.mxu0 0.0
        %1515 = vmatmul.mubr.f32.gmra.mrb[0].mxu0 %v1331
        %v1516 = vpop.f32.mrb[0].mxu0
        %v1517 = vadd.f32 0.0, %v1516
        %v1518 = vpop.f32.mrb[0].mxu0
        %1519 = vmatprep.mubr.f32.mxu0 0.0
        %1520 = vmatmul.mubr.f32.gmra.mrb[0].mxu0 %v1334
        %v1521 = vpop.f32.mrb[0].mxu0
        %v1522 = vadd.f32 0.0, %v1521
        %v1523 = vpop.f32.mrb[0].mxu0
        %1524 = vmatprep.mubr.f32.mxu0 0.0
        %1525 = vmatmul.mubr.f32.gmra.mrb[0].mxu0 %v1337
        %v1526 = vpop.f32.mrb[0].mxu0
        %v1527 = vadd.f32 0.0, %v1526
        %v1528 = vpop.f32.mrb[0].mxu0
        %1529 = vmatprep.mubr.f32.mxu0 0.0
        %1530 = vmatmul.mubr.f32.gmra.mrb[0].mxu0 %v1340
        %v1531 = vpop.f32.mrb[0].mxu0
        %v1532 = vadd.f32 0.0, %v1531
        %v1533 = vpop.f32.mrb[0].mxu0
        %1534 = vmatprep.mubr.f32.mxu0 0.0
        %1535 = vmatmul.mubr.f32.gmra.mrb[0].mxu0 %v1343
        %v1536 = vpop.f32.mrb[0].mxu0
        %v1537 = vadd.f32 0.0, %v1536
        %v1538 = vpop.f32.mrb[0].mxu0
        %1539 = vmatprep.mubr.f32.mxu0 0.0
        %1540 = vmatmul.mubr.f32.gmra.mrb[0].mxu0 %v1346
        %v1541 = vpop.f32.mrb[0].mxu0
        %v1542 = vadd.f32 0.0, %v1541
        %v1543 = vpop.f32.mrb[0].mxu0
        %1544 = vmatprep.mubr.f32.mxu0 0.0
        %1545 = vmatmul.mubr.f32.gmra.mrb[0].mxu0 %v1349
        %v1546 = vpop.f32.mrb[0].mxu0
        %v1547 = vadd.f32 0.0, %v1546
        %v1548 = vpop.f32.mrb[0].mxu0
        %1549 = vmatprep.mubr.f32.mxu0 0.0
        %1550 = vmatmul.mubr.f32.gmra.mrb[0].mxu0 %v1352
        %v1551 = vpop.f32.mrb[0].mxu0
        %v1552 = vadd.f32 0.0, %v1551
        %v1553 = vpop.f32.mrb[0].mxu0
        %1554 = vmatprep.mubr.f32.mxu0 0.0
        %1555 = vmatmul.mubr.f32.gmra.mrb[0].mxu0 %v1355
        %v1556 = vpop.f32.mrb[0].mxu0
        %v1557 = vadd.f32 0.0, %v1556
        %v1558 = vpop.f32.mrb[0].mxu0
        %1559 = vmatprep.mubr.f32.mxu0 0.0
        %1560 = vmatmul.mubr.f32.gmra.mrb[0].mxu0 %v1358
        %v1561 = vpop.f32.mrb[0].mxu0
        %v1562 = vadd.f32 0.0, %v1561
        %v1563 = vpop.f32.mrb[0].mxu0
        %1564 = vdwg.mxu0
        %v1565 = vadd.f32 %v1104, %v1427
        %v1566 = vadd.f32 %v1109, %v1432
        %v1567 = vadd.f32 %v1114, %v1437
        %v1568 = vadd.f32 %v1119, %v1442
        %v1569 = vadd.f32 %v1124, %v1447
        %v1570 = vadd.f32 %v1129, %v1452
        %v1571 = vadd.f32 %v1134, %v1457
        %v1572 = vadd.f32 %v1139, %v1462
        %v1573 = vadd.f32 %v1144, %v1467
        %v1574 = vadd.f32 %v1149, %v1472
        %v1575 = vadd.f32 %v1154, %v1477
        %v1576 = vadd.f32 %v1159, %v1482
        %v1577 = vadd.f32 %v1164, %v1487
        %v1578 = vadd.f32 %v1169, %v1492
        %v1579 = vadd.f32 %v1174, %v1497
        %v1580 = vadd.f32 %v1179, %v1502
        %v1581 = vadd.f32 %v1184, %v1507
        %v1582 = vadd.f32 %v1189, %v1512
        %v1583 = vadd.f32 %v1194, %v1517
        %v1584 = vadd.f32 %v1199, %v1522
        %v1585 = vadd.f32 %v1204, %v1527
        %v1586 = vadd.f32 %v1209, %v1532
        %v1587 = vadd.f32 %v1214, %v1537
        %v1588 = vadd.f32 %v1219, %v1542
        %v1589 = vadd.f32 %v1224, %v1547
        %v1590 = vadd.f32 %v1229, %v1552
        %v1591 = vadd.f32 %v1234, %v1557
        %v1592 = vadd.f32 %v1239, %v1562
        %s1593 = scalar_lea.vmem %s556, 24 [#allocation2]
        %v1594 = vld [vmem:[%s1593] sm:$0xff]
        %v1595 = vld [vmem:[%s1593 + $0x8] sm:$0xff]
        %v1596 = vld [vmem:[%s1593 + $0x10] sm:$0xff]
        %v1597 = vld [vmem:[%s1593 + $0x18] sm:$0xff]
        %v1598 = vld [vmem:[%s1593 + $0x20] sm:$0xff]
        %v1599 = vld [vmem:[%s1593 + $0x28] sm:$0xff]
        %v1600 = vld [vmem:[%s1593 + $0x30] sm:$0xff]
        %v1601 = vld [vmem:[%s1593 + $0x38] sm:$0xff]
        %v1602 = vld [vmem:[%s1593 + $0x40] sm:$0xff]
        %v1603 = vld [vmem:[%s1593 + $0x48] sm:$0xff]
        %v1604 = vld [vmem:[%s1593 + $0x50] sm:$0xff]
        %v1605 = vld [vmem:[%s1593 + $0x58] sm:$0xff]
        %v1606 = vld [vmem:[%s1593 + $0x60] sm:$0xff]
        %v1607 = vld [vmem:[%s1593 + $0x68] sm:$0xff]
        %v1608 = vld [vmem:[%s1593 + $0x70] sm:$0xff]
        %v1609 = vld [vmem:[%s1593 + $0x78] sm:$0xff]
        %v1610 = vld [vmem:[%s1593 + $0x80] sm:$0xff]
        %v1611 = vld [vmem:[%s1593 + $0x88] sm:$0xff]
        %v1612 = vld [vmem:[%s1593 + $0x90] sm:$0xff]
        %v1613 = vld [vmem:[%s1593 + $0x98] sm:$0xff]
        %v1614 = vld [vmem:[%s1593 + $0xa0] sm:$0xff]
        %v1615 = vld [vmem:[%s1593 + $0xa8] sm:$0xff]
        %v1616 = vld [vmem:[%s1593 + $0xb0] sm:$0xff]
        %v1617 = vld [vmem:[%s1593 + $0xb8] sm:$0xff]
        %v1618 = vld [vmem:[%s1593 + $0xc0] sm:$0xff]
        %v1619 = vld [vmem:[%s1593 + $0xc8] sm:$0xff]
        %v1620 = vld [vmem:[%s1593 + $0xd0] sm:$0xff]
        %v1621 = vld [vmem:[%s1593 + $0xd8] sm:$0xff]
        %s1622 = scalar_lea.vmem %s1, 96
        %v1623 = vld [vmem:[%s1622] sm:$0xff]
        %v1624 = vld [vmem:[%s1622 + $0x8] sm:$0xff]
        %v1625 = vld [vmem:[%s1622 + $0x10] sm:$0xff]
        %v1626 = vld [vmem:[%s1622 + $0x18] sm:$0xff]
        %v1628 = vsel %vm663, %v1594, 0
        %v1631 = vsel %vm663, %v1595, 0
        %v1634 = vsel %vm663, %v1596, 0
        %v1637 = vsel %vm663, %v1597, 0
        %v1640 = vsel %vm663, %v1598, 0
        %v1643 = vsel %vm663, %v1599, 0
        %v1646 = vsel %vm663, %v1600, 0
        %v1649 = vsel %vm663, %v1601, 0
        %v1652 = vsel %vm663, %v1602, 0
        %v1655 = vsel %vm663, %v1603, 0
        %v1658 = vsel %vm663, %v1604, 0
        %v1661 = vsel %vm663, %v1605, 0
        %v1664 = vsel %vm663, %v1606, 0
        %v1667 = vsel %vm663, %v1607, 0
        %v1670 = vsel %vm663, %v1608, 0
        %v1673 = vsel %vm663, %v1609, 0
        %v1676 = vsel %vm663, %v1610, 0
        %v1679 = vsel %vm663, %v1611, 0
        %v1682 = vsel %vm663, %v1612, 0
        %v1685 = vsel %vm663, %v1613, 0
        %v1688 = vsel %vm663, %v1614, 0
        %v1691 = vsel %vm663, %v1615, 0
        %v1694 = vsel %vm663, %v1616, 0
        %v1697 = vsel %vm663, %v1617, 0
        %v1700 = vsel %vm663, %v1618, 0
        %v1703 = vsel %vm663, %v1619, 0
        %v1706 = vsel %vm663, %v1620, 0
        %v1709 = vsel %vm663, %v1621, 0
        %1711 = vmatprep.subr.mxu0 0.0
        %1712 = vmatpush1.msra.mxu0 %v1623
        %1713 = vmatprep.subr.mxu0 0.0
        %1714 = vmatpush1.msra.mxu0 %v1624
        %1715 = vmatprep.subr.mxu0 0.0
        %1716 = vmatpush1.msra.mxu0 %v1625
        %1717 = vmatprep.subr.mxu0 0.0
        %1718 = vmatpush1.msra.mxu0 %v1626
        %1719 = vmatprep.subr.mxu0 0.0
        %1720 = vmatpush1.msra.mxu0 0.0
        %1721 = vmatprep.subr.mxu0 0.0
        %1722 = vmatpush1.msra.mxu0 0.0
        %1723 = vmatprep.subr.mxu0 0.0
        %1724 = vmatpush1.msra.mxu0 0.0
        %1725 = vmatprep.subr.mxu0 0.0
        %1726 = vmatpush1.msra.mxu0 0.0
        %1727 = vmatprep.subr.mxu0 0.0
        %1728 = vmatpush1.msra.mxu0 0.0
        %1729 = vmatprep.subr.mxu0 0.0
        %1730 = vmatpush1.msra.mxu0 0.0
        %1731 = vmatprep.subr.mxu0 0.0
        %1732 = vmatpush1.msra.mxu0 0.0
        %1733 = vmatprep.subr.mxu0 0.0
        %1734 = vmatpush1.msra.mxu0 0.0
        %1735 = vmatprep.subr.mxu0 0.0
        %1736 = vmatpush1.msra.mxu0 0.0
        %1737 = vmatprep.subr.mxu0 0.0
        %1738 = vmatpush1.msra.mxu0 0.0
        %1739 = vmatprep.subr.mxu0 0.0
        %1740 = vmatpush1.msra.mxu0 0.0
        %1741 = vmatprep.subr.mxu0 0.0
        %1742 = vmatpush1.msra.mxu0 0.0
        %1743 = vmatprep.subr.mxu0 0.0
        %1744 = vmatpush1.msra.mxu0 0.0
        %1745 = vmatprep.subr.mxu0 0.0
        %1746 = vmatpush1.msra.mxu0 0.0
        %1747 = vmatprep.subr.mxu0 0.0
        %1748 = vmatpush1.msra.mxu0 0.0
        %1749 = vmatprep.subr.mxu0 0.0
        %1750 = vmatpush1.msra.mxu0 0.0
        %1751 = vmatprep.subr.mxu0 0.0
        %1752 = vmatpush1.msra.mxu0 0.0
        %1753 = vmatprep.subr.mxu0 0.0
        %1754 = vmatpush1.msra.mxu0 0.0
        %1755 = vmatprep.subr.mxu0 0.0
        %1756 = vmatpush1.msra.mxu0 0.0
        %1757 = vmatprep.subr.mxu0 0.0
        %1758 = vmatpush1.msra.mxu0 0.0
        %1759 = vmatprep.subr.mxu0 0.0
        %1760 = vmatpush1.msra.mxu0 0.0
        %1761 = vmatprep.subr.mxu0 0.0
        %1762 = vmatpush1.msra.mxu0 0.0
        %1763 = vmatprep.subr.mxu0 0.0
        %1764 = vmatpush1.msra.mxu0 0.0
        %1765 = vmatprep.subr.mxu0 0.0
        %1766 = vmatpush1.msra.mxu0 0.0
        %1767 = vmatprep.subr.mxu0 0.0
        %1768 = vmatpush1.msra.mxu0 0.0
        %1769 = vmatprep.subr.mxu0 0.0
        %1770 = vmatpush1.msra.mxu0 0.0
        %1771 = vmatprep.subr.mxu0 0.0
        %1772 = vmatpush1.msra.mxu0 0.0
        %1773 = vmatprep.subr.mxu0 0.0
        %1774 = vmatpush1.msra.mxu0 0.0
        %1775 = vmatprep.mubr.f32.mxu0 0.0
        %1776 = vmatmul.mubr.f32.gmra.mrb[0].mxu0 %v1628
        %v1777 = vpop.f32.mrb[0].mxu0
        %v1778 = vadd.f32 0.0, %v1777
        %v1779 = vpop.f32.mrb[0].mxu0
        %1780 = vmatprep.mubr.f32.mxu0 0.0
        %1781 = vmatmul.mubr.f32.gmra.mrb[0].mxu0 %v1631
        %v1782 = vpop.f32.mrb[0].mxu0
        %v1783 = vadd.f32 0.0, %v1782
        %v1784 = vpop.f32.mrb[0].mxu0
        %1785 = vmatprep.mubr.f32.mxu0 0.0
        %1786 = vmatmul.mubr.f32.gmra.mrb[0].mxu0 %v1634
        %v1787 = vpop.f32.mrb[0].mxu0
        %v1788 = vadd.f32 0.0, %v1787
        %v1789 = vpop.f32.mrb[0].mxu0
        %1790 = vmatprep.mubr.f32.mxu0 0.0
        %1791 = vmatmul.mubr.f32.gmra.mrb[0].mxu0 %v1637
        %v1792 = vpop.f32.mrb[0].mxu0
        %v1793 = vadd.f32 0.0, %v1792
        %v1794 = vpop.f32.mrb[0].mxu0
        %1795 = vmatprep.mubr.f32.mxu0 0.0
        %1796 = vmatmul.mubr.f32.gmra.mrb[0].mxu0 %v1640
        %v1797 = vpop.f32.mrb[0].mxu0
        %v1798 = vadd.f32 0.0, %v1797
        %v1799 = vpop.f32.mrb[0].mxu0
        %1800 = vmatprep.mubr.f32.mxu0 0.0
        %1801 = vmatmul.mubr.f32.gmra.mrb[0].mxu0 %v1643
        %v1802 = vpop.f32.mrb[0].mxu0
        %v1803 = vadd.f32 0.0, %v1802
        %v1804 = vpop.f32.mrb[0].mxu0
        %1805 = vmatprep.mubr.f32.mxu0 0.0
        %1806 = vmatmul.mubr.f32.gmra.mrb[0].mxu0 %v1646
        %v1807 = vpop.f32.mrb[0].mxu0
        %v1808 = vadd.f32 0.0, %v1807
        %v1809 = vpop.f32.mrb[0].mxu0
        %1810 = vmatprep.mubr.f32.mxu0 0.0
        %1811 = vmatmul.mubr.f32.gmra.mrb[0].mxu0 %v1649
        %v1812 = vpop.f32.mrb[0].mxu0
        %v1813 = vadd.f32 0.0, %v1812
        %v1814 = vpop.f32.mrb[0].mxu0
        %1815 = vmatprep.mubr.f32.mxu0 0.0
        %1816 = vmatmul.mubr.f32.gmra.mrb[0].mxu0 %v1652
        %v1817 = vpop.f32.mrb[0].mxu0
        %v1818 = vadd.f32 0.0, %v1817
        %v1819 = vpop.f32.mrb[0].mxu0
        %1820 = vmatprep.mubr.f32.mxu0 0.0
        %1821 = vmatmul.mubr.f32.gmra.mrb[0].mxu0 %v1655
        %v1822 = vpop.f32.mrb[0].mxu0
        %v1823 = vadd.f32 0.0, %v1822
        %v1824 = vpop.f32.mrb[0].mxu0
        %1825 = vmatprep.mubr.f32.mxu0 0.0
        %1826 = vmatmul.mubr.f32.gmra.mrb[0].mxu0 %v1658
        %v1827 = vpop.f32.mrb[0].mxu0
        %v1828 = vadd.f32 0.0, %v1827
        %v1829 = vpop.f32.mrb[0].mxu0
        %1830 = vmatprep.mubr.f32.mxu0 0.0
        %1831 = vmatmul.mubr.f32.gmra.mrb[0].mxu0 %v1661
        %v1832 = vpop.f32.mrb[0].mxu0
        %v1833 = vadd.f32 0.0, %v1832
        %v1834 = vpop.f32.mrb[0].mxu0
        %1835 = vmatprep.mubr.f32.mxu0 0.0
        %1836 = vmatmul.mubr.f32.gmra.mrb[0].mxu0 %v1664
        %v1837 = vpop.f32.mrb[0].mxu0
        %v1838 = vadd.f32 0.0, %v1837
        %v1839 = vpop.f32.mrb[0].mxu0
        %1840 = vmatprep.mubr.f32.mxu0 0.0
        %1841 = vmatmul.mubr.f32.gmra.mrb[0].mxu0 %v1667
        %v1842 = vpop.f32.mrb[0].mxu0
        %v1843 = vadd.f32 0.0, %v1842
        %v1844 = vpop.f32.mrb[0].mxu0
        %1845 = vmatprep.mubr.f32.mxu0 0.0
        %1846 = vmatmul.mubr.f32.gmra.mrb[0].mxu0 %v1670
        %v1847 = vpop.f32.mrb[0].mxu0
        %v1848 = vadd.f32 0.0, %v1847
        %v1849 = vpop.f32.mrb[0].mxu0
        %1850 = vmatprep.mubr.f32.mxu0 0.0
        %1851 = vmatmul.mubr.f32.gmra.mrb[0].mxu0 %v1673
        %v1852 = vpop.f32.mrb[0].mxu0
        %v1853 = vadd.f32 0.0, %v1852
        %v1854 = vpop.f32.mrb[0].mxu0
        %1855 = vmatprep.mubr.f32.mxu0 0.0
        %1856 = vmatmul.mubr.f32.gmra.mrb[0].mxu0 %v1676
        %v1857 = vpop.f32.mrb[0].mxu0
        %v1858 = vadd.f32 0.0, %v1857
        %v1859 = vpop.f32.mrb[0].mxu0
        %1860 = vmatprep.mubr.f32.mxu0 0.0
        %1861 = vmatmul.mubr.f32.gmra.mrb[0].mxu0 %v1679
        %v1862 = vpop.f32.mrb[0].mxu0
        %v1863 = vadd.f32 0.0, %v1862
        %v1864 = vpop.f32.mrb[0].mxu0
        %1865 = vmatprep.mubr.f32.mxu0 0.0
        %1866 = vmatmul.mubr.f32.gmra.mrb[0].mxu0 %v1682
        %v1867 = vpop.f32.mrb[0].mxu0
        %v1868 = vadd.f32 0.0, %v1867
        %v1869 = vpop.f32.mrb[0].mxu0
        %1870 = vmatprep.mubr.f32.mxu0 0.0
        %1871 = vmatmul.mubr.f32.gmra.mrb[0].mxu0 %v1685
        %v1872 = vpop.f32.mrb[0].mxu0
        %v1873 = vadd.f32 0.0, %v1872
        %v1874 = vpop.f32.mrb[0].mxu0
        %1875 = vmatprep.mubr.f32.mxu0 0.0
        %1876 = vmatmul.mubr.f32.gmra.mrb[0].mxu0 %v1688
        %v1877 = vpop.f32.mrb[0].mxu0
        %v1878 = vadd.f32 0.0, %v1877
        %v1879 = vpop.f32.mrb[0].mxu0
        %1880 = vmatprep.mubr.f32.mxu0 0.0
        %1881 = vmatmul.mubr.f32.gmra.mrb[0].mxu0 %v1691
        %v1882 = vpop.f32.mrb[0].mxu0
        %v1883 = vadd.f32 0.0, %v1882
        %v1884 = vpop.f32.mrb[0].mxu0
        %1885 = vmatprep.mubr.f32.mxu0 0.0
        %1886 = vmatmul.mubr.f32.gmra.mrb[0].mxu0 %v1694
        %v1887 = vpop.f32.mrb[0].mxu0
        %v1888 = vadd.f32 0.0, %v1887
        %v1889 = vpop.f32.mrb[0].mxu0
        %1890 = vmatprep.mubr.f32.mxu0 0.0
        %1891 = vmatmul.mubr.f32.gmra.mrb[0].mxu0 %v1697
        %v1892 = vpop.f32.mrb[0].mxu0
        %v1893 = vadd.f32 0.0, %v1892
        %v1894 = vpop.f32.mrb[0].mxu0
        %1895 = vmatprep.mubr.f32.mxu0 0.0
        %1896 = vmatmul.mubr.f32.gmra.mrb[0].mxu0 %v1700
        %v1897 = vpop.f32.mrb[0].mxu0
        %v1898 = vadd.f32 0.0, %v1897
        %v1899 = vpop.f32.mrb[0].mxu0
        %1900 = vmatprep.mubr.f32.mxu0 0.0
        %1901 = vmatmul.mubr.f32.gmra.mrb[0].mxu0 %v1703
        %v1902 = vpop.f32.mrb[0].mxu0
        %v1903 = vadd.f32 0.0, %v1902
        %v1904 = vpop.f32.mrb[0].mxu0
        %1905 = vmatprep.mubr.f32.mxu0 0.0
        %1906 = vmatmul.mubr.f32.gmra.mrb[0].mxu0 %v1706
        %v1907 = vpop.f32.mrb[0].mxu0
        %v1908 = vadd.f32 0.0, %v1907
        %v1909 = vpop.f32.mrb[0].mxu0
        %1910 = vmatprep.mubr.f32.mxu0 0.0
        %1911 = vmatmul.mubr.f32.gmra.mrb[0].mxu0 %v1709
        %v1912 = vpop.f32.mrb[0].mxu0
        %v1913 = vadd.f32 0.0, %v1912
        %v1914 = vpop.f32.mrb[0].mxu0
        %1915 = vdwg.mxu0
        %v1916 = vadd.f32 %v1565, %v1778
        %v1917 = vadd.f32 %v1566, %v1783
        %v1918 = vadd.f32 %v1567, %v1788
        %v1919 = vadd.f32 %v1568, %v1793
        %v1920 = vadd.f32 %v1569, %v1798
        %v1921 = vadd.f32 %v1570, %v1803
        %v1922 = vadd.f32 %v1571, %v1808
        %v1923 = vadd.f32 %v1572, %v1813
        %v1924 = vadd.f32 %v1573, %v1818
        %v1925 = vadd.f32 %v1574, %v1823
        %v1926 = vadd.f32 %v1575, %v1828
        %v1927 = vadd.f32 %v1576, %v1833
        %v1928 = vadd.f32 %v1577, %v1838
        %v1929 = vadd.f32 %v1578, %v1843
        %v1930 = vadd.f32 %v1579, %v1848
        %v1931 = vadd.f32 %v1580, %v1853
        %v1932 = vadd.f32 %v1581, %v1858
        %v1933 = vadd.f32 %v1582, %v1863
        %v1934 = vadd.f32 %v1583, %v1868
        %v1935 = vadd.f32 %v1584, %v1873
        %v1936 = vadd.f32 %v1585, %v1878
        %v1937 = vadd.f32 %v1586, %v1883
        %v1938 = vadd.f32 %v1587, %v1888
        %v1939 = vadd.f32 %v1588, %v1893
        %v1940 = vadd.f32 %v1589, %v1898
        %v1941 = vadd.f32 %v1590, %v1903
        %v1942 = vadd.f32 %v1591, %v1908
        %v1943 = vadd.f32 %v1592, %v1913
        %s1944 = scalar_lea.vmem %s556, 32 [#allocation2]
        %v1945 = vld [vmem:[%s1944] sm:$0xff]
        %v1946 = vld [vmem:[%s1944 + $0x8] sm:$0xff]
        %v1947 = vld [vmem:[%s1944 + $0x10] sm:$0xff]
        %v1948 = vld [vmem:[%s1944 + $0x18] sm:$0xff]
        %v1949 = vld [vmem:[%s1944 + $0x20] sm:$0xff]
        %v1950 = vld [vmem:[%s1944 + $0x28] sm:$0xff]
        %v1951 = vld [vmem:[%s1944 + $0x30] sm:$0xff]
        %v1952 = vld [vmem:[%s1944 + $0x38] sm:$0xff]
        %v1953 = vld [vmem:[%s1944 + $0x40] sm:$0xff]
        %v1954 = vld [vmem:[%s1944 + $0x48] sm:$0xff]
        %v1955 = vld [vmem:[%s1944 + $0x50] sm:$0xff]
        %v1956 = vld [vmem:[%s1944 + $0x58] sm:$0xff]
        %v1957 = vld [vmem:[%s1944 + $0x60] sm:$0xff]
        %v1958 = vld [vmem:[%s1944 + $0x68] sm:$0xff]
        %v1959 = vld [vmem:[%s1944 + $0x70] sm:$0xff]
        %v1960 = vld [vmem:[%s1944 + $0x78] sm:$0xff]
        %v1961 = vld [vmem:[%s1944 + $0x80] sm:$0xff]
        %v1962 = vld [vmem:[%s1944 + $0x88] sm:$0xff]
        %v1963 = vld [vmem:[%s1944 + $0x90] sm:$0xff]
        %v1964 = vld [vmem:[%s1944 + $0x98] sm:$0xff]
        %v1965 = vld [vmem:[%s1944 + $0xa0] sm:$0xff]
        %v1966 = vld [vmem:[%s1944 + $0xa8] sm:$0xff]
        %v1967 = vld [vmem:[%s1944 + $0xb0] sm:$0xff]
        %v1968 = vld [vmem:[%s1944 + $0xb8] sm:$0xff]
        %v1969 = vld [vmem:[%s1944 + $0xc0] sm:$0xff]
        %v1970 = vld [vmem:[%s1944 + $0xc8] sm:$0xff]
        %v1971 = vld [vmem:[%s1944 + $0xd0] sm:$0xff]
        %v1972 = vld [vmem:[%s1944 + $0xd8] sm:$0xff]
        %s1973 = scalar_lea.vmem %s1, 128
        %v1974 = vld [vmem:[%s1973] sm:$0xff]
        %v1975 = vld [vmem:[%s1973 + $0x8] sm:$0xff]
        %v1976 = vld [vmem:[%s1973 + $0x10] sm:$0xff]
        %v1977 = vld [vmem:[%s1973 + $0x18] sm:$0xff]
        %v1979 = vsel %vm663, %v1945, 0
        %v1982 = vsel %vm663, %v1946, 0
        %v1985 = vsel %vm663, %v1947, 0
        %v1988 = vsel %vm663, %v1948, 0
        %v1991 = vsel %vm663, %v1949, 0
        %v1994 = vsel %vm663, %v1950, 0
        %v1997 = vsel %vm663, %v1951, 0
        %v2000 = vsel %vm663, %v1952, 0
        %v2003 = vsel %vm663, %v1953, 0
        %v2006 = vsel %vm663, %v1954, 0
        %v2009 = vsel %vm663, %v1955, 0
        %v2012 = vsel %vm663, %v1956, 0
        %v2015 = vsel %vm663, %v1957, 0
        %v2018 = vsel %vm663, %v1958, 0
        %v2021 = vsel %vm663, %v1959, 0
        %v2024 = vsel %vm663, %v1960, 0
        %v2027 = vsel %vm663, %v1961, 0
        %v2030 = vsel %vm663, %v1962, 0
        %v2033 = vsel %vm663, %v1963, 0
        %v2036 = vsel %vm663, %v1964, 0
        %v2039 = vsel %vm663, %v1965, 0
        %v2042 = vsel %vm663, %v1966, 0
        %v2045 = vsel %vm663, %v1967, 0
        %v2048 = vsel %vm663, %v1968, 0
        %v2051 = vsel %vm663, %v1969, 0
        %v2054 = vsel %vm663, %v1970, 0
        %v2057 = vsel %vm663, %v1971, 0
        %v2060 = vsel %vm663, %v1972, 0
        %2062 = vmatprep.subr.mxu0 0.0
        %2063 = vmatpush1.msra.mxu0 %v1974
        %2064 = vmatprep.subr.mxu0 0.0
        %2065 = vmatpush1.msra.mxu0 %v1975
        %2066 = vmatprep.subr.mxu0 0.0
        %2067 = vmatpush1.msra.mxu0 %v1976
        %2068 = vmatprep.subr.mxu0 0.0
        %2069 = vmatpush1.msra.mxu0 %v1977
        %2070 = vmatprep.subr.mxu0 0.0
        %2071 = vmatpush1.msra.mxu0 0.0
        %2072 = vmatprep.subr.mxu0 0.0
        %2073 = vmatpush1.msra.mxu0 0.0
        %2074 = vmatprep.subr.mxu0 0.0
        %2075 = vmatpush1.msra.mxu0 0.0
        %2076 = vmatprep.subr.mxu0 0.0
        %2077 = vmatpush1.msra.mxu0 0.0
        %2078 = vmatprep.subr.mxu0 0.0
        %2079 = vmatpush1.msra.mxu0 0.0
        %2080 = vmatprep.subr.mxu0 0.0
        %2081 = vmatpush1.msra.mxu0 0.0
        %2082 = vmatprep.subr.mxu0 0.0
        %2083 = vmatpush1.msra.mxu0 0.0
        %2084 = vmatprep.subr.mxu0 0.0
        %2085 = vmatpush1.msra.mxu0 0.0
        %2086 = vmatprep.subr.mxu0 0.0
        %2087 = vmatpush1.msra.mxu0 0.0
        %2088 = vmatprep.subr.mxu0 0.0
        %2089 = vmatpush1.msra.mxu0 0.0
        %2090 = vmatprep.subr.mxu0 0.0
        %2091 = vmatpush1.msra.mxu0 0.0
        %2092 = vmatprep.subr.mxu0 0.0
        %2093 = vmatpush1.msra.mxu0 0.0
        %2094 = vmatprep.subr.mxu0 0.0
        %2095 = vmatpush1.msra.mxu0 0.0
        %2096 = vmatprep.subr.mxu0 0.0
        %2097 = vmatpush1.msra.mxu0 0.0
        %2098 = vmatprep.subr.mxu0 0.0
        %2099 = vmatpush1.msra.mxu0 0.0
        %2100 = vmatprep.subr.mxu0 0.0
        %2101 = vmatpush1.msra.mxu0 0.0
        %2102 = vmatprep.subr.mxu0 0.0
        %2103 = vmatpush1.msra.mxu0 0.0
        %2104 = vmatprep.subr.mxu0 0.0
        %2105 = vmatpush1.msra.mxu0 0.0
        %2106 = vmatprep.subr.mxu0 0.0
        %2107 = vmatpush1.msra.mxu0 0.0
        %2108 = vmatprep.subr.mxu0 0.0
        %2109 = vmatpush1.msra.mxu0 0.0
        %2110 = vmatprep.subr.mxu0 0.0
        %2111 = vmatpush1.msra.mxu0 0.0
        %2112 = vmatprep.subr.mxu0 0.0
        %2113 = vmatpush1.msra.mxu0 0.0
        %2114 = vmatprep.subr.mxu0 0.0
        %2115 = vmatpush1.msra.mxu0 0.0
        %2116 = vmatprep.subr.mxu0 0.0
        %2117 = vmatpush1.msra.mxu0 0.0
        %2118 = vmatprep.subr.mxu0 0.0
        %2119 = vmatpush1.msra.mxu0 0.0
        %2120 = vmatprep.subr.mxu0 0.0
        %2121 = vmatpush1.msra.mxu0 0.0
        %2122 = vmatprep.subr.mxu0 0.0
        %2123 = vmatpush1.msra.mxu0 0.0
        %2124 = vmatprep.subr.mxu0 0.0
        %2125 = vmatpush1.msra.mxu0 0.0
        %2126 = vmatprep.mubr.f32.mxu0 0.0
        %2127 = vmatmul.mubr.f32.gmra.mrb[0].mxu0 %v1979
        %v2128 = vpop.f32.mrb[0].mxu0
        %v2129 = vadd.f32 0.0, %v2128
        %v2130 = vpop.f32.mrb[0].mxu0
        %2131 = vmatprep.mubr.f32.mxu0 0.0
        %2132 = vmatmul.mubr.f32.gmra.mrb[0].mxu0 %v1982
        %v2133 = vpop.f32.mrb[0].mxu0
        %v2134 = vadd.f32 0.0, %v2133
        %v2135 = vpop.f32.mrb[0].mxu0
        %2136 = vmatprep.mubr.f32.mxu0 0.0
        %2137 = vmatmul.mubr.f32.gmra.mrb[0].mxu0 %v1985
        %v2138 = vpop.f32.mrb[0].mxu0
        %v2139 = vadd.f32 0.0, %v2138
        %v2140 = vpop.f32.mrb[0].mxu0
        %2141 = vmatprep.mubr.f32.mxu0 0.0
        %2142 = vmatmul.mubr.f32.gmra.mrb[0].mxu0 %v1988
        %v2143 = vpop.f32.mrb[0].mxu0
        %v2144 = vadd.f32 0.0, %v2143
        %v2145 = vpop.f32.mrb[0].mxu0
        %2146 = vmatprep.mubr.f32.mxu0 0.0
        %2147 = vmatmul.mubr.f32.gmra.mrb[0].mxu0 %v1991
        %v2148 = vpop.f32.mrb[0].mxu0
        %v2149 = vadd.f32 0.0, %v2148
        %v2150 = vpop.f32.mrb[0].mxu0
        %2151 = vmatprep.mubr.f32.mxu0 0.0
        %2152 = vmatmul.mubr.f32.gmra.mrb[0].mxu0 %v1994
        %v2153 = vpop.f32.mrb[0].mxu0
        %v2154 = vadd.f32 0.0, %v2153
        %v2155 = vpop.f32.mrb[0].mxu0
        %2156 = vmatprep.mubr.f32.mxu0 0.0
        %2157 = vmatmul.mubr.f32.gmra.mrb[0].mxu0 %v1997
        %v2158 = vpop.f32.mrb[0].mxu0
        %v2159 = vadd.f32 0.0, %v2158
        %v2160 = vpop.f32.mrb[0].mxu0
        %2161 = vmatprep.mubr.f32.mxu0 0.0
        %2162 = vmatmul.mubr.f32.gmra.mrb[0].mxu0 %v2000
        %v2163 = vpop.f32.mrb[0].mxu0
        %v2164 = vadd.f32 0.0, %v2163
        %v2165 = vpop.f32.mrb[0].mxu0
        %2166 = vmatprep.mubr.f32.mxu0 0.0
        %2167 = vmatmul.mubr.f32.gmra.mrb[0].mxu0 %v2003
        %v2168 = vpop.f32.mrb[0].mxu0
        %v2169 = vadd.f32 0.0, %v2168
        %v2170 = vpop.f32.mrb[0].mxu0
        %2171 = vmatprep.mubr.f32.mxu0 0.0
        %2172 = vmatmul.mubr.f32.gmra.mrb[0].mxu0 %v2006
        %v2173 = vpop.f32.mrb[0].mxu0
        %v2174 = vadd.f32 0.0, %v2173
        %v2175 = vpop.f32.mrb[0].mxu0
        %2176 = vmatprep.mubr.f32.mxu0 0.0
        %2177 = vmatmul.mubr.f32.gmra.mrb[0].mxu0 %v2009
        %v2178 = vpop.f32.mrb[0].mxu0
        %v2179 = vadd.f32 0.0, %v2178
        %v2180 = vpop.f32.mrb[0].mxu0
        %2181 = vmatprep.mubr.f32.mxu0 0.0
        %2182 = vmatmul.mubr.f32.gmra.mrb[0].mxu0 %v2012
        %v2183 = vpop.f32.mrb[0].mxu0
        %v2184 = vadd.f32 0.0, %v2183
        %v2185 = vpop.f32.mrb[0].mxu0
        %2186 = vmatprep.mubr.f32.mxu0 0.0
        %2187 = vmatmul.mubr.f32.gmra.mrb[0].mxu0 %v2015
        %v2188 = vpop.f32.mrb[0].mxu0
        %v2189 = vadd.f32 0.0, %v2188
        %v2190 = vpop.f32.mrb[0].mxu0
        %2191 = vmatprep.mubr.f32.mxu0 0.0
        %2192 = vmatmul.mubr.f32.gmra.mrb[0].mxu0 %v2018
        %v2193 = vpop.f32.mrb[0].mxu0
        %v2194 = vadd.f32 0.0, %v2193
        %v2195 = vpop.f32.mrb[0].mxu0
        %2196 = vmatprep.mubr.f32.mxu0 0.0
        %2197 = vmatmul.mubr.f32.gmra.mrb[0].mxu0 %v2021
        %v2198 = vpop.f32.mrb[0].mxu0
        %v2199 = vadd.f32 0.0, %v2198
        %v2200 = vpop.f32.mrb[0].mxu0
        %2201 = vmatprep.mubr.f32.mxu0 0.0
        %2202 = vmatmul.mubr.f32.gmra.mrb[0].mxu0 %v2024
        %v2203 = vpop.f32.mrb[0].mxu0
        %v2204 = vadd.f32 0.0, %v2203
        %v2205 = vpop.f32.mrb[0].mxu0
        %2206 = vmatprep.mubr.f32.mxu0 0.0
        %2207 = vmatmul.mubr.f32.gmra.mrb[0].mxu0 %v2027
        %v2208 = vpop.f32.mrb[0].mxu0
        %v2209 = vadd.f32 0.0, %v2208
        %v2210 = vpop.f32.mrb[0].mxu0
        %2211 = vmatprep.mubr.f32.mxu0 0.0
        %2212 = vmatmul.mubr.f32.gmra.mrb[0].mxu0 %v2030
        %v2213 = vpop.f32.mrb[0].mxu0
        %v2214 = vadd.f32 0.0, %v2213
        %v2215 = vpop.f32.mrb[0].mxu0
        %2216 = vmatprep.mubr.f32.mxu0 0.0
        %2217 = vmatmul.mubr.f32.gmra.mrb[0].mxu0 %v2033
        %v2218 = vpop.f32.mrb[0].mxu0
        %v2219 = vadd.f32 0.0, %v2218
        %v2220 = vpop.f32.mrb[0].mxu0
        %2221 = vmatprep.mubr.f32.mxu0 0.0
        %2222 = vmatmul.mubr.f32.gmra.mrb[0].mxu0 %v2036
        %v2223 = vpop.f32.mrb[0].mxu0
        %v2224 = vadd.f32 0.0, %v2223
        %v2225 = vpop.f32.mrb[0].mxu0
        %2226 = vmatprep.mubr.f32.mxu0 0.0
        %2227 = vmatmul.mubr.f32.gmra.mrb[0].mxu0 %v2039
        %v2228 = vpop.f32.mrb[0].mxu0
        %v2229 = vadd.f32 0.0, %v2228
        %v2230 = vpop.f32.mrb[0].mxu0
        %2231 = vmatprep.mubr.f32.mxu0 0.0
        %2232 = vmatmul.mubr.f32.gmra.mrb[0].mxu0 %v2042
        %v2233 = vpop.f32.mrb[0].mxu0
        %v2234 = vadd.f32 0.0, %v2233
        %v2235 = vpop.f32.mrb[0].mxu0
        %2236 = vmatprep.mubr.f32.mxu0 0.0
        %2237 = vmatmul.mubr.f32.gmra.mrb[0].mxu0 %v2045
        %v2238 = vpop.f32.mrb[0].mxu0
        %v2239 = vadd.f32 0.0, %v2238
        %v2240 = vpop.f32.mrb[0].mxu0
        %2241 = vmatprep.mubr.f32.mxu0 0.0
        %2242 = vmatmul.mubr.f32.gmra.mrb[0].mxu0 %v2048
        %v2243 = vpop.f32.mrb[0].mxu0
        %v2244 = vadd.f32 0.0, %v2243
        %v2245 = vpop.f32.mrb[0].mxu0
        %2246 = vmatprep.mubr.f32.mxu0 0.0
        %2247 = vmatmul.mubr.f32.gmra.mrb[0].mxu0 %v2051
        %v2248 = vpop.f32.mrb[0].mxu0
        %v2249 = vadd.f32 0.0, %v2248
        %v2250 = vpop.f32.mrb[0].mxu0
        %2251 = vmatprep.mubr.f32.mxu0 0.0
        %2252 = vmatmul.mubr.f32.gmra.mrb[0].mxu0 %v2054
        %v2253 = vpop.f32.mrb[0].mxu0
        %v2254 = vadd.f32 0.0, %v2253
        %v2255 = vpop.f32.mrb[0].mxu0
        %2256 = vmatprep.mubr.f32.mxu0 0.0
        %2257 = vmatmul.mubr.f32.gmra.mrb[0].mxu0 %v2057
        %v2258 = vpop.f32.mrb[0].mxu0
        %v2259 = vadd.f32 0.0, %v2258
        %v2260 = vpop.f32.mrb[0].mxu0
        %2261 = vmatprep.mubr.f32.mxu0 0.0
        %2262 = vmatmul.mubr.f32.gmra.mrb[0].mxu0 %v2060
        %v2263 = vpop.f32.mrb[0].mxu0
        %v2264 = vadd.f32 0.0, %v2263
        %v2265 = vpop.f32.mrb[0].mxu0
        %2266 = vdwg.mxu0
        %v2267 = vadd.f32 %v1916, %v2129
        %v2268 = vadd.f32 %v1917, %v2134
        %v2269 = vadd.f32 %v1918, %v2139
        %v2270 = vadd.f32 %v1919, %v2144
        %v2271 = vadd.f32 %v1920, %v2149
        %v2272 = vadd.f32 %v1921, %v2154
        %v2273 = vadd.f32 %v1922, %v2159
        %v2274 = vadd.f32 %v1923, %v2164
        %v2275 = vadd.f32 %v1924, %v2169
        %v2276 = vadd.f32 %v1925, %v2174
        %v2277 = vadd.f32 %v1926, %v2179
        %v2278 = vadd.f32 %v1927, %v2184
        %v2279 = vadd.f32 %v1928, %v2189
        %v2280 = vadd.f32 %v1929, %v2194
        %v2281 = vadd.f32 %v1930, %v2199
        %v2282 = vadd.f32 %v1931, %v2204
        %v2283 = vadd.f32 %v1932, %v2209
        %v2284 = vadd.f32 %v1933, %v2214
        %v2285 = vadd.f32 %v1934, %v2219
        %v2286 = vadd.f32 %v1935, %v2224
        %v2287 = vadd.f32 %v1936, %v2229
        %v2288 = vadd.f32 %v1937, %v2234
        %v2289 = vadd.f32 %v1938, %v2239
        %v2290 = vadd.f32 %v1939, %v2244
        %v2291 = vadd.f32 %v1940, %v2249
        %v2292 = vadd.f32 %v1941, %v2254
        %v2293 = vadd.f32 %v1942, %v2259
        %v2294 = vadd.f32 %v1943, %v2264
        %v2295 = vld [vmem:[%s2] sm:$0xff]
        %v2296 = vld [vmem:[%s2 + $0x8] sm:$0xff]
        %v2297 = vld [vmem:[%s2 + $0x10] sm:$0xff]
        %v2298 = vld [vmem:[%s2 + $0x18] sm:$0xff]
        %s2299 = scalar_lea.vmem %s2, 32
        %v2300 = vld [vmem:[%s2299] sm:$0xff]
        %v2301 = vld [vmem:[%s2299 + $0x8] sm:$0xff]
        %v2302 = vld [vmem:[%s2299 + $0x10] sm:$0xff]
        %v2303 = vld [vmem:[%s2299 + $0x18] sm:$0xff]
        %2304 = vmatprep.subr.mxu0 0.0
        %2305 = vmatpush1.msra.mxu0 %v2300
        %2306 = vmatprep.subr.mxu0 0.0
        %2307 = vmatpush1.msra.mxu0 %v2301
        %2308 = vmatprep.subr.mxu0 0.0
        %2309 = vmatpush1.msra.mxu0 %v2302
        %2310 = vmatprep.subr.mxu0 0.0
        %2311 = vmatpush1.msra.mxu0 %v2303
        %2312 = vmatprep.subr.mxu0 0.0
        %2313 = vmatpush1.msra.mxu0 0.0
        %2314 = vmatprep.subr.mxu0 0.0
        %2315 = vmatpush1.msra.mxu0 0.0
        %2316 = vmatprep.subr.mxu0 0.0
        %2317 = vmatpush1.msra.mxu0 0.0
        %2318 = vmatprep.subr.mxu0 0.0
        %2319 = vmatpush1.msra.mxu0 0.0
        %2320 = vmatprep.subr.mxu0 0.0
        %2321 = vmatpush1.msra.mxu0 0.0
        %2322 = vmatprep.subr.mxu0 0.0
        %2323 = vmatpush1.msra.mxu0 0.0
        %2324 = vmatprep.subr.mxu0 0.0
        %2325 = vmatpush1.msra.mxu0 0.0
        %2326 = vmatprep.subr.mxu0 0.0
        %2327 = vmatpush1.msra.mxu0 0.0
        %2328 = vmatprep.subr.mxu0 0.0
        %2329 = vmatpush1.msra.mxu0 0.0
        %2330 = vmatprep.subr.mxu0 0.0
        %2331 = vmatpush1.msra.mxu0 0.0
        %2332 = vmatprep.subr.mxu0 0.0
        %2333 = vmatpush1.msra.mxu0 0.0
        %2334 = vmatprep.subr.mxu0 0.0
        %2335 = vmatpush1.msra.mxu0 0.0
        %2336 = vmatprep.subr.mxu0 0.0
        %2337 = vmatpush1.msra.mxu0 0.0
        %2338 = vmatprep.subr.mxu0 0.0
        %2339 = vmatpush1.msra.mxu0 0.0
        %2340 = vmatprep.subr.mxu0 0.0
        %2341 = vmatpush1.msra.mxu0 0.0
        %2342 = vmatprep.subr.mxu0 0.0
        %2343 = vmatpush1.msra.mxu0 0.0
        %2344 = vmatprep.subr.mxu0 0.0
        %2345 = vmatpush1.msra.mxu0 0.0
        %2346 = vmatprep.subr.mxu0 0.0
        %2347 = vmatpush1.msra.mxu0 0.0
        %2348 = vmatprep.subr.mxu0 0.0
        %2349 = vmatpush1.msra.mxu0 0.0
        %2350 = vmatprep.subr.mxu0 0.0
        %2351 = vmatpush1.msra.mxu0 0.0
        %2352 = vmatprep.subr.mxu0 0.0
        %2353 = vmatpush1.msra.mxu0 0.0
        %2354 = vmatprep.subr.mxu0 0.0
        %2355 = vmatpush1.msra.mxu0 0.0
        %2356 = vmatprep.subr.mxu0 0.0
        %2357 = vmatpush1.msra.mxu0 0.0
        %2358 = vmatprep.subr.mxu0 0.0
        %2359 = vmatpush1.msra.mxu0 0.0
        %2360 = vmatprep.subr.mxu0 0.0
        %2361 = vmatpush1.msra.mxu0 0.0
        %2362 = vmatprep.subr.mxu0 0.0
        %2363 = vmatpush1.msra.mxu0 0.0
        %2364 = vmatprep.subr.mxu0 0.0
        %2365 = vmatpush1.msra.mxu0 0.0
        %2366 = vmatprep.subr.mxu0 0.0
        %2367 = vmatpush1.msra.mxu0 0.0
        %2368 = vmatprep.mubr.f32.mxu0 0.0
        %2369 = vmatmul.mubr.f32.gmra.mrb[0].mxu0 %v665
        %v2370 = vpop.f32.mrb[0].mxu0
        %v2371 = vadd.f32 0.0, %v2370
        %v2372 = vpop.f32.mrb[0].mxu0
        %2373 = vmatprep.mubr.f32.mxu0 0.0
        %2374 = vmatmul.mubr.f32.gmra.mrb[0].mxu0 %v668
        %v2375 = vpop.f32.mrb[0].mxu0
        %v2376 = vadd.f32 0.0, %v2375
        %v2377 = vpop.f32.mrb[0].mxu0
        %2378 = vmatprep.mubr.f32.mxu0 0.0
        %2379 = vmatmul.mubr.f32.gmra.mrb[0].mxu0 %v671
        %v2380 = vpop.f32.mrb[0].mxu0
        %v2381 = vadd.f32 0.0, %v2380
        %v2382 = vpop.f32.mrb[0].mxu0
        %2383 = vmatprep.mubr.f32.mxu0 0.0
        %2384 = vmatmul.mubr.f32.gmra.mrb[0].mxu0 %v674
        %v2385 = vpop.f32.mrb[0].mxu0
        %v2386 = vadd.f32 0.0, %v2385
        %v2387 = vpop.f32.mrb[0].mxu0
        %2388 = vmatprep.mubr.f32.mxu0 0.0
        %2389 = vmatmul.mubr.f32.gmra.mrb[0].mxu0 %v677
        %v2390 = vpop.f32.mrb[0].mxu0
        %v2391 = vadd.f32 0.0, %v2390
        %v2392 = vpop.f32.mrb[0].mxu0
        %2393 = vmatprep.mubr.f32.mxu0 0.0
        %2394 = vmatmul.mubr.f32.gmra.mrb[0].mxu0 %v680
        %v2395 = vpop.f32.mrb[0].mxu0
        %v2396 = vadd.f32 0.0, %v2395
        %v2397 = vpop.f32.mrb[0].mxu0
        %2398 = vmatprep.mubr.f32.mxu0 0.0
        %2399 = vmatmul.mubr.f32.gmra.mrb[0].mxu0 %v683
        %v2400 = vpop.f32.mrb[0].mxu0
        %v2401 = vadd.f32 0.0, %v2400
        %v2402 = vpop.f32.mrb[0].mxu0
        %2403 = vmatprep.mubr.f32.mxu0 0.0
        %2404 = vmatmul.mubr.f32.gmra.mrb[0].mxu0 %v686
        %v2405 = vpop.f32.mrb[0].mxu0
        %v2406 = vadd.f32 0.0, %v2405
        %v2407 = vpop.f32.mrb[0].mxu0
        %2408 = vmatprep.mubr.f32.mxu0 0.0
        %2409 = vmatmul.mubr.f32.gmra.mrb[0].mxu0 %v689
        %v2410 = vpop.f32.mrb[0].mxu0
        %v2411 = vadd.f32 0.0, %v2410
        %v2412 = vpop.f32.mrb[0].mxu0
        %2413 = vmatprep.mubr.f32.mxu0 0.0
        %2414 = vmatmul.mubr.f32.gmra.mrb[0].mxu0 %v692
        %v2415 = vpop.f32.mrb[0].mxu0
        %v2416 = vadd.f32 0.0, %v2415
        %v2417 = vpop.f32.mrb[0].mxu0
        %2418 = vmatprep.mubr.f32.mxu0 0.0
        %2419 = vmatmul.mubr.f32.gmra.mrb[0].mxu0 %v695
        %v2420 = vpop.f32.mrb[0].mxu0
        %v2421 = vadd.f32 0.0, %v2420
        %v2422 = vpop.f32.mrb[0].mxu0
        %2423 = vmatprep.mubr.f32.mxu0 0.0
        %2424 = vmatmul.mubr.f32.gmra.mrb[0].mxu0 %v698
        %v2425 = vpop.f32.mrb[0].mxu0
        %v2426 = vadd.f32 0.0, %v2425
        %v2427 = vpop.f32.mrb[0].mxu0
        %2428 = vmatprep.mubr.f32.mxu0 0.0
        %2429 = vmatmul.mubr.f32.gmra.mrb[0].mxu0 %v701
        %v2430 = vpop.f32.mrb[0].mxu0
        %v2431 = vadd.f32 0.0, %v2430
        %v2432 = vpop.f32.mrb[0].mxu0
        %2433 = vmatprep.mubr.f32.mxu0 0.0
        %2434 = vmatmul.mubr.f32.gmra.mrb[0].mxu0 %v704
        %v2435 = vpop.f32.mrb[0].mxu0
        %v2436 = vadd.f32 0.0, %v2435
        %v2437 = vpop.f32.mrb[0].mxu0
        %2438 = vmatprep.mubr.f32.mxu0 0.0
        %2439 = vmatmul.mubr.f32.gmra.mrb[0].mxu0 %v707
        %v2440 = vpop.f32.mrb[0].mxu0
        %v2441 = vadd.f32 0.0, %v2440
        %v2442 = vpop.f32.mrb[0].mxu0
        %2443 = vmatprep.mubr.f32.mxu0 0.0
        %2444 = vmatmul.mubr.f32.gmra.mrb[0].mxu0 %v710
        %v2445 = vpop.f32.mrb[0].mxu0
        %v2446 = vadd.f32 0.0, %v2445
        %v2447 = vpop.f32.mrb[0].mxu0
        %2448 = vmatprep.mubr.f32.mxu0 0.0
        %2449 = vmatmul.mubr.f32.gmra.mrb[0].mxu0 %v713
        %v2450 = vpop.f32.mrb[0].mxu0
        %v2451 = vadd.f32 0.0, %v2450
        %v2452 = vpop.f32.mrb[0].mxu0
        %2453 = vmatprep.mubr.f32.mxu0 0.0
        %2454 = vmatmul.mubr.f32.gmra.mrb[0].mxu0 %v716
        %v2455 = vpop.f32.mrb[0].mxu0
        %v2456 = vadd.f32 0.0, %v2455
        %v2457 = vpop.f32.mrb[0].mxu0
        %2458 = vmatprep.mubr.f32.mxu0 0.0
        %2459 = vmatmul.mubr.f32.gmra.mrb[0].mxu0 %v719
        %v2460 = vpop.f32.mrb[0].mxu0
        %v2461 = vadd.f32 0.0, %v2460
        %v2462 = vpop.f32.mrb[0].mxu0
        %2463 = vmatprep.mubr.f32.mxu0 0.0
        %2464 = vmatmul.mubr.f32.gmra.mrb[0].mxu0 %v722
        %v2465 = vpop.f32.mrb[0].mxu0
        %v2466 = vadd.f32 0.0, %v2465
        %v2467 = vpop.f32.mrb[0].mxu0
        %2468 = vmatprep.mubr.f32.mxu0 0.0
        %2469 = vmatmul.mubr.f32.gmra.mrb[0].mxu0 %v725
        %v2470 = vpop.f32.mrb[0].mxu0
        %v2471 = vadd.f32 0.0, %v2470
        %v2472 = vpop.f32.mrb[0].mxu0
        %2473 = vmatprep.mubr.f32.mxu0 0.0
        %2474 = vmatmul.mubr.f32.gmra.mrb[0].mxu0 %v728
        %v2475 = vpop.f32.mrb[0].mxu0
        %v2476 = vadd.f32 0.0, %v2475
        %v2477 = vpop.f32.mrb[0].mxu0
        %2478 = vmatprep.mubr.f32.mxu0 0.0
        %2479 = vmatmul.mubr.f32.gmra.mrb[0].mxu0 %v731
        %v2480 = vpop.f32.mrb[0].mxu0
        %v2481 = vadd.f32 0.0, %v2480
        %v2482 = vpop.f32.mrb[0].mxu0
        %2483 = vmatprep.mubr.f32.mxu0 0.0
        %2484 = vmatmul.mubr.f32.gmra.mrb[0].mxu0 %v734
        %v2485 = vpop.f32.mrb[0].mxu0
        %v2486 = vadd.f32 0.0, %v2485
        %v2487 = vpop.f32.mrb[0].mxu0
        %2488 = vmatprep.mubr.f32.mxu0 0.0
        %2489 = vmatmul.mubr.f32.gmra.mrb[0].mxu0 %v737
        %v2490 = vpop.f32.mrb[0].mxu0
        %v2491 = vadd.f32 0.0, %v2490
        %v2492 = vpop.f32.mrb[0].mxu0
        %2493 = vmatprep.mubr.f32.mxu0 0.0
        %2494 = vmatmul.mubr.f32.gmra.mrb[0].mxu0 %v740
        %v2495 = vpop.f32.mrb[0].mxu0
        %v2496 = vadd.f32 0.0, %v2495
        %v2497 = vpop.f32.mrb[0].mxu0
        %2498 = vmatprep.mubr.f32.mxu0 0.0
        %2499 = vmatmul.mubr.f32.gmra.mrb[0].mxu0 %v743
        %v2500 = vpop.f32.mrb[0].mxu0
        %v2501 = vadd.f32 0.0, %v2500
        %v2502 = vpop.f32.mrb[0].mxu0
        %2503 = vmatprep.mubr.f32.mxu0 0.0
        %2504 = vmatmul.mubr.f32.gmra.mrb[0].mxu0 %v746
        %v2505 = vpop.f32.mrb[0].mxu0
        %v2506 = vadd.f32 0.0, %v2505
        %v2507 = vpop.f32.mrb[0].mxu0
        %2508 = vdwg.mxu0
        %2509 = vmatprep.subr.mxu0 0.0
        %2510 = vmatpush1.msra.mxu0 %v2295
        %2511 = vmatprep.subr.mxu0 0.0
        %2512 = vmatpush1.msra.mxu0 %v2296
        %2513 = vmatprep.subr.mxu0 0.0
        %2514 = vmatpush1.msra.mxu0 %v2297
        %2515 = vmatprep.subr.mxu0 0.0
        %2516 = vmatpush1.msra.mxu0 %v2298
        %2517 = vmatprep.subr.mxu0 0.0
        %2518 = vmatpush1.msra.mxu0 0.0
        %2519 = vmatprep.subr.mxu0 0.0
        %2520 = vmatpush1.msra.mxu0 0.0
        %2521 = vmatprep.subr.mxu0 0.0
        %2522 = vmatpush1.msra.mxu0 0.0
        %2523 = vmatprep.subr.mxu0 0.0
        %2524 = vmatpush1.msra.mxu0 0.0
        %2525 = vmatprep.subr.mxu0 0.0
        %2526 = vmatpush1.msra.mxu0 0.0
        %2527 = vmatprep.subr.mxu0 0.0
        %2528 = vmatpush1.msra.mxu0 0.0
        %2529 = vmatprep.subr.mxu0 0.0
        %2530 = vmatpush1.msra.mxu0 0.0
        %2531 = vmatprep.subr.mxu0 0.0
        %2532 = vmatpush1.msra.mxu0 0.0
        %2533 = vmatprep.subr.mxu0 0.0
        %2534 = vmatpush1.msra.mxu0 0.0
        %2535 = vmatprep.subr.mxu0 0.0
        %2536 = vmatpush1.msra.mxu0 0.0
        %2537 = vmatprep.subr.mxu0 0.0
        %2538 = vmatpush1.msra.mxu0 0.0
        %2539 = vmatprep.subr.mxu0 0.0
        %2540 = vmatpush1.msra.mxu0 0.0
        %2541 = vmatprep.subr.mxu0 0.0
        %2542 = vmatpush1.msra.mxu0 0.0
        %2543 = vmatprep.subr.mxu0 0.0
        %2544 = vmatpush1.msra.mxu0 0.0
        %2545 = vmatprep.subr.mxu0 0.0
        %2546 = vmatpush1.msra.mxu0 0.0
        %2547 = vmatprep.subr.mxu0 0.0
        %2548 = vmatpush1.msra.mxu0 0.0
        %2549 = vmatprep.subr.mxu0 0.0
        %2550 = vmatpush1.msra.mxu0 0.0
        %2551 = vmatprep.subr.mxu0 0.0
        %2552 = vmatpush1.msra.mxu0 0.0
        %2553 = vmatprep.subr.mxu0 0.0
        %2554 = vmatpush1.msra.mxu0 0.0
        %2555 = vmatprep.subr.mxu0 0.0
        %2556 = vmatpush1.msra.mxu0 0.0
        %2557 = vmatprep.subr.mxu0 0.0
        %2558 = vmatpush1.msra.mxu0 0.0
        %2559 = vmatprep.subr.mxu0 0.0
        %2560 = vmatpush1.msra.mxu0 0.0
        %2561 = vmatprep.subr.mxu0 0.0
        %2562 = vmatpush1.msra.mxu0 0.0
        %2563 = vmatprep.subr.mxu0 0.0
        %2564 = vmatpush1.msra.mxu0 0.0
        %2565 = vmatprep.subr.mxu0 0.0
        %2566 = vmatpush1.msra.mxu0 0.0
        %2567 = vmatprep.subr.mxu0 0.0
        %2568 = vmatpush1.msra.mxu0 0.0
        %2569 = vmatprep.subr.mxu0 0.0
        %2570 = vmatpush1.msra.mxu0 0.0
        %2571 = vmatprep.subr.mxu0 0.0
        %2572 = vmatpush1.msra.mxu0 0.0
        %2573 = vmatprep.mubr.f32.mxu0 0.0
        %2574 = vmatmul.mubr.f32.gmra.mrb[0].mxu0 %v954
        %v2575 = vpop.f32.mrb[0].mxu0
        %v2576 = vadd.f32 %v2371, %v2575
        %v2577 = vpop.f32.mrb[0].mxu0
        %2578 = vmatprep.mubr.f32.mxu0 0.0
        %2579 = vmatmul.mubr.f32.gmra.mrb[0].mxu0 %v957
        %v2580 = vpop.f32.mrb[0].mxu0
        %v2581 = vadd.f32 %v2376, %v2580
        %v2582 = vpop.f32.mrb[0].mxu0
        %2583 = vmatprep.mubr.f32.mxu0 0.0
        %2584 = vmatmul.mubr.f32.gmra.mrb[0].mxu0 %v960
        %v2585 = vpop.f32.mrb[0].mxu0
        %v2586 = vadd.f32 %v2381, %v2585
        %v2587 = vpop.f32.mrb[0].mxu0
        %2588 = vmatprep.mubr.f32.mxu0 0.0
        %2589 = vmatmul.mubr.f32.gmra.mrb[0].mxu0 %v963
        %v2590 = vpop.f32.mrb[0].mxu0
        %v2591 = vadd.f32 %v2386, %v2590
        %v2592 = vpop.f32.mrb[0].mxu0
        %2593 = vmatprep.mubr.f32.mxu0 0.0
        %2594 = vmatmul.mubr.f32.gmra.mrb[0].mxu0 %v966
        %v2595 = vpop.f32.mrb[0].mxu0
        %v2596 = vadd.f32 %v2391, %v2595
        %v2597 = vpop.f32.mrb[0].mxu0
        %2598 = vmatprep.mubr.f32.mxu0 0.0
        %2599 = vmatmul.mubr.f32.gmra.mrb[0].mxu0 %v969
        %v2600 = vpop.f32.mrb[0].mxu0
        %v2601 = vadd.f32 %v2396, %v2600
        %v2602 = vpop.f32.mrb[0].mxu0
        %2603 = vmatprep.mubr.f32.mxu0 0.0
        %2604 = vmatmul.mubr.f32.gmra.mrb[0].mxu0 %v972
        %v2605 = vpop.f32.mrb[0].mxu0
        %v2606 = vadd.f32 %v2401, %v2605
        %v2607 = vpop.f32.mrb[0].mxu0
        %2608 = vmatprep.mubr.f32.mxu0 0.0
        %2609 = vmatmul.mubr.f32.gmra.mrb[0].mxu0 %v975
        %v2610 = vpop.f32.mrb[0].mxu0
        %v2611 = vadd.f32 %v2406, %v2610
        %v2612 = vpop.f32.mrb[0].mxu0
        %2613 = vmatprep.mubr.f32.mxu0 0.0
        %2614 = vmatmul.mubr.f32.gmra.mrb[0].mxu0 %v978
        %v2615 = vpop.f32.mrb[0].mxu0
        %v2616 = vadd.f32 %v2411, %v2615
        %v2617 = vpop.f32.mrb[0].mxu0
        %2618 = vmatprep.mubr.f32.mxu0 0.0
        %2619 = vmatmul.mubr.f32.gmra.mrb[0].mxu0 %v981
        %v2620 = vpop.f32.mrb[0].mxu0
        %v2621 = vadd.f32 %v2416, %v2620
        %v2622 = vpop.f32.mrb[0].mxu0
        %2623 = vmatprep.mubr.f32.mxu0 0.0
        %2624 = vmatmul.mubr.f32.gmra.mrb[0].mxu0 %v984
        %v2625 = vpop.f32.mrb[0].mxu0
        %v2626 = vadd.f32 %v2421, %v2625
        %v2627 = vpop.f32.mrb[0].mxu0
        %2628 = vmatprep.mubr.f32.mxu0 0.0
        %2629 = vmatmul.mubr.f32.gmra.mrb[0].mxu0 %v987
        %v2630 = vpop.f32.mrb[0].mxu0
        %v2631 = vadd.f32 %v2426, %v2630
        %v2632 = vpop.f32.mrb[0].mxu0
        %2633 = vmatprep.mubr.f32.mxu0 0.0
        %2634 = vmatmul.mubr.f32.gmra.mrb[0].mxu0 %v990
        %v2635 = vpop.f32.mrb[0].mxu0
        %v2636 = vadd.f32 %v2431, %v2635
        %v2637 = vpop.f32.mrb[0].mxu0
        %2638 = vmatprep.mubr.f32.mxu0 0.0
        %2639 = vmatmul.mubr.f32.gmra.mrb[0].mxu0 %v993
        %v2640 = vpop.f32.mrb[0].mxu0
        %v2641 = vadd.f32 %v2436, %v2640
        %v2642 = vpop.f32.mrb[0].mxu0
        %2643 = vmatprep.mubr.f32.mxu0 0.0
        %2644 = vmatmul.mubr.f32.gmra.mrb[0].mxu0 %v996
        %v2645 = vpop.f32.mrb[0].mxu0
        %v2646 = vadd.f32 %v2441, %v2645
        %v2647 = vpop.f32.mrb[0].mxu0
        %2648 = vmatprep.mubr.f32.mxu0 0.0
        %2649 = vmatmul.mubr.f32.gmra.mrb[0].mxu0 %v999
        %v2650 = vpop.f32.mrb[0].mxu0
        %v2651 = vadd.f32 %v2446, %v2650
        %v2652 = vpop.f32.mrb[0].mxu0
        %2653 = vmatprep.mubr.f32.mxu0 0.0
        %2654 = vmatmul.mubr.f32.gmra.mrb[0].mxu0 %v1002
        %v2655 = vpop.f32.mrb[0].mxu0
        %v2656 = vadd.f32 %v2451, %v2655
        %v2657 = vpop.f32.mrb[0].mxu0
        %2658 = vmatprep.mubr.f32.mxu0 0.0
        %2659 = vmatmul.mubr.f32.gmra.mrb[0].mxu0 %v1005
        %v2660 = vpop.f32.mrb[0].mxu0
        %v2661 = vadd.f32 %v2456, %v2660
        %v2662 = vpop.f32.mrb[0].mxu0
        %2663 = vmatprep.mubr.f32.mxu0 0.0
        %2664 = vmatmul.mubr.f32.gmra.mrb[0].mxu0 %v1008
        %v2665 = vpop.f32.mrb[0].mxu0
        %v2666 = vadd.f32 %v2461, %v2665
        %v2667 = vpop.f32.mrb[0].mxu0
        %2668 = vmatprep.mubr.f32.mxu0 0.0
        %2669 = vmatmul.mubr.f32.gmra.mrb[0].mxu0 %v1011
        %v2670 = vpop.f32.mrb[0].mxu0
        %v2671 = vadd.f32 %v2466, %v2670
        %v2672 = vpop.f32.mrb[0].mxu0
        %2673 = vmatprep.mubr.f32.mxu0 0.0
        %2674 = vmatmul.mubr.f32.gmra.mrb[0].mxu0 %v1014
        %v2675 = vpop.f32.mrb[0].mxu0
        %v2676 = vadd.f32 %v2471, %v2675
        %v2677 = vpop.f32.mrb[0].mxu0
        %2678 = vmatprep.mubr.f32.mxu0 0.0
        %2679 = vmatmul.mubr.f32.gmra.mrb[0].mxu0 %v1017
        %v2680 = vpop.f32.mrb[0].mxu0
        %v2681 = vadd.f32 %v2476, %v2680
        %v2682 = vpop.f32.mrb[0].mxu0
        %2683 = vmatprep.mubr.f32.mxu0 0.0
        %2684 = vmatmul.mubr.f32.gmra.mrb[0].mxu0 %v1020
        %v2685 = vpop.f32.mrb[0].mxu0
        %v2686 = vadd.f32 %v2481, %v2685
        %v2687 = vpop.f32.mrb[0].mxu0
        %2688 = vmatprep.mubr.f32.mxu0 0.0
        %2689 = vmatmul.mubr.f32.gmra.mrb[0].mxu0 %v1023
        %v2690 = vpop.f32.mrb[0].mxu0
        %v2691 = vadd.f32 %v2486, %v2690
        %v2692 = vpop.f32.mrb[0].mxu0
        %2693 = vmatprep.mubr.f32.mxu0 0.0
        %2694 = vmatmul.mubr.f32.gmra.mrb[0].mxu0 %v1026
        %v2695 = vpop.f32.mrb[0].mxu0
        %v2696 = vadd.f32 %v2491, %v2695
        %v2697 = vpop.f32.mrb[0].mxu0
        %2698 = vmatprep.mubr.f32.mxu0 0.0
        %2699 = vmatmul.mubr.f32.gmra.mrb[0].mxu0 %v1029
        %v2700 = vpop.f32.mrb[0].mxu0
        %v2701 = vadd.f32 %v2496, %v2700
        %v2702 = vpop.f32.mrb[0].mxu0
        %2703 = vmatprep.mubr.f32.mxu0 0.0
        %2704 = vmatmul.mubr.f32.gmra.mrb[0].mxu0 %v1032
        %v2705 = vpop.f32.mrb[0].mxu0
        %v2706 = vadd.f32 %v2501, %v2705
        %v2707 = vpop.f32.mrb[0].mxu0
        %2708 = vmatprep.mubr.f32.mxu0 0.0
        %2709 = vmatmul.mubr.f32.gmra.mrb[0].mxu0 %v1035
        %v2710 = vpop.f32.mrb[0].mxu0
        %v2711 = vadd.f32 %v2506, %v2710
        %v2712 = vpop.f32.mrb[0].mxu0
        %2713 = vdwg.mxu0
        %s2714 = scalar_lea.vmem %s2, 64
        %v2715 = vld [vmem:[%s2714] sm:$0xff]
        %v2716 = vld [vmem:[%s2714 + $0x8] sm:$0xff]
        %v2717 = vld [vmem:[%s2714 + $0x10] sm:$0xff]
        %v2718 = vld [vmem:[%s2714 + $0x18] sm:$0xff]
        %2719 = vmatprep.subr.mxu0 0.0
        %2720 = vmatpush1.msra.mxu0 %v2715
        %2721 = vmatprep.subr.mxu0 0.0
        %2722 = vmatpush1.msra.mxu0 %v2716
        %2723 = vmatprep.subr.mxu0 0.0
        %2724 = vmatpush1.msra.mxu0 %v2717
        %2725 = vmatprep.subr.mxu0 0.0
        %2726 = vmatpush1.msra.mxu0 %v2718
        %2727 = vmatprep.subr.mxu0 0.0
        %2728 = vmatpush1.msra.mxu0 0.0
        %2729 = vmatprep.subr.mxu0 0.0
        %2730 = vmatpush1.msra.mxu0 0.0
        %2731 = vmatprep.subr.mxu0 0.0
        %2732 = vmatpush1.msra.mxu0 0.0
        %2733 = vmatprep.subr.mxu0 0.0
        %2734 = vmatpush1.msra.mxu0 0.0
        %2735 = vmatprep.subr.mxu0 0.0
        %2736 = vmatpush1.msra.mxu0 0.0
        %2737 = vmatprep.subr.mxu0 0.0
        %2738 = vmatpush1.msra.mxu0 0.0
        %2739 = vmatprep.subr.mxu0 0.0
        %2740 = vmatpush1.msra.mxu0 0.0
        %2741 = vmatprep.subr.mxu0 0.0
        %2742 = vmatpush1.msra.mxu0 0.0
        %2743 = vmatprep.subr.mxu0 0.0
        %2744 = vmatpush1.msra.mxu0 0.0
        %2745 = vmatprep.subr.mxu0 0.0
        %2746 = vmatpush1.msra.mxu0 0.0
        %2747 = vmatprep.subr.mxu0 0.0
        %2748 = vmatpush1.msra.mxu0 0.0
        %2749 = vmatprep.subr.mxu0 0.0
        %2750 = vmatpush1.msra.mxu0 0.0
        %2751 = vmatprep.subr.mxu0 0.0
        %2752 = vmatpush1.msra.mxu0 0.0
        %2753 = vmatprep.subr.mxu0 0.0
        %2754 = vmatpush1.msra.mxu0 0.0
        %2755 = vmatprep.subr.mxu0 0.0
        %2756 = vmatpush1.msra.mxu0 0.0
        %2757 = vmatprep.subr.mxu0 0.0
        %2758 = vmatpush1.msra.mxu0 0.0
        %2759 = vmatprep.subr.mxu0 0.0
        %2760 = vmatpush1.msra.mxu0 0.0
        %2761 = vmatprep.subr.mxu0 0.0
        %2762 = vmatpush1.msra.mxu0 0.0
        %2763 = vmatprep.subr.mxu0 0.0
        %2764 = vmatpush1.msra.mxu0 0.0
        %2765 = vmatprep.subr.mxu0 0.0
        %2766 = vmatpush1.msra.mxu0 0.0
        %2767 = vmatprep.subr.mxu0 0.0
        %2768 = vmatpush1.msra.mxu0 0.0
        %2769 = vmatprep.subr.mxu0 0.0
        %2770 = vmatpush1.msra.mxu0 0.0
        %2771 = vmatprep.subr.mxu0 0.0
        %2772 = vmatpush1.msra.mxu0 0.0
        %2773 = vmatprep.subr.mxu0 0.0
        %2774 = vmatpush1.msra.mxu0 0.0
        %2775 = vmatprep.subr.mxu0 0.0
        %2776 = vmatpush1.msra.mxu0 0.0
        %2777 = vmatprep.subr.mxu0 0.0
        %2778 = vmatpush1.msra.mxu0 0.0
        %2779 = vmatprep.subr.mxu0 0.0
        %2780 = vmatpush1.msra.mxu0 0.0
        %2781 = vmatprep.subr.mxu0 0.0
        %2782 = vmatpush1.msra.mxu0 0.0
        %2783 = vmatprep.mubr.f32.mxu0 0.0
        %2784 = vmatmul.mubr.f32.gmra.mrb[0].mxu0 %v1277
        %v2785 = vpop.f32.mrb[0].mxu0
        %v2786 = vadd.f32 0.0, %v2785
        %v2787 = vpop.f32.mrb[0].mxu0
        %2788 = vmatprep.mubr.f32.mxu0 0.0
        %2789 = vmatmul.mubr.f32.gmra.mrb[0].mxu0 %v1280
        %v2790 = vpop.f32.mrb[0].mxu0
        %v2791 = vadd.f32 0.0, %v2790
        %v2792 = vpop.f32.mrb[0].mxu0
        %2793 = vmatprep.mubr.f32.mxu0 0.0
        %2794 = vmatmul.mubr.f32.gmra.mrb[0].mxu0 %v1283
        %v2795 = vpop.f32.mrb[0].mxu0
        %v2796 = vadd.f32 0.0, %v2795
        %v2797 = vpop.f32.mrb[0].mxu0
        %2798 = vmatprep.mubr.f32.mxu0 0.0
        %2799 = vmatmul.mubr.f32.gmra.mrb[0].mxu0 %v1286
        %v2800 = vpop.f32.mrb[0].mxu0
        %v2801 = vadd.f32 0.0, %v2800
        %v2802 = vpop.f32.mrb[0].mxu0
        %2803 = vmatprep.mubr.f32.mxu0 0.0
        %2804 = vmatmul.mubr.f32.gmra.mrb[0].mxu0 %v1289
        %v2805 = vpop.f32.mrb[0].mxu0
        %v2806 = vadd.f32 0.0, %v2805
        %v2807 = vpop.f32.mrb[0].mxu0
        %2808 = vmatprep.mubr.f32.mxu0 0.0
        %2809 = vmatmul.mubr.f32.gmra.mrb[0].mxu0 %v1292
        %v2810 = vpop.f32.mrb[0].mxu0
        %v2811 = vadd.f32 0.0, %v2810
        %v2812 = vpop.f32.mrb[0].mxu0
        %2813 = vmatprep.mubr.f32.mxu0 0.0
        %2814 = vmatmul.mubr.f32.gmra.mrb[0].mxu0 %v1295
        %v2815 = vpop.f32.mrb[0].mxu0
        %v2816 = vadd.f32 0.0, %v2815
        %v2817 = vpop.f32.mrb[0].mxu0
        %2818 = vmatprep.mubr.f32.mxu0 0.0
        %2819 = vmatmul.mubr.f32.gmra.mrb[0].mxu0 %v1298
        %v2820 = vpop.f32.mrb[0].mxu0
        %v2821 = vadd.f32 0.0, %v2820
        %v2822 = vpop.f32.mrb[0].mxu0
        %2823 = vmatprep.mubr.f32.mxu0 0.0
        %2824 = vmatmul.mubr.f32.gmra.mrb[0].mxu0 %v1301
        %v2825 = vpop.f32.mrb[0].mxu0
        %v2826 = vadd.f32 0.0, %v2825
        %v2827 = vpop.f32.mrb[0].mxu0
        %2828 = vmatprep.mubr.f32.mxu0 0.0
        %2829 = vmatmul.mubr.f32.gmra.mrb[0].mxu0 %v1304
        %v2830 = vpop.f32.mrb[0].mxu0
        %v2831 = vadd.f32 0.0, %v2830
        %v2832 = vpop.f32.mrb[0].mxu0
        %2833 = vmatprep.mubr.f32.mxu0 0.0
        %2834 = vmatmul.mubr.f32.gmra.mrb[0].mxu0 %v1307
        %v2835 = vpop.f32.mrb[0].mxu0
        %v2836 = vadd.f32 0.0, %v2835
        %v2837 = vpop.f32.mrb[0].mxu0
        %2838 = vmatprep.mubr.f32.mxu0 0.0
        %2839 = vmatmul.mubr.f32.gmra.mrb[0].mxu0 %v1310
        %v2840 = vpop.f32.mrb[0].mxu0
        %v2841 = vadd.f32 0.0, %v2840
        %v2842 = vpop.f32.mrb[0].mxu0
        %2843 = vmatprep.mubr.f32.mxu0 0.0
        %2844 = vmatmul.mubr.f32.gmra.mrb[0].mxu0 %v1313
        %v2845 = vpop.f32.mrb[0].mxu0
        %v2846 = vadd.f32 0.0, %v2845
        %v2847 = vpop.f32.mrb[0].mxu0
        %2848 = vmatprep.mubr.f32.mxu0 0.0
        %2849 = vmatmul.mubr.f32.gmra.mrb[0].mxu0 %v1316
        %v2850 = vpop.f32.mrb[0].mxu0
        %v2851 = vadd.f32 0.0, %v2850
        %v2852 = vpop.f32.mrb[0].mxu0
        %2853 = vmatprep.mubr.f32.mxu0 0.0
        %2854 = vmatmul.mubr.f32.gmra.mrb[0].mxu0 %v1319
        %v2855 = vpop.f32.mrb[0].mxu0
        %v2856 = vadd.f32 0.0, %v2855
        %v2857 = vpop.f32.mrb[0].mxu0
        %2858 = vmatprep.mubr.f32.mxu0 0.0
        %2859 = vmatmul.mubr.f32.gmra.mrb[0].mxu0 %v1322
        %v2860 = vpop.f32.mrb[0].mxu0
        %v2861 = vadd.f32 0.0, %v2860
        %v2862 = vpop.f32.mrb[0].mxu0
        %2863 = vmatprep.mubr.f32.mxu0 0.0
        %2864 = vmatmul.mubr.f32.gmra.mrb[0].mxu0 %v1325
        %v2865 = vpop.f32.mrb[0].mxu0
        %v2866 = vadd.f32 0.0, %v2865
        %v2867 = vpop.f32.mrb[0].mxu0
        %2868 = vmatprep.mubr.f32.mxu0 0.0
        %2869 = vmatmul.mubr.f32.gmra.mrb[0].mxu0 %v1328
        %v2870 = vpop.f32.mrb[0].mxu0
        %v2871 = vadd.f32 0.0, %v2870
        %v2872 = vpop.f32.mrb[0].mxu0
        %2873 = vmatprep.mubr.f32.mxu0 0.0
        %2874 = vmatmul.mubr.f32.gmra.mrb[0].mxu0 %v1331
        %v2875 = vpop.f32.mrb[0].mxu0
        %v2876 = vadd.f32 0.0, %v2875
        %v2877 = vpop.f32.mrb[0].mxu0
        %2878 = vmatprep.mubr.f32.mxu0 0.0
        %2879 = vmatmul.mubr.f32.gmra.mrb[0].mxu0 %v1334
        %v2880 = vpop.f32.mrb[0].mxu0
        %v2881 = vadd.f32 0.0, %v2880
        %v2882 = vpop.f32.mrb[0].mxu0
        %2883 = vmatprep.mubr.f32.mxu0 0.0
        %2884 = vmatmul.mubr.f32.gmra.mrb[0].mxu0 %v1337
        %v2885 = vpop.f32.mrb[0].mxu0
        %v2886 = vadd.f32 0.0, %v2885
        %v2887 = vpop.f32.mrb[0].mxu0
        %2888 = vmatprep.mubr.f32.mxu0 0.0
        %2889 = vmatmul.mubr.f32.gmra.mrb[0].mxu0 %v1340
        %v2890 = vpop.f32.mrb[0].mxu0
        %v2891 = vadd.f32 0.0, %v2890
        %v2892 = vpop.f32.mrb[0].mxu0
        %2893 = vmatprep.mubr.f32.mxu0 0.0
        %2894 = vmatmul.mubr.f32.gmra.mrb[0].mxu0 %v1343
        %v2895 = vpop.f32.mrb[0].mxu0
        %v2896 = vadd.f32 0.0, %v2895
        %v2897 = vpop.f32.mrb[0].mxu0
        %2898 = vmatprep.mubr.f32.mxu0 0.0
        %2899 = vmatmul.mubr.f32.gmra.mrb[0].mxu0 %v1346
        %v2900 = vpop.f32.mrb[0].mxu0
        %v2901 = vadd.f32 0.0, %v2900
        %v2902 = vpop.f32.mrb[0].mxu0
        %2903 = vmatprep.mubr.f32.mxu0 0.0
        %2904 = vmatmul.mubr.f32.gmra.mrb[0].mxu0 %v1349
        %v2905 = vpop.f32.mrb[0].mxu0
        %v2906 = vadd.f32 0.0, %v2905
        %v2907 = vpop.f32.mrb[0].mxu0
        %2908 = vmatprep.mubr.f32.mxu0 0.0
        %2909 = vmatmul.mubr.f32.gmra.mrb[0].mxu0 %v1352
        %v2910 = vpop.f32.mrb[0].mxu0
        %v2911 = vadd.f32 0.0, %v2910
        %v2912 = vpop.f32.mrb[0].mxu0
        %2913 = vmatprep.mubr.f32.mxu0 0.0
        %2914 = vmatmul.mubr.f32.gmra.mrb[0].mxu0 %v1355
        %v2915 = vpop.f32.mrb[0].mxu0
        %v2916 = vadd.f32 0.0, %v2915
        %v2917 = vpop.f32.mrb[0].mxu0
        %2918 = vmatprep.mubr.f32.mxu0 0.0
        %2919 = vmatmul.mubr.f32.gmra.mrb[0].mxu0 %v1358
        %v2920 = vpop.f32.mrb[0].mxu0
        %v2921 = vadd.f32 0.0, %v2920
        %v2922 = vpop.f32.mrb[0].mxu0
        %2923 = vdwg.mxu0
        %v2924 = vadd.f32 %v2576, %v2786
        %v2925 = vadd.f32 %v2581, %v2791
        %v2926 = vadd.f32 %v2586, %v2796
        %v2927 = vadd.f32 %v2591, %v2801
        %v2928 = vadd.f32 %v2596, %v2806
        %v2929 = vadd.f32 %v2601, %v2811
        %v2930 = vadd.f32 %v2606, %v2816
        %v2931 = vadd.f32 %v2611, %v2821
        %v2932 = vadd.f32 %v2616, %v2826
        %v2933 = vadd.f32 %v2621, %v2831
        %v2934 = vadd.f32 %v2626, %v2836
        %v2935 = vadd.f32 %v2631, %v2841
        %v2936 = vadd.f32 %v2636, %v2846
        %v2937 = vadd.f32 %v2641, %v2851
        %v2938 = vadd.f32 %v2646, %v2856
        %v2939 = vadd.f32 %v2651, %v2861
        %v2940 = vadd.f32 %v2656, %v2866
        %v2941 = vadd.f32 %v2661, %v2871
        %v2942 = vadd.f32 %v2666, %v2876
        %v2943 = vadd.f32 %v2671, %v2881
        %v2944 = vadd.f32 %v2676, %v2886
        %v2945 = vadd.f32 %v2681, %v2891
        %v2946 = vadd.f32 %v2686, %v2896
        %v2947 = vadd.f32 %v2691, %v2901
        %v2948 = vadd.f32 %v2696, %v2906
        %v2949 = vadd.f32 %v2701, %v2911
        %v2950 = vadd.f32 %v2706, %v2916
        %v2951 = vadd.f32 %v2711, %v2921
        %s2952 = scalar_lea.vmem %s2, 96
        %v2953 = vld [vmem:[%s2952] sm:$0xff]
        %v2954 = vld [vmem:[%s2952 + $0x8] sm:$0xff]
        %v2955 = vld [vmem:[%s2952 + $0x10] sm:$0xff]
        %v2956 = vld [vmem:[%s2952 + $0x18] sm:$0xff]
        %2957 = vmatprep.subr.mxu0 0.0
        %2958 = vmatpush1.msra.mxu0 %v2953
        %2959 = vmatprep.subr.mxu0 0.0
        %2960 = vmatpush1.msra.mxu0 %v2954
        %2961 = vmatprep.subr.mxu0 0.0
        %2962 = vmatpush1.msra.mxu0 %v2955
        %2963 = vmatprep.subr.mxu0 0.0
        %2964 = vmatpush1.msra.mxu0 %v2956
        %2965 = vmatprep.subr.mxu0 0.0
        %2966 = vmatpush1.msra.mxu0 0.0
        %2967 = vmatprep.subr.mxu0 0.0
        %2968 = vmatpush1.msra.mxu0 0.0
        %2969 = vmatprep.subr.mxu0 0.0
        %2970 = vmatpush1.msra.mxu0 0.0
        %2971 = vmatprep.subr.mxu0 0.0
        %2972 = vmatpush1.msra.mxu0 0.0
        %2973 = vmatprep.subr.mxu0 0.0
        %2974 = vmatpush1.msra.mxu0 0.0
        %2975 = vmatprep.subr.mxu0 0.0
        %2976 = vmatpush1.msra.mxu0 0.0
        %2977 = vmatprep.subr.mxu0 0.0
        %2978 = vmatpush1.msra.mxu0 0.0
        %2979 = vmatprep.subr.mxu0 0.0
        %2980 = vmatpush1.msra.mxu0 0.0
        %2981 = vmatprep.subr.mxu0 0.0
        %2982 = vmatpush1.msra.mxu0 0.0
        %2983 = vmatprep.subr.mxu0 0.0
        %2984 = vmatpush1.msra.mxu0 0.0
        %2985 = vmatprep.subr.mxu0 0.0
        %2986 = vmatpush1.msra.mxu0 0.0
        %2987 = vmatprep.subr.mxu0 0.0
        %2988 = vmatpush1.msra.mxu0 0.0
        %2989 = vmatprep.subr.mxu0 0.0
        %2990 = vmatpush1.msra.mxu0 0.0
        %2991 = vmatprep.subr.mxu0 0.0
        %2992 = vmatpush1.msra.mxu0 0.0
        %2993 = vmatprep.subr.mxu0 0.0
        %2994 = vmatpush1.msra.mxu0 0.0
        %2995 = vmatprep.subr.mxu0 0.0
        %2996 = vmatpush1.msra.mxu0 0.0
        %2997 = vmatprep.subr.mxu0 0.0
        %2998 = vmatpush1.msra.mxu0 0.0
        %2999 = vmatprep.subr.mxu0 0.0
        %3000 = vmatpush1.msra.mxu0 0.0
        %3001 = vmatprep.subr.mxu0 0.0
        %3002 = vmatpush1.msra.mxu0 0.0
        %3003 = vmatprep.subr.mxu0 0.0
        %3004 = vmatpush1.msra.mxu0 0.0
        %3005 = vmatprep.subr.mxu0 0.0
        %3006 = vmatpush1.msra.mxu0 0.0
        %3007 = vmatprep.subr.mxu0 0.0
        %3008 = vmatpush1.msra.mxu0 0.0
        %3009 = vmatprep.subr.mxu0 0.0
        %3010 = vmatpush1.msra.mxu0 0.0
        %3011 = vmatprep.subr.mxu0 0.0
        %3012 = vmatpush1.msra.mxu0 0.0
        %3013 = vmatprep.subr.mxu0 0.0
        %3014 = vmatpush1.msra.mxu0 0.0
        %3015 = vmatprep.subr.mxu0 0.0
        %3016 = vmatpush1.msra.mxu0 0.0
        %3017 = vmatprep.subr.mxu0 0.0
        %3018 = vmatpush1.msra.mxu0 0.0
        %3019 = vmatprep.subr.mxu0 0.0
        %3020 = vmatpush1.msra.mxu0 0.0
        %3021 = vmatprep.mubr.f32.mxu0 0.0
        %3022 = vmatmul.mubr.f32.gmra.mrb[0].mxu0 %v1628
        %v3023 = vpop.f32.mrb[0].mxu0
        %v3024 = vadd.f32 0.0, %v3023
        %v3025 = vpop.f32.mrb[0].mxu0
        %3026 = vmatprep.mubr.f32.mxu0 0.0
        %3027 = vmatmul.mubr.f32.gmra.mrb[0].mxu0 %v1631
        %v3028 = vpop.f32.mrb[0].mxu0
        %v3029 = vadd.f32 0.0, %v3028
        %v3030 = vpop.f32.mrb[0].mxu0
        %3031 = vmatprep.mubr.f32.mxu0 0.0
        %3032 = vmatmul.mubr.f32.gmra.mrb[0].mxu0 %v1634
        %v3033 = vpop.f32.mrb[0].mxu0
        %v3034 = vadd.f32 0.0, %v3033
        %v3035 = vpop.f32.mrb[0].mxu0
        %3036 = vmatprep.mubr.f32.mxu0 0.0
        %3037 = vmatmul.mubr.f32.gmra.mrb[0].mxu0 %v1637
        %v3038 = vpop.f32.mrb[0].mxu0
        %v3039 = vadd.f32 0.0, %v3038
        %v3040 = vpop.f32.mrb[0].mxu0
        %3041 = vmatprep.mubr.f32.mxu0 0.0
        %3042 = vmatmul.mubr.f32.gmra.mrb[0].mxu0 %v1640
        %v3043 = vpop.f32.mrb[0].mxu0
        %v3044 = vadd.f32 0.0, %v3043
        %v3045 = vpop.f32.mrb[0].mxu0
        %3046 = vmatprep.mubr.f32.mxu0 0.0
        %3047 = vmatmul.mubr.f32.gmra.mrb[0].mxu0 %v1643
        %v3048 = vpop.f32.mrb[0].mxu0
        %v3049 = vadd.f32 0.0, %v3048
        %v3050 = vpop.f32.mrb[0].mxu0
        %3051 = vmatprep.mubr.f32.mxu0 0.0
        %3052 = vmatmul.mubr.f32.gmra.mrb[0].mxu0 %v1646
        %v3053 = vpop.f32.mrb[0].mxu0
        %v3054 = vadd.f32 0.0, %v3053
        %v3055 = vpop.f32.mrb[0].mxu0
        %3056 = vmatprep.mubr.f32.mxu0 0.0
        %3057 = vmatmul.mubr.f32.gmra.mrb[0].mxu0 %v1649
        %v3058 = vpop.f32.mrb[0].mxu0
        %v3059 = vadd.f32 0.0, %v3058
        %v3060 = vpop.f32.mrb[0].mxu0
        %3061 = vmatprep.mubr.f32.mxu0 0.0
        %3062 = vmatmul.mubr.f32.gmra.mrb[0].mxu0 %v1652
        %v3063 = vpop.f32.mrb[0].mxu0
        %v3064 = vadd.f32 0.0, %v3063
        %v3065 = vpop.f32.mrb[0].mxu0
        %3066 = vmatprep.mubr.f32.mxu0 0.0
        %3067 = vmatmul.mubr.f32.gmra.mrb[0].mxu0 %v1655
        %v3068 = vpop.f32.mrb[0].mxu0
        %v3069 = vadd.f32 0.0, %v3068
        %v3070 = vpop.f32.mrb[0].mxu0
        %3071 = vmatprep.mubr.f32.mxu0 0.0
        %3072 = vmatmul.mubr.f32.gmra.mrb[0].mxu0 %v1658
        %v3073 = vpop.f32.mrb[0].mxu0
        %v3074 = vadd.f32 0.0, %v3073
        %v3075 = vpop.f32.mrb[0].mxu0
        %3076 = vmatprep.mubr.f32.mxu0 0.0
        %3077 = vmatmul.mubr.f32.gmra.mrb[0].mxu0 %v1661
        %v3078 = vpop.f32.mrb[0].mxu0
        %v3079 = vadd.f32 0.0, %v3078
        %v3080 = vpop.f32.mrb[0].mxu0
        %3081 = vmatprep.mubr.f32.mxu0 0.0
        %3082 = vmatmul.mubr.f32.gmra.mrb[0].mxu0 %v1664
        %v3083 = vpop.f32.mrb[0].mxu0
        %v3084 = vadd.f32 0.0, %v3083
        %v3085 = vpop.f32.mrb[0].mxu0
        %3086 = vmatprep.mubr.f32.mxu0 0.0
        %3087 = vmatmul.mubr.f32.gmra.mrb[0].mxu0 %v1667
        %v3088 = vpop.f32.mrb[0].mxu0
        %v3089 = vadd.f32 0.0, %v3088
        %v3090 = vpop.f32.mrb[0].mxu0
        %3091 = vmatprep.mubr.f32.mxu0 0.0
        %3092 = vmatmul.mubr.f32.gmra.mrb[0].mxu0 %v1670
        %v3093 = vpop.f32.mrb[0].mxu0
        %v3094 = vadd.f32 0.0, %v3093
        %v3095 = vpop.f32.mrb[0].mxu0
        %3096 = vmatprep.mubr.f32.mxu0 0.0
        %3097 = vmatmul.mubr.f32.gmra.mrb[0].mxu0 %v1673
        %v3098 = vpop.f32.mrb[0].mxu0
        %v3099 = vadd.f32 0.0, %v3098
        %v3100 = vpop.f32.mrb[0].mxu0
        %3101 = vmatprep.mubr.f32.mxu0 0.0
        %3102 = vmatmul.mubr.f32.gmra.mrb[0].mxu0 %v1676
        %v3103 = vpop.f32.mrb[0].mxu0
        %v3104 = vadd.f32 0.0, %v3103
        %v3105 = vpop.f32.mrb[0].mxu0
        %3106 = vmatprep.mubr.f32.mxu0 0.0
        %3107 = vmatmul.mubr.f32.gmra.mrb[0].mxu0 %v1679
        %v3108 = vpop.f32.mrb[0].mxu0
        %v3109 = vadd.f32 0.0, %v3108
        %v3110 = vpop.f32.mrb[0].mxu0
        %3111 = vmatprep.mubr.f32.mxu0 0.0
        %3112 = vmatmul.mubr.f32.gmra.mrb[0].mxu0 %v1682
        %v3113 = vpop.f32.mrb[0].mxu0
        %v3114 = vadd.f32 0.0, %v3113
        %v3115 = vpop.f32.mrb[0].mxu0
        %3116 = vmatprep.mubr.f32.mxu0 0.0
        %3117 = vmatmul.mubr.f32.gmra.mrb[0].mxu0 %v1685
        %v3118 = vpop.f32.mrb[0].mxu0
        %v3119 = vadd.f32 0.0, %v3118
        %v3120 = vpop.f32.mrb[0].mxu0
        %3121 = vmatprep.mubr.f32.mxu0 0.0
        %3122 = vmatmul.mubr.f32.gmra.mrb[0].mxu0 %v1688
        %v3123 = vpop.f32.mrb[0].mxu0
        %v3124 = vadd.f32 0.0, %v3123
        %v3125 = vpop.f32.mrb[0].mxu0
        %3126 = vmatprep.mubr.f32.mxu0 0.0
        %3127 = vmatmul.mubr.f32.gmra.mrb[0].mxu0 %v1691
        %v3128 = vpop.f32.mrb[0].mxu0
        %v3129 = vadd.f32 0.0, %v3128
        %v3130 = vpop.f32.mrb[0].mxu0
        %3131 = vmatprep.mubr.f32.mxu0 0.0
        %3132 = vmatmul.mubr.f32.gmra.mrb[0].mxu0 %v1694
        %v3133 = vpop.f32.mrb[0].mxu0
        %v3134 = vadd.f32 0.0, %v3133
        %v3135 = vpop.f32.mrb[0].mxu0
        %3136 = vmatprep.mubr.f32.mxu0 0.0
        %3137 = vmatmul.mubr.f32.gmra.mrb[0].mxu0 %v1697
        %v3138 = vpop.f32.mrb[0].mxu0
        %v3139 = vadd.f32 0.0, %v3138
        %v3140 = vpop.f32.mrb[0].mxu0
        %3141 = vmatprep.mubr.f32.mxu0 0.0
        %3142 = vmatmul.mubr.f32.gmra.mrb[0].mxu0 %v1700
        %v3143 = vpop.f32.mrb[0].mxu0
        %v3144 = vadd.f32 0.0, %v3143
        %v3145 = vpop.f32.mrb[0].mxu0
        %3146 = vmatprep.mubr.f32.mxu0 0.0
        %3147 = vmatmul.mubr.f32.gmra.mrb[0].mxu0 %v1703
        %v3148 = vpop.f32.mrb[0].mxu0
        %v3149 = vadd.f32 0.0, %v3148
        %v3150 = vpop.f32.mrb[0].mxu0
        %3151 = vmatprep.mubr.f32.mxu0 0.0
        %3152 = vmatmul.mubr.f32.gmra.mrb[0].mxu0 %v1706
        %v3153 = vpop.f32.mrb[0].mxu0
        %v3154 = vadd.f32 0.0, %v3153
        %v3155 = vpop.f32.mrb[0].mxu0
        %3156 = vmatprep.mubr.f32.mxu0 0.0
        %3157 = vmatmul.mubr.f32.gmra.mrb[0].mxu0 %v1709
        %v3158 = vpop.f32.mrb[0].mxu0
        %v3159 = vadd.f32 0.0, %v3158
        %v3160 = vpop.f32.mrb[0].mxu0
        %3161 = vdwg.mxu0
        %v3162 = vadd.f32 %v2924, %v3024
        %v3163 = vadd.f32 %v2925, %v3029
        %v3164 = vadd.f32 %v2926, %v3034
        %v3165 = vadd.f32 %v2927, %v3039
        %v3166 = vadd.f32 %v2928, %v3044
        %v3167 = vadd.f32 %v2929, %v3049
        %v3168 = vadd.f32 %v2930, %v3054
        %v3169 = vadd.f32 %v2931, %v3059
        %v3170 = vadd.f32 %v2932, %v3064
        %v3171 = vadd.f32 %v2933, %v3069
        %v3172 = vadd.f32 %v2934, %v3074
        %v3173 = vadd.f32 %v2935, %v3079
        %v3174 = vadd.f32 %v2936, %v3084
        %v3175 = vadd.f32 %v2937, %v3089
        %v3176 = vadd.f32 %v2938, %v3094
        %v3177 = vadd.f32 %v2939, %v3099
        %v3178 = vadd.f32 %v2940, %v3104
        %v3179 = vadd.f32 %v2941, %v3109
        %v3180 = vadd.f32 %v2942, %v3114
        %v3181 = vadd.f32 %v2943, %v3119
        %v3182 = vadd.f32 %v2944, %v3124
        %v3183 = vadd.f32 %v2945, %v3129
        %v3184 = vadd.f32 %v2946, %v3134
        %v3185 = vadd.f32 %v2947, %v3139
        %v3186 = vadd.f32 %v2948, %v3144
        %v3187 = vadd.f32 %v2949, %v3149
        %v3188 = vadd.f32 %v2950, %v3154
        %v3189 = vadd.f32 %v2951, %v3159
        %s3190 = scalar_lea.vmem %s2, 128
        %v3191 = vld [vmem:[%s3190] sm:$0xff]
        %v3192 = vld [vmem:[%s3190 + $0x8] sm:$0xff]
        %v3193 = vld [vmem:[%s3190 + $0x10] sm:$0xff]
        %v3194 = vld [vmem:[%s3190 + $0x18] sm:$0xff]
        %3195 = vmatprep.subr.mxu0 0.0
        %3196 = vmatpush1.msra.mxu0 %v3191
        %3197 = vmatprep.subr.mxu0 0.0
        %3198 = vmatpush1.msra.mxu0 %v3192
        %3199 = vmatprep.subr.mxu0 0.0
        %3200 = vmatpush1.msra.mxu0 %v3193
        %3201 = vmatprep.subr.mxu0 0.0
        %3202 = vmatpush1.msra.mxu0 %v3194
        %3203 = vmatprep.subr.mxu0 0.0
        %3204 = vmatpush1.msra.mxu0 0.0
        %3205 = vmatprep.subr.mxu0 0.0
        %3206 = vmatpush1.msra.mxu0 0.0
        %3207 = vmatprep.subr.mxu0 0.0
        %3208 = vmatpush1.msra.mxu0 0.0
        %3209 = vmatprep.subr.mxu0 0.0
        %3210 = vmatpush1.msra.mxu0 0.0
        %3211 = vmatprep.subr.mxu0 0.0
        %3212 = vmatpush1.msra.mxu0 0.0
        %3213 = vmatprep.subr.mxu0 0.0
        %3214 = vmatpush1.msra.mxu0 0.0
        %3215 = vmatprep.subr.mxu0 0.0
        %3216 = vmatpush1.msra.mxu0 0.0
        %3217 = vmatprep.subr.mxu0 0.0
        %3218 = vmatpush1.msra.mxu0 0.0
        %3219 = vmatprep.subr.mxu0 0.0
        %3220 = vmatpush1.msra.mxu0 0.0
        %3221 = vmatprep.subr.mxu0 0.0
        %3222 = vmatpush1.msra.mxu0 0.0
        %3223 = vmatprep.subr.mxu0 0.0
        %3224 = vmatpush1.msra.mxu0 0.0
        %3225 = vmatprep.subr.mxu0 0.0
        %3226 = vmatpush1.msra.mxu0 0.0
        %3227 = vmatprep.subr.mxu0 0.0
        %3228 = vmatpush1.msra.mxu0 0.0
        %3229 = vmatprep.subr.mxu0 0.0
        %3230 = vmatpush1.msra.mxu0 0.0
        %3231 = vmatprep.subr.mxu0 0.0
        %3232 = vmatpush1.msra.mxu0 0.0
        %3233 = vmatprep.subr.mxu0 0.0
        %3234 = vmatpush1.msra.mxu0 0.0
        %3235 = vmatprep.subr.mxu0 0.0
        %3236 = vmatpush1.msra.mxu0 0.0
        %3237 = vmatprep.subr.mxu0 0.0
        %3238 = vmatpush1.msra.mxu0 0.0
        %3239 = vmatprep.subr.mxu0 0.0
        %3240 = vmatpush1.msra.mxu0 0.0
        %3241 = vmatprep.subr.mxu0 0.0
        %3242 = vmatpush1.msra.mxu0 0.0
        %3243 = vmatprep.subr.mxu0 0.0
        %3244 = vmatpush1.msra.mxu0 0.0
        %3245 = vmatprep.subr.mxu0 0.0
        %3246 = vmatpush1.msra.mxu0 0.0
        %3247 = vmatprep.subr.mxu0 0.0
        %3248 = vmatpush1.msra.mxu0 0.0
        %3249 = vmatprep.subr.mxu0 0.0
        %3250 = vmatpush1.msra.mxu0 0.0
        %3251 = vmatprep.subr.mxu0 0.0
        %3252 = vmatpush1.msra.mxu0 0.0
        %3253 = vmatprep.subr.mxu0 0.0
        %3254 = vmatpush1.msra.mxu0 0.0
        %3255 = vmatprep.subr.mxu0 0.0
        %3256 = vmatpush1.msra.mxu0 0.0
        %3257 = vmatprep.subr.mxu0 0.0
        %3258 = vmatpush1.msra.mxu0 0.0
        %3259 = vmatprep.mubr.f32.mxu0 0.0
        %3260 = vmatmul.mubr.f32.gmra.mrb[0].mxu0 %v1979
        %v3261 = vpop.f32.mrb[0].mxu0
        %v3262 = vadd.f32 0.0, %v3261
        %v3263 = vpop.f32.mrb[0].mxu0
        %3264 = vmatprep.mubr.f32.mxu0 0.0
        %3265 = vmatmul.mubr.f32.gmra.mrb[0].mxu0 %v1982
        %v3266 = vpop.f32.mrb[0].mxu0
        %v3267 = vadd.f32 0.0, %v3266
        %v3268 = vpop.f32.mrb[0].mxu0
        %3269 = vmatprep.mubr.f32.mxu0 0.0
        %3270 = vmatmul.mubr.f32.gmra.mrb[0].mxu0 %v1985
        %v3271 = vpop.f32.mrb[0].mxu0
        %v3272 = vadd.f32 0.0, %v3271
        %v3273 = vpop.f32.mrb[0].mxu0
        %3274 = vmatprep.mubr.f32.mxu0 0.0
        %3275 = vmatmul.mubr.f32.gmra.mrb[0].mxu0 %v1988
        %v3276 = vpop.f32.mrb[0].mxu0
        %v3277 = vadd.f32 0.0, %v3276
        %v3278 = vpop.f32.mrb[0].mxu0
        %3279 = vmatprep.mubr.f32.mxu0 0.0
        %3280 = vmatmul.mubr.f32.gmra.mrb[0].mxu0 %v1991
        %v3281 = vpop.f32.mrb[0].mxu0
        %v3282 = vadd.f32 0.0, %v3281
        %v3283 = vpop.f32.mrb[0].mxu0
        %3284 = vmatprep.mubr.f32.mxu0 0.0
        %3285 = vmatmul.mubr.f32.gmra.mrb[0].mxu0 %v1994
        %v3286 = vpop.f32.mrb[0].mxu0
        %v3287 = vadd.f32 0.0, %v3286
        %v3288 = vpop.f32.mrb[0].mxu0
        %3289 = vmatprep.mubr.f32.mxu0 0.0
        %3290 = vmatmul.mubr.f32.gmra.mrb[0].mxu0 %v1997
        %v3291 = vpop.f32.mrb[0].mxu0
        %v3292 = vadd.f32 0.0, %v3291
        %v3293 = vpop.f32.mrb[0].mxu0
        %3294 = vmatprep.mubr.f32.mxu0 0.0
        %3295 = vmatmul.mubr.f32.gmra.mrb[0].mxu0 %v2000
        %v3296 = vpop.f32.mrb[0].mxu0
        %v3297 = vadd.f32 0.0, %v3296
        %v3298 = vpop.f32.mrb[0].mxu0
        %3299 = vmatprep.mubr.f32.mxu0 0.0
        %3300 = vmatmul.mubr.f32.gmra.mrb[0].mxu0 %v2003
        %v3301 = vpop.f32.mrb[0].mxu0
        %v3302 = vadd.f32 0.0, %v3301
        %v3303 = vpop.f32.mrb[0].mxu0
        %3304 = vmatprep.mubr.f32.mxu0 0.0
        %3305 = vmatmul.mubr.f32.gmra.mrb[0].mxu0 %v2006
        %v3306 = vpop.f32.mrb[0].mxu0
        %v3307 = vadd.f32 0.0, %v3306
        %v3308 = vpop.f32.mrb[0].mxu0
        %3309 = vmatprep.mubr.f32.mxu0 0.0
        %3310 = vmatmul.mubr.f32.gmra.mrb[0].mxu0 %v2009
        %v3311 = vpop.f32.mrb[0].mxu0
        %v3312 = vadd.f32 0.0, %v3311
        %v3313 = vpop.f32.mrb[0].mxu0
        %3314 = vmatprep.mubr.f32.mxu0 0.0
        %3315 = vmatmul.mubr.f32.gmra.mrb[0].mxu0 %v2012
        %v3316 = vpop.f32.mrb[0].mxu0
        %v3317 = vadd.f32 0.0, %v3316
        %v3318 = vpop.f32.mrb[0].mxu0
        %3319 = vmatprep.mubr.f32.mxu0 0.0
        %3320 = vmatmul.mubr.f32.gmra.mrb[0].mxu0 %v2015
        %v3321 = vpop.f32.mrb[0].mxu0
        %v3322 = vadd.f32 0.0, %v3321
        %v3323 = vpop.f32.mrb[0].mxu0
        %3324 = vmatprep.mubr.f32.mxu0 0.0
        %3325 = vmatmul.mubr.f32.gmra.mrb[0].mxu0 %v2018
        %v3326 = vpop.f32.mrb[0].mxu0
        %v3327 = vadd.f32 0.0, %v3326
        %v3328 = vpop.f32.mrb[0].mxu0
        %3329 = vmatprep.mubr.f32.mxu0 0.0
        %3330 = vmatmul.mubr.f32.gmra.mrb[0].mxu0 %v2021
        %v3331 = vpop.f32.mrb[0].mxu0
        %v3332 = vadd.f32 0.0, %v3331
        %v3333 = vpop.f32.mrb[0].mxu0
        %3334 = vmatprep.mubr.f32.mxu0 0.0
        %3335 = vmatmul.mubr.f32.gmra.mrb[0].mxu0 %v2024
        %v3336 = vpop.f32.mrb[0].mxu0
        %v3337 = vadd.f32 0.0, %v3336
        %v3338 = vpop.f32.mrb[0].mxu0
        %3339 = vmatprep.mubr.f32.mxu0 0.0
        %3340 = vmatmul.mubr.f32.gmra.mrb[0].mxu0 %v2027
        %v3341 = vpop.f32.mrb[0].mxu0
        %v3342 = vadd.f32 0.0, %v3341
        %v3343 = vpop.f32.mrb[0].mxu0
        %3344 = vmatprep.mubr.f32.mxu0 0.0
        %3345 = vmatmul.mubr.f32.gmra.mrb[0].mxu0 %v2030
        %v3346 = vpop.f32.mrb[0].mxu0
        %v3347 = vadd.f32 0.0, %v3346
        %v3348 = vpop.f32.mrb[0].mxu0
        %3349 = vmatprep.mubr.f32.mxu0 0.0
        %3350 = vmatmul.mubr.f32.gmra.mrb[0].mxu0 %v2033
        %v3351 = vpop.f32.mrb[0].mxu0
        %v3352 = vadd.f32 0.0, %v3351
        %v3353 = vpop.f32.mrb[0].mxu0
        %3354 = vmatprep.mubr.f32.mxu0 0.0
        %3355 = vmatmul.mubr.f32.gmra.mrb[0].mxu0 %v2036
        %v3356 = vpop.f32.mrb[0].mxu0
        %v3357 = vadd.f32 0.0, %v3356
        %v3358 = vpop.f32.mrb[0].mxu0
        %3359 = vmatprep.mubr.f32.mxu0 0.0
        %3360 = vmatmul.mubr.f32.gmra.mrb[0].mxu0 %v2039
        %v3361 = vpop.f32.mrb[0].mxu0
        %v3362 = vadd.f32 0.0, %v3361
        %v3363 = vpop.f32.mrb[0].mxu0
        %3364 = vmatprep.mubr.f32.mxu0 0.0
        %3365 = vmatmul.mubr.f32.gmra.mrb[0].mxu0 %v2042
        %v3366 = vpop.f32.mrb[0].mxu0
        %v3367 = vadd.f32 0.0, %v3366
        %v3368 = vpop.f32.mrb[0].mxu0
        %3369 = vmatprep.mubr.f32.mxu0 0.0
        %3370 = vmatmul.mubr.f32.gmra.mrb[0].mxu0 %v2045
        %v3371 = vpop.f32.mrb[0].mxu0
        %v3372 = vadd.f32 0.0, %v3371
        %v3373 = vpop.f32.mrb[0].mxu0
        %3374 = vmatprep.mubr.f32.mxu0 0.0
        %3375 = vmatmul.mubr.f32.gmra.mrb[0].mxu0 %v2048
        %v3376 = vpop.f32.mrb[0].mxu0
        %v3377 = vadd.f32 0.0, %v3376
        %v3378 = vpop.f32.mrb[0].mxu0
        %3379 = vmatprep.mubr.f32.mxu0 0.0
        %3380 = vmatmul.mubr.f32.gmra.mrb[0].mxu0 %v2051
        %v3381 = vpop.f32.mrb[0].mxu0
        %v3382 = vadd.f32 0.0, %v3381
        %v3383 = vpop.f32.mrb[0].mxu0
        %3384 = vmatprep.mubr.f32.mxu0 0.0
        %3385 = vmatmul.mubr.f32.gmra.mrb[0].mxu0 %v2054
        %v3386 = vpop.f32.mrb[0].mxu0
        %v3387 = vadd.f32 0.0, %v3386
        %v3388 = vpop.f32.mrb[0].mxu0
        %3389 = vmatprep.mubr.f32.mxu0 0.0
        %3390 = vmatmul.mubr.f32.gmra.mrb[0].mxu0 %v2057
        %v3391 = vpop.f32.mrb[0].mxu0
        %v3392 = vadd.f32 0.0, %v3391
        %v3393 = vpop.f32.mrb[0].mxu0
        %3394 = vmatprep.mubr.f32.mxu0 0.0
        %3395 = vmatmul.mubr.f32.gmra.mrb[0].mxu0 %v2060
        %v3396 = vpop.f32.mrb[0].mxu0
        %v3397 = vadd.f32 0.0, %v3396
        %v3398 = vpop.f32.mrb[0].mxu0
        %3399 = vdwg.mxu0
        %v3400 = vadd.f32 %v3162, %v3262
        %v3401 = vadd.f32 %v3163, %v3267
        %v3402 = vadd.f32 %v3164, %v3272
        %v3403 = vadd.f32 %v3165, %v3277
        %v3404 = vadd.f32 %v3166, %v3282
        %v3405 = vadd.f32 %v3167, %v3287
        %v3406 = vadd.f32 %v3168, %v3292
        %v3407 = vadd.f32 %v3169, %v3297
        %v3408 = vadd.f32 %v3170, %v3302
        %v3409 = vadd.f32 %v3171, %v3307
        %v3410 = vadd.f32 %v3172, %v3312
        %v3411 = vadd.f32 %v3173, %v3317
        %v3412 = vadd.f32 %v3174, %v3322
        %v3413 = vadd.f32 %v3175, %v3327
        %v3414 = vadd.f32 %v3176, %v3332
        %v3415 = vadd.f32 %v3177, %v3337
        %v3416 = vadd.f32 %v3178, %v3342
        %v3417 = vadd.f32 %v3179, %v3347
        %v3418 = vadd.f32 %v3180, %v3352
        %v3419 = vadd.f32 %v3181, %v3357
        %v3420 = vadd.f32 %v3182, %v3362
        %v3421 = vadd.f32 %v3183, %v3367
        %v3422 = vadd.f32 %v3184, %v3372
        %v3423 = vadd.f32 %v3185, %v3377
        %v3424 = vadd.f32 %v3186, %v3382
        %v3425 = vadd.f32 %v3187, %v3387
        %v3426 = vadd.f32 %v3188, %v3392
        %v3427 = vadd.f32 %v3189, %v3397
        %v3428 = vmax.f32 %v2267, %v3400
        %v3429 = vmax.f32 %v2268, %v3401
        %v3430 = vmax.f32 %v2269, %v3402
        %v3431 = vmax.f32 %v2270, %v3403
        %v3432 = vmax.f32 %v2271, %v3404
        %v3433 = vmax.f32 %v2272, %v3405
        %v3434 = vmax.f32 %v2273, %v3406
        %v3435 = vmax.f32 %v2274, %v3407
        %v3436 = vmax.f32 %v2275, %v3408
        %v3437 = vmax.f32 %v2276, %v3409
        %v3438 = vmax.f32 %v2277, %v3410
        %v3439 = vmax.f32 %v2278, %v3411
        %v3440 = vmax.f32 %v2279, %v3412
        %v3441 = vmax.f32 %v2280, %v3413
        %v3442 = vmax.f32 %v2281, %v3414
        %v3443 = vmax.f32 %v2282, %v3415
        %v3444 = vmax.f32 %v2283, %v3416
        %v3445 = vmax.f32 %v2284, %v3417
        %v3446 = vmax.f32 %v2285, %v3418
        %v3447 = vmax.f32 %v2286, %v3419
        %v3448 = vmax.f32 %v2287, %v3420
        %v3449 = vmax.f32 %v2288, %v3421
        %v3450 = vmax.f32 %v2289, %v3422
        %v3451 = vmax.f32 %v2290, %v3423
        %v3452 = vmax.f32 %v2291, %v3424
        %v3453 = vmax.f32 %v2292, %v3425
        %v3454 = vmax.f32 %v2293, %v3426
        %v3455 = vmax.f32 %v2294, %v3427
        %v3456 = vld [vmem:[%s3] sm:$0x1]
        %v3458 = vlaneseq
        %v3459 = vshrl.u32 %v3458, 7
        %v3460 = vsub.s32 0, %v3459
        %v3461 = vrot.slane %v3456, %v3460
        %v3463 = vadd.f32 %v3428, %v3461
        %v3464 = vadd.f32 %v3429, %v3461
        %v3465 = vadd.f32 %v3430, %v3461
        %v3466 = vadd.f32 %v3431, %v3461
        %v3467 = vadd.f32 %v3432, %v3461
        %v3468 = vadd.f32 %v3433, %v3461
        %v3469 = vadd.f32 %v3434, %v3461
        %v3470 = vadd.f32 %v3435, %v3461
        %v3471 = vadd.f32 %v3436, %v3461
        %v3472 = vadd.f32 %v3437, %v3461
        %v3473 = vadd.f32 %v3438, %v3461
        %v3474 = vadd.f32 %v3439, %v3461
        %v3475 = vadd.f32 %v3440, %v3461
        %v3476 = vadd.f32 %v3441, %v3461
        %v3477 = vadd.f32 %v3442, %v3461
        %v3478 = vadd.f32 %v3443, %v3461
        %v3479 = vadd.f32 %v3444, %v3461
        %v3480 = vadd.f32 %v3445, %v3461
        %v3481 = vadd.f32 %v3446, %v3461
        %v3482 = vadd.f32 %v3447, %v3461
        %v3483 = vadd.f32 %v3448, %v3461
        %v3484 = vadd.f32 %v3449, %v3461
        %v3485 = vadd.f32 %v3450, %v3461
        %v3486 = vadd.f32 %v3451, %v3461
        %v3487 = vadd.f32 %v3452, %v3461
        %v3488 = vadd.f32 %v3453, %v3461
        %v3489 = vadd.f32 %v3454, %v3461
        %v3490 = vadd.f32 %v3455, %v3461
        %v3491 = vmax.f32 %v3463, 0.0
        %v3492 = vmax.f32 %v3464, 0.0
        %v3493 = vmax.f32 %v3465, 0.0
        %v3494 = vmax.f32 %v3466, 0.0
        %v3495 = vmax.f32 %v3467, 0.0
        %v3496 = vmax.f32 %v3468, 0.0
        %v3497 = vmax.f32 %v3469, 0.0
        %v3498 = vmax.f32 %v3470, 0.0
        %v3499 = vmax.f32 %v3471, 0.0
        %v3500 = vmax.f32 %v3472, 0.0
        %v3501 = vmax.f32 %v3473, 0.0
        %v3502 = vmax.f32 %v3474, 0.0
        %v3503 = vmax.f32 %v3475, 0.0
        %v3504 = vmax.f32 %v3476, 0.0
        %v3505 = vmax.f32 %v3477, 0.0
        %v3506 = vmax.f32 %v3478, 0.0
        %v3507 = vmax.f32 %v3479, 0.0
        %v3508 = vmax.f32 %v3480, 0.0
        %v3509 = vmax.f32 %v3481, 0.0
        %v3510 = vmax.f32 %v3482, 0.0
        %v3511 = vmax.f32 %v3483, 0.0
        %v3512 = vmax.f32 %v3484, 0.0
        %v3513 = vmax.f32 %v3485, 0.0
        %v3514 = vmax.f32 %v3486, 0.0
        %v3515 = vmax.f32 %v3487, 0.0
        %v3516 = vmax.f32 %v3488, 0.0
        %v3517 = vmax.f32 %v3489, 0.0
        %v3518 = vmax.f32 %v3490, 0.0
        %v3519 = vmax.f32 %v3491, %v3492
        %v3520 = vmax.f32 %v3493, %v3494
        %v3521 = vmax.f32 %v3495, %v3496
        %v3522 = vmax.f32 %v3497, %v3498
        %v3523 = vmax.f32 %v3499, %v3500
        %v3524 = vmax.f32 %v3501, %v3502
        %v3525 = vmax.f32 %v3503, %v3504
        %v3526 = vmax.f32 %v3505, %v3506
        %v3527 = vmax.f32 %v3507, %v3508
        %v3528 = vmax.f32 %v3509, %v3510
        %v3529 = vmax.f32 %v3511, %v3512
        %v3530 = vmax.f32 %v3513, %v3514
        %v3531 = vmax.f32 %v3515, %v3516
        %v3532 = vmax.f32 %v3517, %v3518
        %v3533 = vld [vmem:[%s4] sm:$0xff]
        %v3534 = vld [vmem:[%s4 + $0x8] sm:$0xff]
        %v3535 = vld [vmem:[%s4 + $0x10] sm:$0xff]
        %v3536 = vld [vmem:[%s4 + $0x18] sm:$0xff]
        %v3537 = vld [vmem:[%s4 + $0x20] sm:$0xff]
        %v3538 = vld [vmem:[%s4 + $0x28] sm:$0xff]
        %v3539 = vld [vmem:[%s4 + $0x30] sm:$0xff]
        %v3540 = vld [vmem:[%s4 + $0x38] sm:$0xff]
        %v3541 = vld [vmem:[%s4 + $0x40] sm:$0xff]
        %v3542 = vld [vmem:[%s4 + $0x48] sm:$0xff]
        %v3543 = vld [vmem:[%s4 + $0x50] sm:$0xf]
        %s3544 = scalar_lea.vmem %s4, 88
        %v3545 = vld [vmem:[%s3544] sm:$0xff]
        %v3546 = vld [vmem:[%s3544 + $0x8] sm:$0xff]
        %v3547 = vld [vmem:[%s3544 + $0x10] sm:$0xff]
        %v3548 = vld [vmem:[%s3544 + $0x18] sm:$0xff]
        %v3549 = vld [vmem:[%s3544 + $0x20] sm:$0xff]
        %v3550 = vld [vmem:[%s3544 + $0x28] sm:$0xff]
        %v3551 = vld [vmem:[%s3544 + $0x30] sm:$0xff]
        %v3552 = vld [vmem:[%s3544 + $0x38] sm:$0xff]
        %v3553 = vld [vmem:[%s3544 + $0x40] sm:$0xff]
        %v3554 = vld [vmem:[%s3544 + $0x48] sm:$0xff]
        %v3555 = vld [vmem:[%s3544 + $0x50] sm:$0xf]
        %vm3556 = vcmask 687104
        %v3558 = vsel %vm3556, %v3520, 0
        %v3561 = vsel %vm3556, %v3521, 0
        %v3564 = vsel %vm3556, %v3522, 0
        %v3567 = vsel %vm3556, %v3523, 0
        %v3570 = vsel %vm3556, %v3524, 0
        %v3573 = vsel %vm3556, %v3525, 0
        %v3576 = vsel %vm3556, %v3526, 0
        %v3579 = vsel %vm3556, %v3527, 0
        %v3582 = vsel %vm3556, %v3528, 0
        %v3585 = vsel %vm3556, %v3529, 0
        %vm3587 = vcmask 1043456
        %v3589 = vsel %vm3587, %v3555, 0
        %3591 = vmatprep.subr.mxu0 0.0
        %3592 = vmatpush1.msra.mxu0 %v3545
        %3593 = vmatprep.subr.mxu0 0.0
        %3594 = vmatpush1.msra.mxu0 %v3546
        %3595 = vmatprep.subr.mxu0 0.0
        %3596 = vmatpush1.msra.mxu0 %v3547
        %3597 = vmatprep.subr.mxu0 0.0
        %3598 = vmatpush1.msra.mxu0 %v3548
        %3599 = vmatprep.subr.mxu0 0.0
        %3600 = vmatpush1.msra.mxu0 %v3549
        %3601 = vmatprep.subr.mxu0 0.0
        %3602 = vmatpush1.msra.mxu0 %v3550
        %3603 = vmatprep.subr.mxu0 0.0
        %3604 = vmatpush1.msra.mxu0 %v3551
        %3605 = vmatprep.subr.mxu0 0.0
        %3606 = vmatpush1.msra.mxu0 %v3552
        %3607 = vmatprep.subr.mxu0 0.0
        %3608 = vmatpush1.msra.mxu0 %v3553
        %3609 = vmatprep.subr.mxu0 0.0
        %3610 = vmatpush1.msra.mxu0 %v3554
        %3611 = vmatprep.subr.mxu0 0.0
        %3612 = vmatpush1.msra.mxu0 %v3589
        %3613 = vmatprep.subr.mxu0 0.0
        %3614 = vmatpush1.msra.mxu0 0.0
        %3615 = vmatprep.subr.mxu0 0.0
        %3616 = vmatpush1.msra.mxu0 0.0
        %3617 = vmatprep.subr.mxu0 0.0
        %3618 = vmatpush1.msra.mxu0 0.0
        %3619 = vmatprep.subr.mxu0 0.0
        %3620 = vmatpush1.msra.mxu0 0.0
        %3621 = vmatprep.subr.mxu0 0.0
        %3622 = vmatpush1.msra.mxu0 0.0
        %3623 = vmatprep.subr.mxu0 0.0
        %3624 = vmatpush1.msra.mxu0 0.0
        %3625 = vmatprep.subr.mxu0 0.0
        %3626 = vmatpush1.msra.mxu0 0.0
        %3627 = vmatprep.subr.mxu0 0.0
        %3628 = vmatpush1.msra.mxu0 0.0
        %3629 = vmatprep.subr.mxu0 0.0
        %3630 = vmatpush1.msra.mxu0 0.0
        %3631 = vmatprep.subr.mxu0 0.0
        %3632 = vmatpush1.msra.mxu0 0.0
        %3633 = vmatprep.subr.mxu0 0.0
        %3634 = vmatpush1.msra.mxu0 0.0
        %3635 = vmatprep.subr.mxu0 0.0
        %3636 = vmatpush1.msra.mxu0 0.0
        %3637 = vmatprep.subr.mxu0 0.0
        %3638 = vmatpush1.msra.mxu0 0.0
        %3639 = vmatprep.subr.mxu0 0.0
        %3640 = vmatpush1.msra.mxu0 0.0
        %3641 = vmatprep.subr.mxu0 0.0
        %3642 = vmatpush1.msra.mxu0 0.0
        %3643 = vmatprep.subr.mxu0 0.0
        %3644 = vmatpush1.msra.mxu0 0.0
        %3645 = vmatprep.subr.mxu0 0.0
        %3646 = vmatpush1.msra.mxu0 0.0
        %3647 = vmatprep.subr.mxu0 0.0
        %3648 = vmatpush1.msra.mxu0 0.0
        %3649 = vmatprep.subr.mxu0 0.0
        %3650 = vmatpush1.msra.mxu0 0.0
        %3651 = vmatprep.subr.mxu0 0.0
        %3652 = vmatpush1.msra.mxu0 0.0
        %3653 = vmatprep.subr.mxu0 0.0
        %3654 = vmatpush1.msra.mxu0 0.0
        %3655 = vmatprep.mubr.f32.mxu0 0.0
        %3656 = vmatmul.mubr.f32.gmra.mrb[0].mxu0 %v3558
        %v3657 = vpop.f32.mrb[0].mxu0
        %v3658 = vadd.f32 0.0, %v3657
        %v3659 = vpop.f32.mrb[0].mxu0
        %3660 = vmatprep.mubr.f32.mxu0 0.0
        %3661 = vmatmul.mubr.f32.gmra.mrb[0].mxu0 %v3561
        %v3662 = vpop.f32.mrb[0].mxu0
        %v3663 = vadd.f32 0.0, %v3662
        %v3664 = vpop.f32.mrb[0].mxu0
        %3665 = vmatprep.mubr.f32.mxu0 0.0
        %3666 = vmatmul.mubr.f32.gmra.mrb[0].mxu0 %v3564
        %v3667 = vpop.f32.mrb[0].mxu0
        %v3668 = vadd.f32 0.0, %v3667
        %v3669 = vpop.f32.mrb[0].mxu0
        %3670 = vmatprep.mubr.f32.mxu0 0.0
        %3671 = vmatmul.mubr.f32.gmra.mrb[0].mxu0 %v3567
        %v3672 = vpop.f32.mrb[0].mxu0
        %v3673 = vadd.f32 0.0, %v3672
        %v3674 = vpop.f32.mrb[0].mxu0
        %3675 = vmatprep.mubr.f32.mxu0 0.0
        %3676 = vmatmul.mubr.f32.gmra.mrb[0].mxu0 %v3570
        %v3677 = vpop.f32.mrb[0].mxu0
        %v3678 = vadd.f32 0.0, %v3677
        %v3679 = vpop.f32.mrb[0].mxu0
        %3680 = vmatprep.mubr.f32.mxu0 0.0
        %3681 = vmatmul.mubr.f32.gmra.mrb[0].mxu0 %v3573
        %v3682 = vpop.f32.mrb[0].mxu0
        %v3683 = vadd.f32 0.0, %v3682
        %v3684 = vpop.f32.mrb[0].mxu0
        %3685 = vmatprep.mubr.f32.mxu0 0.0
        %3686 = vmatmul.mubr.f32.gmra.mrb[0].mxu0 %v3576
        %v3687 = vpop.f32.mrb[0].mxu0
        %v3688 = vadd.f32 0.0, %v3687
        %v3689 = vpop.f32.mrb[0].mxu0
        %3690 = vmatprep.mubr.f32.mxu0 0.0
        %3691 = vmatmul.mubr.f32.gmra.mrb[0].mxu0 %v3579
        %v3692 = vpop.f32.mrb[0].mxu0
        %v3693 = vadd.f32 0.0, %v3692
        %v3694 = vpop.f32.mrb[0].mxu0
        %3695 = vmatprep.mubr.f32.mxu0 0.0
        %3696 = vmatmul.mubr.f32.gmra.mrb[0].mxu0 %v3582
        %v3697 = vpop.f32.mrb[0].mxu0
        %v3698 = vadd.f32 0.0, %v3697
        %v3699 = vpop.f32.mrb[0].mxu0
        %3700 = vmatprep.mubr.f32.mxu0 0.0
        %3701 = vmatmul.mubr.f32.gmra.mrb[0].mxu0 %v3585
        %v3702 = vpop.f32.mrb[0].mxu0
        %v3703 = vadd.f32 0.0, %v3702
        %v3704 = vpop.f32.mrb[0].mxu0
        %3705 = vdwg.mxu0
        %v3707 = vsel %vm3556, %v3519, 0
        %v3710 = vsel %vm3587, %v3543, 0
        %3712 = vmatprep.subr.mxu0 0.0
        %3713 = vmatpush1.msra.mxu0 %v3533
        %3714 = vmatprep.subr.mxu0 0.0
        %3715 = vmatpush1.msra.mxu0 %v3534
        %3716 = vmatprep.subr.mxu0 0.0
        %3717 = vmatpush1.msra.mxu0 %v3535
        %3718 = vmatprep.subr.mxu0 0.0
        %3719 = vmatpush1.msra.mxu0 %v3536
        %3720 = vmatprep.subr.mxu0 0.0
        %3721 = vmatpush1.msra.mxu0 %v3537
        %3722 = vmatprep.subr.mxu0 0.0
        %3723 = vmatpush1.msra.mxu0 %v3538
        %3724 = vmatprep.subr.mxu0 0.0
        %3725 = vmatpush1.msra.mxu0 %v3539
        %3726 = vmatprep.subr.mxu0 0.0
        %3727 = vmatpush1.msra.mxu0 %v3540
        %3728 = vmatprep.subr.mxu0 0.0
        %3729 = vmatpush1.msra.mxu0 %v3541
        %3730 = vmatprep.subr.mxu0 0.0
        %3731 = vmatpush1.msra.mxu0 %v3542
        %3732 = vmatprep.subr.mxu0 0.0
        %3733 = vmatpush1.msra.mxu0 %v3710
        %3734 = vmatprep.subr.mxu0 0.0
        %3735 = vmatpush1.msra.mxu0 0.0
        %3736 = vmatprep.subr.mxu0 0.0
        %3737 = vmatpush1.msra.mxu0 0.0
        %3738 = vmatprep.subr.mxu0 0.0
        %3739 = vmatpush1.msra.mxu0 0.0
        %3740 = vmatprep.subr.mxu0 0.0
        %3741 = vmatpush1.msra.mxu0 0.0
        %3742 = vmatprep.subr.mxu0 0.0
        %3743 = vmatpush1.msra.mxu0 0.0
        %3744 = vmatprep.subr.mxu0 0.0
        %3745 = vmatpush1.msra.mxu0 0.0
        %3746 = vmatprep.subr.mxu0 0.0
        %3747 = vmatpush1.msra.mxu0 0.0
        %3748 = vmatprep.subr.mxu0 0.0
        %3749 = vmatpush1.msra.mxu0 0.0
        %3750 = vmatprep.subr.mxu0 0.0
        %3751 = vmatpush1.msra.mxu0 0.0
        %3752 = vmatprep.subr.mxu0 0.0
        %3753 = vmatpush1.msra.mxu0 0.0
        %3754 = vmatprep.subr.mxu0 0.0
        %3755 = vmatpush1.msra.mxu0 0.0
        %3756 = vmatprep.subr.mxu0 0.0
        %3757 = vmatpush1.msra.mxu0 0.0
        %3758 = vmatprep.subr.mxu0 0.0
        %3759 = vmatpush1.msra.mxu0 0.0
        %3760 = vmatprep.subr.mxu0 0.0
        %3761 = vmatpush1.msra.mxu0 0.0
        %3762 = vmatprep.subr.mxu0 0.0
        %3763 = vmatpush1.msra.mxu0 0.0
        %3764 = vmatprep.subr.mxu0 0.0
        %3765 = vmatpush1.msra.mxu0 0.0
        %3766 = vmatprep.subr.mxu0 0.0
        %3767 = vmatpush1.msra.mxu0 0.0
        %3768 = vmatprep.subr.mxu0 0.0
        %3769 = vmatpush1.msra.mxu0 0.0
        %3770 = vmatprep.subr.mxu0 0.0
        %3771 = vmatpush1.msra.mxu0 0.0
        %3772 = vmatprep.subr.mxu0 0.0
        %3773 = vmatpush1.msra.mxu0 0.0
        %3774 = vmatprep.subr.mxu0 0.0
        %3775 = vmatpush1.msra.mxu0 0.0
        %3776 = vmatprep.mubr.f32.mxu0 0.0
        %3777 = vmatmul.mubr.f32.gmra.mrb[0].mxu0 %v3707
        %v3778 = vpop.f32.mrb[0].mxu0
        %v3779 = vadd.f32 %v3658, %v3778
        %v3780 = vpop.f32.mrb[0].mxu0
        %3781 = vmatprep.mubr.f32.mxu0 0.0
        %3782 = vmatmul.mubr.f32.gmra.mrb[0].mxu0 %v3558
        %v3783 = vpop.f32.mrb[0].mxu0
        %v3784 = vadd.f32 %v3663, %v3783
        %v3785 = vpop.f32.mrb[0].mxu0
        %3786 = vmatprep.mubr.f32.mxu0 0.0
        %3787 = vmatmul.mubr.f32.gmra.mrb[0].mxu0 %v3561
        %v3788 = vpop.f32.mrb[0].mxu0
        %v3789 = vadd.f32 %v3668, %v3788
        %v3790 = vpop.f32.mrb[0].mxu0
        %3791 = vmatprep.mubr.f32.mxu0 0.0
        %3792 = vmatmul.mubr.f32.gmra.mrb[0].mxu0 %v3564
        %v3793 = vpop.f32.mrb[0].mxu0
        %v3794 = vadd.f32 %v3673, %v3793
        %v3795 = vpop.f32.mrb[0].mxu0
        %3796 = vmatprep.mubr.f32.mxu0 0.0
        %3797 = vmatmul.mubr.f32.gmra.mrb[0].mxu0 %v3567
        %v3798 = vpop.f32.mrb[0].mxu0
        %v3799 = vadd.f32 %v3678, %v3798
        %v3800 = vpop.f32.mrb[0].mxu0
        %3801 = vmatprep.mubr.f32.mxu0 0.0
        %3802 = vmatmul.mubr.f32.gmra.mrb[0].mxu0 %v3570
        %v3803 = vpop.f32.mrb[0].mxu0
        %v3804 = vadd.f32 %v3683, %v3803
        %v3805 = vpop.f32.mrb[0].mxu0
        %3806 = vmatprep.mubr.f32.mxu0 0.0
        %3807 = vmatmul.mubr.f32.gmra.mrb[0].mxu0 %v3573
        %v3808 = vpop.f32.mrb[0].mxu0
        %v3809 = vadd.f32 %v3688, %v3808
        %v3810 = vpop.f32.mrb[0].mxu0
        %3811 = vmatprep.mubr.f32.mxu0 0.0
        %3812 = vmatmul.mubr.f32.gmra.mrb[0].mxu0 %v3576
        %v3813 = vpop.f32.mrb[0].mxu0
        %v3814 = vadd.f32 %v3693, %v3813
        %v3815 = vpop.f32.mrb[0].mxu0
        %3816 = vmatprep.mubr.f32.mxu0 0.0
        %3817 = vmatmul.mubr.f32.gmra.mrb[0].mxu0 %v3579
        %v3818 = vpop.f32.mrb[0].mxu0
        %v3819 = vadd.f32 %v3698, %v3818
        %v3820 = vpop.f32.mrb[0].mxu0
        %3821 = vmatprep.mubr.f32.mxu0 0.0
        %3822 = vmatmul.mubr.f32.gmra.mrb[0].mxu0 %v3582
        %v3823 = vpop.f32.mrb[0].mxu0
        %v3824 = vadd.f32 %v3703, %v3823
        %v3825 = vpop.f32.mrb[0].mxu0
        %3826 = vdwg.mxu0
        %s3827 = scalar_lea.vmem %s4, 176
        %v3828 = vld [vmem:[%s3827] sm:$0xff]
        %v3829 = vld [vmem:[%s3827 + $0x8] sm:$0xff]
        %v3830 = vld [vmem:[%s3827 + $0x10] sm:$0xff]
        %v3831 = vld [vmem:[%s3827 + $0x18] sm:$0xff]
        %v3832 = vld [vmem:[%s3827 + $0x20] sm:$0xff]
        %v3833 = vld [vmem:[%s3827 + $0x28] sm:$0xff]
        %v3834 = vld [vmem:[%s3827 + $0x30] sm:$0xff]
        %v3835 = vld [vmem:[%s3827 + $0x38] sm:$0xff]
        %v3836 = vld [vmem:[%s3827 + $0x40] sm:$0xff]
        %v3837 = vld [vmem:[%s3827 + $0x48] sm:$0xff]
        %v3838 = vld [vmem:[%s3827 + $0x50] sm:$0xf]
        %v3840 = vsel %vm3556, %v3530, 0
        %v3843 = vsel %vm3587, %v3838, 0
        %3845 = vmatprep.subr.mxu0 0.0
        %3846 = vmatpush1.msra.mxu0 %v3828
        %3847 = vmatprep.subr.mxu0 0.0
        %3848 = vmatpush1.msra.mxu0 %v3829
        %3849 = vmatprep.subr.mxu0 0.0
        %3850 = vmatpush1.msra.mxu0 %v3830
        %3851 = vmatprep.subr.mxu0 0.0
        %3852 = vmatpush1.msra.mxu0 %v3831
        %3853 = vmatprep.subr.mxu0 0.0
        %3854 = vmatpush1.msra.mxu0 %v3832
        %3855 = vmatprep.subr.mxu0 0.0
        %3856 = vmatpush1.msra.mxu0 %v3833
        %3857 = vmatprep.subr.mxu0 0.0
        %3858 = vmatpush1.msra.mxu0 %v3834
        %3859 = vmatprep.subr.mxu0 0.0
        %3860 = vmatpush1.msra.mxu0 %v3835
        %3861 = vmatprep.subr.mxu0 0.0
        %3862 = vmatpush1.msra.mxu0 %v3836
        %3863 = vmatprep.subr.mxu0 0.0
        %3864 = vmatpush1.msra.mxu0 %v3837
        %3865 = vmatprep.subr.mxu0 0.0
        %3866 = vmatpush1.msra.mxu0 %v3843
        %3867 = vmatprep.subr.mxu0 0.0
        %3868 = vmatpush1.msra.mxu0 0.0
        %3869 = vmatprep.subr.mxu0 0.0
        %3870 = vmatpush1.msra.mxu0 0.0
        %3871 = vmatprep.subr.mxu0 0.0
        %3872 = vmatpush1.msra.mxu0 0.0
        %3873 = vmatprep.subr.mxu0 0.0
        %3874 = vmatpush1.msra.mxu0 0.0
        %3875 = vmatprep.subr.mxu0 0.0
        %3876 = vmatpush1.msra.mxu0 0.0
        %3877 = vmatprep.subr.mxu0 0.0
        %3878 = vmatpush1.msra.mxu0 0.0
        %3879 = vmatprep.subr.mxu0 0.0
        %3880 = vmatpush1.msra.mxu0 0.0
        %3881 = vmatprep.subr.mxu0 0.0
        %3882 = vmatpush1.msra.mxu0 0.0
        %3883 = vmatprep.subr.mxu0 0.0
        %3884 = vmatpush1.msra.mxu0 0.0
        %3885 = vmatprep.subr.mxu0 0.0
        %3886 = vmatpush1.msra.mxu0 0.0
        %3887 = vmatprep.subr.mxu0 0.0
        %3888 = vmatpush1.msra.mxu0 0.0
        %3889 = vmatprep.subr.mxu0 0.0
        %3890 = vmatpush1.msra.mxu0 0.0
        %3891 = vmatprep.subr.mxu0 0.0
        %3892 = vmatpush1.msra.mxu0 0.0
        %3893 = vmatprep.subr.mxu0 0.0
        %3894 = vmatpush1.msra.mxu0 0.0
        %3895 = vmatprep.subr.mxu0 0.0
        %3896 = vmatpush1.msra.mxu0 0.0
        %3897 = vmatprep.subr.mxu0 0.0
        %3898 = vmatpush1.msra.mxu0 0.0
        %3899 = vmatprep.subr.mxu0 0.0
        %3900 = vmatpush1.msra.mxu0 0.0
        %3901 = vmatprep.subr.mxu0 0.0
        %3902 = vmatpush1.msra.mxu0 0.0
        %3903 = vmatprep.subr.mxu0 0.0
        %3904 = vmatpush1.msra.mxu0 0.0
        %3905 = vmatprep.subr.mxu0 0.0
        %3906 = vmatpush1.msra.mxu0 0.0
        %3907 = vmatprep.subr.mxu0 0.0
        %3908 = vmatpush1.msra.mxu0 0.0
        %3909 = vmatprep.mubr.f32.mxu0 0.0
        %3910 = vmatmul.mubr.f32.gmra.mrb[0].mxu0 %v3561
        %v3911 = vpop.f32.mrb[0].mxu0
        %v3912 = vadd.f32 0.0, %v3911
        %v3913 = vpop.f32.mrb[0].mxu0
        %3914 = vmatprep.mubr.f32.mxu0 0.0
        %3915 = vmatmul.mubr.f32.gmra.mrb[0].mxu0 %v3564
        %v3916 = vpop.f32.mrb[0].mxu0
        %v3917 = vadd.f32 0.0, %v3916
        %v3918 = vpop.f32.mrb[0].mxu0
        %3919 = vmatprep.mubr.f32.mxu0 0.0
        %3920 = vmatmul.mubr.f32.gmra.mrb[0].mxu0 %v3567
        %v3921 = vpop.f32.mrb[0].mxu0
        %v3922 = vadd.f32 0.0, %v3921
        %v3923 = vpop.f32.mrb[0].mxu0
        %3924 = vmatprep.mubr.f32.mxu0 0.0
        %3925 = vmatmul.mubr.f32.gmra.mrb[0].mxu0 %v3570
        %v3926 = vpop.f32.mrb[0].mxu0
        %v3927 = vadd.f32 0.0, %v3926
        %v3928 = vpop.f32.mrb[0].mxu0
        %3929 = vmatprep.mubr.f32.mxu0 0.0
        %3930 = vmatmul.mubr.f32.gmra.mrb[0].mxu0 %v3573
        %v3931 = vpop.f32.mrb[0].mxu0
        %v3932 = vadd.f32 0.0, %v3931
        %v3933 = vpop.f32.mrb[0].mxu0
        %3934 = vmatprep.mubr.f32.mxu0 0.0
        %3935 = vmatmul.mubr.f32.gmra.mrb[0].mxu0 %v3576
        %v3936 = vpop.f32.mrb[0].mxu0
        %v3937 = vadd.f32 0.0, %v3936
        %v3938 = vpop.f32.mrb[0].mxu0
        %3939 = vmatprep.mubr.f32.mxu0 0.0
        %3940 = vmatmul.mubr.f32.gmra.mrb[0].mxu0 %v3579
        %v3941 = vpop.f32.mrb[0].mxu0
        %v3942 = vadd.f32 0.0, %v3941
        %v3943 = vpop.f32.mrb[0].mxu0
        %3944 = vmatprep.mubr.f32.mxu0 0.0
        %3945 = vmatmul.mubr.f32.gmra.mrb[0].mxu0 %v3582
        %v3946 = vpop.f32.mrb[0].mxu0
        %v3947 = vadd.f32 0.0, %v3946
        %v3948 = vpop.f32.mrb[0].mxu0
        %3949 = vmatprep.mubr.f32.mxu0 0.0
        %3950 = vmatmul.mubr.f32.gmra.mrb[0].mxu0 %v3585
        %v3951 = vpop.f32.mrb[0].mxu0
        %v3952 = vadd.f32 0.0, %v3951
        %v3953 = vpop.f32.mrb[0].mxu0
        %3954 = vmatprep.mubr.f32.mxu0 0.0
        %3955 = vmatmul.mubr.f32.gmra.mrb[0].mxu0 %v3840
        %v3956 = vpop.f32.mrb[0].mxu0
        %v3957 = vadd.f32 0.0, %v3956
        %v3958 = vpop.f32.mrb[0].mxu0
        %3959 = vdwg.mxu0
        %v3960 = vadd.f32 %v3779, %v3912
        %v3961 = vadd.f32 %v3784, %v3917
        %v3962 = vadd.f32 %v3789, %v3922
        %v3963 = vadd.f32 %v3794, %v3927
        %v3964 = vadd.f32 %v3799, %v3932
        %v3965 = vadd.f32 %v3804, %v3937
        %v3966 = vadd.f32 %v3809, %v3942
        %v3967 = vadd.f32 %v3814, %v3947
        %v3968 = vadd.f32 %v3819, %v3952
        %v3969 = vadd.f32 %v3824, %v3957
        %s3970 = scalar_lea.vmem %s4, 264
        %v3971 = vld [vmem:[%s3970] sm:$0xff]
        %v3972 = vld [vmem:[%s3970 + $0x8] sm:$0xff]
        %v3973 = vld [vmem:[%s3970 + $0x10] sm:$0xff]
        %v3974 = vld [vmem:[%s3970 + $0x18] sm:$0xff]
        %v3975 = vld [vmem:[%s3970 + $0x20] sm:$0xff]
        %v3976 = vld [vmem:[%s3970 + $0x28] sm:$0xff]
        %v3977 = vld [vmem:[%s3970 + $0x30] sm:$0xff]
        %v3978 = vld [vmem:[%s3970 + $0x38] sm:$0xff]
        %v3979 = vld [vmem:[%s3970 + $0x40] sm:$0xff]
        %v3980 = vld [vmem:[%s3970 + $0x48] sm:$0xff]
        %v3981 = vld [vmem:[%s3970 + $0x50] sm:$0xf]
        %v3983 = vsel %vm3556, %v3531, 0
        %v3986 = vsel %vm3587, %v3981, 0
        %3988 = vmatprep.subr.mxu0 0.0
        %3989 = vmatpush1.msra.mxu0 %v3971
        %3990 = vmatprep.subr.mxu0 0.0
        %3991 = vmatpush1.msra.mxu0 %v3972
        %3992 = vmatprep.subr.mxu0 0.0
        %3993 = vmatpush1.msra.mxu0 %v3973
        %3994 = vmatprep.subr.mxu0 0.0
        %3995 = vmatpush1.msra.mxu0 %v3974
        %3996 = vmatprep.subr.mxu0 0.0
        %3997 = vmatpush1.msra.mxu0 %v3975
        %3998 = vmatprep.subr.mxu0 0.0
        %3999 = vmatpush1.msra.mxu0 %v3976
        %4000 = vmatprep.subr.mxu0 0.0
        %4001 = vmatpush1.msra.mxu0 %v3977
        %4002 = vmatprep.subr.mxu0 0.0
        %4003 = vmatpush1.msra.mxu0 %v3978
        %4004 = vmatprep.subr.mxu0 0.0
        %4005 = vmatpush1.msra.mxu0 %v3979
        %4006 = vmatprep.subr.mxu0 0.0
        %4007 = vmatpush1.msra.mxu0 %v3980
        %4008 = vmatprep.subr.mxu0 0.0
        %4009 = vmatpush1.msra.mxu0 %v3986
        %4010 = vmatprep.subr.mxu0 0.0
        %4011 = vmatpush1.msra.mxu0 0.0
        %4012 = vmatprep.subr.mxu0 0.0
        %4013 = vmatpush1.msra.mxu0 0.0
        %4014 = vmatprep.subr.mxu0 0.0
        %4015 = vmatpush1.msra.mxu0 0.0
        %4016 = vmatprep.subr.mxu0 0.0
        %4017 = vmatpush1.msra.mxu0 0.0
        %4018 = vmatprep.subr.mxu0 0.0
        %4019 = vmatpush1.msra.mxu0 0.0
        %4020 = vmatprep.subr.mxu0 0.0
        %4021 = vmatpush1.msra.mxu0 0.0
        %4022 = vmatprep.subr.mxu0 0.0
        %4023 = vmatpush1.msra.mxu0 0.0
        %4024 = vmatprep.subr.mxu0 0.0
        %4025 = vmatpush1.msra.mxu0 0.0
        %4026 = vmatprep.subr.mxu0 0.0
        %4027 = vmatpush1.msra.mxu0 0.0
        %4028 = vmatprep.subr.mxu0 0.0
        %4029 = vmatpush1.msra.mxu0 0.0
        %4030 = vmatprep.subr.mxu0 0.0
        %4031 = vmatpush1.msra.mxu0 0.0
        %4032 = vmatprep.subr.mxu0 0.0
        %4033 = vmatpush1.msra.mxu0 0.0
        %4034 = vmatprep.subr.mxu0 0.0
        %4035 = vmatpush1.msra.mxu0 0.0
        %4036 = vmatprep.subr.mxu0 0.0
        %4037 = vmatpush1.msra.mxu0 0.0
        %4038 = vmatprep.subr.mxu0 0.0
        %4039 = vmatpush1.msra.mxu0 0.0
        %4040 = vmatprep.subr.mxu0 0.0
        %4041 = vmatpush1.msra.mxu0 0.0
        %4042 = vmatprep.subr.mxu0 0.0
        %4043 = vmatpush1.msra.mxu0 0.0
        %4044 = vmatprep.subr.mxu0 0.0
        %4045 = vmatpush1.msra.mxu0 0.0
        %4046 = vmatprep.subr.mxu0 0.0
        %4047 = vmatpush1.msra.mxu0 0.0
        %4048 = vmatprep.subr.mxu0 0.0
        %4049 = vmatpush1.msra.mxu0 0.0
        %4050 = vmatprep.subr.mxu0 0.0
        %4051 = vmatpush1.msra.mxu0 0.0
        %4052 = vmatprep.mubr.f32.mxu0 0.0
        %4053 = vmatmul.mubr.f32.gmra.mrb[0].mxu0 %v3564
        %v4054 = vpop.f32.mrb[0].mxu0
        %v4055 = vadd.f32 0.0, %v4054
        %v4056 = vpop.f32.mrb[0].mxu0
        %4057 = vmatprep.mubr.f32.mxu0 0.0
        %4058 = vmatmul.mubr.f32.gmra.mrb[0].mxu0 %v3567
        %v4059 = vpop.f32.mrb[0].mxu0
        %v4060 = vadd.f32 0.0, %v4059
        %v4061 = vpop.f32.mrb[0].mxu0
        %4062 = vmatprep.mubr.f32.mxu0 0.0
        %4063 = vmatmul.mubr.f32.gmra.mrb[0].mxu0 %v3570
        %v4064 = vpop.f32.mrb[0].mxu0
        %v4065 = vadd.f32 0.0, %v4064
        %v4066 = vpop.f32.mrb[0].mxu0
        %4067 = vmatprep.mubr.f32.mxu0 0.0
        %4068 = vmatmul.mubr.f32.gmra.mrb[0].mxu0 %v3573
        %v4069 = vpop.f32.mrb[0].mxu0
        %v4070 = vadd.f32 0.0, %v4069
        %v4071 = vpop.f32.mrb[0].mxu0
        %4072 = vmatprep.mubr.f32.mxu0 0.0
        %4073 = vmatmul.mubr.f32.gmra.mrb[0].mxu0 %v3576
        %v4074 = vpop.f32.mrb[0].mxu0
        %v4075 = vadd.f32 0.0, %v4074
        %v4076 = vpop.f32.mrb[0].mxu0
        %4077 = vmatprep.mubr.f32.mxu0 0.0
        %4078 = vmatmul.mubr.f32.gmra.mrb[0].mxu0 %v3579
        %v4079 = vpop.f32.mrb[0].mxu0
        %v4080 = vadd.f32 0.0, %v4079
        %v4081 = vpop.f32.mrb[0].mxu0
        %4082 = vmatprep.mubr.f32.mxu0 0.0
        %4083 = vmatmul.mubr.f32.gmra.mrb[0].mxu0 %v3582
        %v4084 = vpop.f32.mrb[0].mxu0
        %v4085 = vadd.f32 0.0, %v4084
        %v4086 = vpop.f32.mrb[0].mxu0
        %4087 = vmatprep.mubr.f32.mxu0 0.0
        %4088 = vmatmul.mubr.f32.gmra.mrb[0].mxu0 %v3585
        %v4089 = vpop.f32.mrb[0].mxu0
        %v4090 = vadd.f32 0.0, %v4089
        %v4091 = vpop.f32.mrb[0].mxu0
        %4092 = vmatprep.mubr.f32.mxu0 0.0
        %4093 = vmatmul.mubr.f32.gmra.mrb[0].mxu0 %v3840
        %v4094 = vpop.f32.mrb[0].mxu0
        %v4095 = vadd.f32 0.0, %v4094
        %v4096 = vpop.f32.mrb[0].mxu0
        %4097 = vmatprep.mubr.f32.mxu0 0.0
        %4098 = vmatmul.mubr.f32.gmra.mrb[0].mxu0 %v3983
        %v4099 = vpop.f32.mrb[0].mxu0
        %v4100 = vadd.f32 0.0, %v4099
        %v4101 = vpop.f32.mrb[0].mxu0
        %4102 = vdwg.mxu0
        %v4103 = vadd.f32 %v3960, %v4055
        %v4104 = vadd.f32 %v3961, %v4060
        %v4105 = vadd.f32 %v3962, %v4065
        %v4106 = vadd.f32 %v3963, %v4070
        %v4107 = vadd.f32 %v3964, %v4075
        %v4108 = vadd.f32 %v3965, %v4080
        %v4109 = vadd.f32 %v3966, %v4085
        %v4110 = vadd.f32 %v3967, %v4090
        %v4111 = vadd.f32 %v3968, %v4095
        %v4112 = vadd.f32 %v3969, %v4100
        %s4113 = scalar_lea.vmem %s4, 352
        %v4114 = vld [vmem:[%s4113] sm:$0xff]
        %v4115 = vld [vmem:[%s4113 + $0x8] sm:$0xff]
        %v4116 = vld [vmem:[%s4113 + $0x10] sm:$0xff]
        %v4117 = vld [vmem:[%s4113 + $0x18] sm:$0xff]
        %v4118 = vld [vmem:[%s4113 + $0x20] sm:$0xff]
        %v4119 = vld [vmem:[%s4113 + $0x28] sm:$0xff]
        %v4120 = vld [vmem:[%s4113 + $0x30] sm:$0xff]
        %v4121 = vld [vmem:[%s4113 + $0x38] sm:$0xff]
        %v4122 = vld [vmem:[%s4113 + $0x40] sm:$0xff]
        %v4123 = vld [vmem:[%s4113 + $0x48] sm:$0xff]
        %v4124 = vld [vmem:[%s4113 + $0x50] sm:$0xf]
        %v4126 = vsel %vm3556, %v3532, 0
        %v4129 = vsel %vm3587, %v4124, 0
        %4131 = vmatprep.subr.mxu0 0.0
        %4132 = vmatpush1.msra.mxu0 %v4114
        %4133 = vmatprep.subr.mxu0 0.0
        %4134 = vmatpush1.msra.mxu0 %v4115
        %4135 = vmatprep.subr.mxu0 0.0
        %4136 = vmatpush1.msra.mxu0 %v4116
        %4137 = vmatprep.subr.mxu0 0.0
        %4138 = vmatpush1.msra.mxu0 %v4117
        %4139 = vmatprep.subr.mxu0 0.0
        %4140 = vmatpush1.msra.mxu0 %v4118
        %4141 = vmatprep.subr.mxu0 0.0
        %4142 = vmatpush1.msra.mxu0 %v4119
        %4143 = vmatprep.subr.mxu0 0.0
        %4144 = vmatpush1.msra.mxu0 %v4120
        %4145 = vmatprep.subr.mxu0 0.0
        %4146 = vmatpush1.msra.mxu0 %v4121
        %4147 = vmatprep.subr.mxu0 0.0
        %4148 = vmatpush1.msra.mxu0 %v4122
        %4149 = vmatprep.subr.mxu0 0.0
        %4150 = vmatpush1.msra.mxu0 %v4123
        %4151 = vmatprep.subr.mxu0 0.0
        %4152 = vmatpush1.msra.mxu0 %v4129
        %4153 = vmatprep.subr.mxu0 0.0
        %4154 = vmatpush1.msra.mxu0 0.0
        %4155 = vmatprep.subr.mxu0 0.0
        %4156 = vmatpush1.msra.mxu0 0.0
        %4157 = vmatprep.subr.mxu0 0.0
        %4158 = vmatpush1.msra.mxu0 0.0
        %4159 = vmatprep.subr.mxu0 0.0
        %4160 = vmatpush1.msra.mxu0 0.0
        %4161 = vmatprep.subr.mxu0 0.0
        %4162 = vmatpush1.msra.mxu0 0.0
        %4163 = vmatprep.subr.mxu0 0.0
        %4164 = vmatpush1.msra.mxu0 0.0
        %4165 = vmatprep.subr.mxu0 0.0
        %4166 = vmatpush1.msra.mxu0 0.0
        %4167 = vmatprep.subr.mxu0 0.0
        %4168 = vmatpush1.msra.mxu0 0.0
        %4169 = vmatprep.subr.mxu0 0.0
        %4170 = vmatpush1.msra.mxu0 0.0
        %4171 = vmatprep.subr.mxu0 0.0
        %4172 = vmatpush1.msra.mxu0 0.0
        %4173 = vmatprep.subr.mxu0 0.0
        %4174 = vmatpush1.msra.mxu0 0.0
        %4175 = vmatprep.subr.mxu0 0.0
        %4176 = vmatpush1.msra.mxu0 0.0
        %4177 = vmatprep.subr.mxu0 0.0
        %4178 = vmatpush1.msra.mxu0 0.0
        %4179 = vmatprep.subr.mxu0 0.0
        %4180 = vmatpush1.msra.mxu0 0.0
        %4181 = vmatprep.subr.mxu0 0.0
        %4182 = vmatpush1.msra.mxu0 0.0
        %4183 = vmatprep.subr.mxu0 0.0
        %4184 = vmatpush1.msra.mxu0 0.0
        %4185 = vmatprep.subr.mxu0 0.0
        %4186 = vmatpush1.msra.mxu0 0.0
        %4187 = vmatprep.subr.mxu0 0.0
        %4188 = vmatpush1.msra.mxu0 0.0
        %4189 = vmatprep.subr.mxu0 0.0
        %4190 = vmatpush1.msra.mxu0 0.0
        %4191 = vmatprep.subr.mxu0 0.0
        %4192 = vmatpush1.msra.mxu0 0.0
        %4193 = vmatprep.subr.mxu0 0.0
        %4194 = vmatpush1.msra.mxu0 0.0
        %4195 = vmatprep.mubr.f32.mxu0 0.0
        %4196 = vmatmul.mubr.f32.gmra.mrb[0].mxu0 %v3567
        %v4197 = vpop.f32.mrb[0].mxu0
        %v4198 = vadd.f32 0.0, %v4197
        %v4199 = vpop.f32.mrb[0].mxu0
        %4200 = vmatprep.mubr.f32.mxu0 0.0
        %4201 = vmatmul.mubr.f32.gmra.mrb[0].mxu0 %v3570
        %v4202 = vpop.f32.mrb[0].mxu0
        %v4203 = vadd.f32 0.0, %v4202
        %v4204 = vpop.f32.mrb[0].mxu0
        %4205 = vmatprep.mubr.f32.mxu0 0.0
        %4206 = vmatmul.mubr.f32.gmra.mrb[0].mxu0 %v3573
        %v4207 = vpop.f32.mrb[0].mxu0
        %v4208 = vadd.f32 0.0, %v4207
        %v4209 = vpop.f32.mrb[0].mxu0
        %4210 = vmatprep.mubr.f32.mxu0 0.0
        %4211 = vmatmul.mubr.f32.gmra.mrb[0].mxu0 %v3576
        %v4212 = vpop.f32.mrb[0].mxu0
        %v4213 = vadd.f32 0.0, %v4212
        %v4214 = vpop.f32.mrb[0].mxu0
        %4215 = vmatprep.mubr.f32.mxu0 0.0
        %4216 = vmatmul.mubr.f32.gmra.mrb[0].mxu0 %v3579
        %v4217 = vpop.f32.mrb[0].mxu0
        %v4218 = vadd.f32 0.0, %v4217
        %v4219 = vpop.f32.mrb[0].mxu0
        %4220 = vmatprep.mubr.f32.mxu0 0.0
        %4221 = vmatmul.mubr.f32.gmra.mrb[0].mxu0 %v3582
        %v4222 = vpop.f32.mrb[0].mxu0
        %v4223 = vadd.f32 0.0, %v4222
        %v4224 = vpop.f32.mrb[0].mxu0
        %4225 = vmatprep.mubr.f32.mxu0 0.0
        %4226 = vmatmul.mubr.f32.gmra.mrb[0].mxu0 %v3585
        %v4227 = vpop.f32.mrb[0].mxu0
        %v4228 = vadd.f32 0.0, %v4227
        %v4229 = vpop.f32.mrb[0].mxu0
        %4230 = vmatprep.mubr.f32.mxu0 0.0
        %4231 = vmatmul.mubr.f32.gmra.mrb[0].mxu0 %v3840
        %v4232 = vpop.f32.mrb[0].mxu0
        %v4233 = vadd.f32 0.0, %v4232
        %v4234 = vpop.f32.mrb[0].mxu0
        %4235 = vmatprep.mubr.f32.mxu0 0.0
        %4236 = vmatmul.mubr.f32.gmra.mrb[0].mxu0 %v3983
        %v4237 = vpop.f32.mrb[0].mxu0
        %v4238 = vadd.f32 0.0, %v4237
        %v4239 = vpop.f32.mrb[0].mxu0
        %4240 = vmatprep.mubr.f32.mxu0 0.0
        %4241 = vmatmul.mubr.f32.gmra.mrb[0].mxu0 %v4126
        %v4242 = vpop.f32.mrb[0].mxu0
        %v4243 = vadd.f32 0.0, %v4242
        %v4244 = vpop.f32.mrb[0].mxu0
        %4245 = vdwg.mxu0
        %v4246 = vadd.f32 %v4103, %v4198
        %v4247 = vadd.f32 %v4104, %v4203
        %v4248 = vadd.f32 %v4105, %v4208
        %v4249 = vadd.f32 %v4106, %v4213
        %v4250 = vadd.f32 %v4107, %v4218
        %v4251 = vadd.f32 %v4108, %v4223
        %v4252 = vadd.f32 %v4109, %v4228
        %v4253 = vadd.f32 %v4110, %v4233
        %v4254 = vadd.f32 %v4111, %v4238
        %v4255 = vadd.f32 %v4112, %v4243
        %v4256 = vld [vmem:[%s5] sm:$0xff]
        %v4257 = vld [vmem:[%s5 + $0x8] sm:$0xff]
        %v4258 = vld [vmem:[%s5 + $0x10] sm:$0xff]
        %v4259 = vld [vmem:[%s5 + $0x18] sm:$0xff]
        %v4260 = vld [vmem:[%s5 + $0x20] sm:$0xff]
        %v4261 = vld [vmem:[%s5 + $0x28] sm:$0xff]
        %v4262 = vld [vmem:[%s5 + $0x30] sm:$0xff]
        %v4263 = vld [vmem:[%s5 + $0x38] sm:$0xff]
        %v4264 = vld [vmem:[%s5 + $0x40] sm:$0xff]
        %v4265 = vld [vmem:[%s5 + $0x48] sm:$0xff]
        %v4266 = vld [vmem:[%s5 + $0x50] sm:$0xf]
        %s4267 = scalar_lea.vmem %s5, 88
        %v4268 = vld [vmem:[%s4267] sm:$0xff]
        %v4269 = vld [vmem:[%s4267 + $0x8] sm:$0xff]
        %v4270 = vld [vmem:[%s4267 + $0x10] sm:$0xff]
        %v4271 = vld [vmem:[%s4267 + $0x18] sm:$0xff]
        %v4272 = vld [vmem:[%s4267 + $0x20] sm:$0xff]
        %v4273 = vld [vmem:[%s4267 + $0x28] sm:$0xff]
        %v4274 = vld [vmem:[%s4267 + $0x30] sm:$0xff]
        %v4275 = vld [vmem:[%s4267 + $0x38] sm:$0xff]
        %v4276 = vld [vmem:[%s4267 + $0x40] sm:$0xff]
        %v4277 = vld [vmem:[%s4267 + $0x48] sm:$0xff]
        %v4278 = vld [vmem:[%s4267 + $0x50] sm:$0xf]
        %v4280 = vsel %vm3587, %v4278, 0
        %4282 = vmatprep.subr.mxu0 0.0
        %4283 = vmatpush1.msra.mxu0 %v4268
        %4284 = vmatprep.subr.mxu0 0.0
        %4285 = vmatpush1.msra.mxu0 %v4269
        %4286 = vmatprep.subr.mxu0 0.0
        %4287 = vmatpush1.msra.mxu0 %v4270
        %4288 = vmatprep.subr.mxu0 0.0
        %4289 = vmatpush1.msra.mxu0 %v4271
        %4290 = vmatprep.subr.mxu0 0.0
        %4291 = vmatpush1.msra.mxu0 %v4272
        %4292 = vmatprep.subr.mxu0 0.0
        %4293 = vmatpush1.msra.mxu0 %v4273
        %4294 = vmatprep.subr.mxu0 0.0
        %4295 = vmatpush1.msra.mxu0 %v4274
        %4296 = vmatprep.subr.mxu0 0.0
        %4297 = vmatpush1.msra.mxu0 %v4275
        %4298 = vmatprep.subr.mxu0 0.0
        %4299 = vmatpush1.msra.mxu0 %v4276
        %4300 = vmatprep.subr.mxu0 0.0
        %4301 = vmatpush1.msra.mxu0 %v4277
        %4302 = vmatprep.subr.mxu0 0.0
        %4303 = vmatpush1.msra.mxu0 %v4280
        %4304 = vmatprep.subr.mxu0 0.0
        %4305 = vmatpush1.msra.mxu0 0.0
        %4306 = vmatprep.subr.mxu0 0.0
        %4307 = vmatpush1.msra.mxu0 0.0
        %4308 = vmatprep.subr.mxu0 0.0
        %4309 = vmatpush1.msra.mxu0 0.0
        %4310 = vmatprep.subr.mxu0 0.0
        %4311 = vmatpush1.msra.mxu0 0.0
        %4312 = vmatprep.subr.mxu0 0.0
        %4313 = vmatpush1.msra.mxu0 0.0
        %4314 = vmatprep.subr.mxu0 0.0
        %4315 = vmatpush1.msra.mxu0 0.0
        %4316 = vmatprep.subr.mxu0 0.0
        %4317 = vmatpush1.msra.mxu0 0.0
        %4318 = vmatprep.subr.mxu0 0.0
        %4319 = vmatpush1.msra.mxu0 0.0
        %4320 = vmatprep.subr.mxu0 0.0
        %4321 = vmatpush1.msra.mxu0 0.0
        %4322 = vmatprep.subr.mxu0 0.0
        %4323 = vmatpush1.msra.mxu0 0.0
        %4324 = vmatprep.subr.mxu0 0.0
        %4325 = vmatpush1.msra.mxu0 0.0
        %4326 = vmatprep.subr.mxu0 0.0
        %4327 = vmatpush1.msra.mxu0 0.0
        %4328 = vmatprep.subr.mxu0 0.0
        %4329 = vmatpush1.msra.mxu0 0.0
        %4330 = vmatprep.subr.mxu0 0.0
        %4331 = vmatpush1.msra.mxu0 0.0
        %4332 = vmatprep.subr.mxu0 0.0
        %4333 = vmatpush1.msra.mxu0 0.0
        %4334 = vmatprep.subr.mxu0 0.0
        %4335 = vmatpush1.msra.mxu0 0.0
        %4336 = vmatprep.subr.mxu0 0.0
        %4337 = vmatpush1.msra.mxu0 0.0
        %4338 = vmatprep.subr.mxu0 0.0
        %4339 = vmatpush1.msra.mxu0 0.0
        %4340 = vmatprep.subr.mxu0 0.0
        %4341 = vmatpush1.msra.mxu0 0.0
        %4342 = vmatprep.subr.mxu0 0.0
        %4343 = vmatpush1.msra.mxu0 0.0
        %4344 = vmatprep.subr.mxu0 0.0
        %4345 = vmatpush1.msra.mxu0 0.0
        %4346 = vmatprep.mubr.f32.mxu0 0.0
        %4347 = vmatmul.mubr.f32.gmra.mrb[0].mxu0 %v3558
        %v4348 = vpop.f32.mrb[0].mxu0
        %v4349 = vadd.f32 0.0, %v4348
        %v4350 = vpop.f32.mrb[0].mxu0
        %4351 = vmatprep.mubr.f32.mxu0 0.0
        %4352 = vmatmul.mubr.f32.gmra.mrb[0].mxu0 %v3561
        %v4353 = vpop.f32.mrb[0].mxu0
        %v4354 = vadd.f32 0.0, %v4353
        %v4355 = vpop.f32.mrb[0].mxu0
        %4356 = vmatprep.mubr.f32.mxu0 0.0
        %4357 = vmatmul.mubr.f32.gmra.mrb[0].mxu0 %v3564
        %v4358 = vpop.f32.mrb[0].mxu0
        %v4359 = vadd.f32 0.0, %v4358
        %v4360 = vpop.f32.mrb[0].mxu0
        %4361 = vmatprep.mubr.f32.mxu0 0.0
        %4362 = vmatmul.mubr.f32.gmra.mrb[0].mxu0 %v3567
        %v4363 = vpop.f32.mrb[0].mxu0
        %v4364 = vadd.f32 0.0, %v4363
        %v4365 = vpop.f32.mrb[0].mxu0
        %4366 = vmatprep.mubr.f32.mxu0 0.0
        %4367 = vmatmul.mubr.f32.gmra.mrb[0].mxu0 %v3570
        %v4368 = vpop.f32.mrb[0].mxu0
        %v4369 = vadd.f32 0.0, %v4368
        %v4370 = vpop.f32.mrb[0].mxu0
        %4371 = vmatprep.mubr.f32.mxu0 0.0
        %4372 = vmatmul.mubr.f32.gmra.mrb[0].mxu0 %v3573
        %v4373 = vpop.f32.mrb[0].mxu0
        %v4374 = vadd.f32 0.0, %v4373
        %v4375 = vpop.f32.mrb[0].mxu0
        %4376 = vmatprep.mubr.f32.mxu0 0.0
        %4377 = vmatmul.mubr.f32.gmra.mrb[0].mxu0 %v3576
        %v4378 = vpop.f32.mrb[0].mxu0
        %v4379 = vadd.f32 0.0, %v4378
        %v4380 = vpop.f32.mrb[0].mxu0
        %4381 = vmatprep.mubr.f32.mxu0 0.0
        %4382 = vmatmul.mubr.f32.gmra.mrb[0].mxu0 %v3579
        %v4383 = vpop.f32.mrb[0].mxu0
        %v4384 = vadd.f32 0.0, %v4383
        %v4385 = vpop.f32.mrb[0].mxu0
        %4386 = vmatprep.mubr.f32.mxu0 0.0
        %4387 = vmatmul.mubr.f32.gmra.mrb[0].mxu0 %v3582
        %v4388 = vpop.f32.mrb[0].mxu0
        %v4389 = vadd.f32 0.0, %v4388
        %v4390 = vpop.f32.mrb[0].mxu0
        %4391 = vmatprep.mubr.f32.mxu0 0.0
        %4392 = vmatmul.mubr.f32.gmra.mrb[0].mxu0 %v3585
        %v4393 = vpop.f32.mrb[0].mxu0
        %v4394 = vadd.f32 0.0, %v4393
        %v4395 = vpop.f32.mrb[0].mxu0
        %4396 = vdwg.mxu0
        %v4398 = vsel %vm3587, %v4266, 0
        %4400 = vmatprep.subr.mxu0 0.0
        %4401 = vmatpush1.msra.mxu0 %v4256
        %4402 = vmatprep.subr.mxu0 0.0
        %4403 = vmatpush1.msra.mxu0 %v4257
        %4404 = vmatprep.subr.mxu0 0.0
        %4405 = vmatpush1.msra.mxu0 %v4258
        %4406 = vmatprep.subr.mxu0 0.0
        %4407 = vmatpush1.msra.mxu0 %v4259
        %4408 = vmatprep.subr.mxu0 0.0
        %4409 = vmatpush1.msra.mxu0 %v4260
        %4410 = vmatprep.subr.mxu0 0.0
        %4411 = vmatpush1.msra.mxu0 %v4261
        %4412 = vmatprep.subr.mxu0 0.0
        %4413 = vmatpush1.msra.mxu0 %v4262
        %4414 = vmatprep.subr.mxu0 0.0
        %4415 = vmatpush1.msra.mxu0 %v4263
        %4416 = vmatprep.subr.mxu0 0.0
        %4417 = vmatpush1.msra.mxu0 %v4264
        %4418 = vmatprep.subr.mxu0 0.0
        %4419 = vmatpush1.msra.mxu0 %v4265
        %4420 = vmatprep.subr.mxu0 0.0
        %4421 = vmatpush1.msra.mxu0 %v4398
        %4422 = vmatprep.subr.mxu0 0.0
        %4423 = vmatpush1.msra.mxu0 0.0
        %4424 = vmatprep.subr.mxu0 0.0
        %4425 = vmatpush1.msra.mxu0 0.0
        %4426 = vmatprep.subr.mxu0 0.0
        %4427 = vmatpush1.msra.mxu0 0.0
        %4428 = vmatprep.subr.mxu0 0.0
        %4429 = vmatpush1.msra.mxu0 0.0
        %4430 = vmatprep.subr.mxu0 0.0
        %4431 = vmatpush1.msra.mxu0 0.0
        %4432 = vmatprep.subr.mxu0 0.0
        %4433 = vmatpush1.msra.mxu0 0.0
        %4434 = vmatprep.subr.mxu0 0.0
        %4435 = vmatpush1.msra.mxu0 0.0
        %4436 = vmatprep.subr.mxu0 0.0
        %4437 = vmatpush1.msra.mxu0 0.0
        %4438 = vmatprep.subr.mxu0 0.0
        %4439 = vmatpush1.msra.mxu0 0.0
        %4440 = vmatprep.subr.mxu0 0.0
        %4441 = vmatpush1.msra.mxu0 0.0
        %4442 = vmatprep.subr.mxu0 0.0
        %4443 = vmatpush1.msra.mxu0 0.0
        %4444 = vmatprep.subr.mxu0 0.0
        %4445 = vmatpush1.msra.mxu0 0.0
        %4446 = vmatprep.subr.mxu0 0.0
        %4447 = vmatpush1.msra.mxu0 0.0
        %4448 = vmatprep.subr.mxu0 0.0
        %4449 = vmatpush1.msra.mxu0 0.0
        %4450 = vmatprep.subr.mxu0 0.0
        %4451 = vmatpush1.msra.mxu0 0.0
        %4452 = vmatprep.subr.mxu0 0.0
        %4453 = vmatpush1.msra.mxu0 0.0
        %4454 = vmatprep.subr.mxu0 0.0
        %4455 = vmatpush1.msra.mxu0 0.0
        %4456 = vmatprep.subr.mxu0 0.0
        %4457 = vmatpush1.msra.mxu0 0.0
        %4458 = vmatprep.subr.mxu0 0.0
        %4459 = vmatpush1.msra.mxu0 0.0
        %4460 = vmatprep.subr.mxu0 0.0
        %4461 = vmatpush1.msra.mxu0 0.0
        %4462 = vmatprep.subr.mxu0 0.0
        %4463 = vmatpush1.msra.mxu0 0.0
        %4464 = vmatprep.mubr.f32.mxu0 0.0
        %4465 = vmatmul.mubr.f32.gmra.mrb[0].mxu0 %v3707
        %v4466 = vpop.f32.mrb[0].mxu0
        %v4467 = vadd.f32 %v4349, %v4466
        %v4468 = vpop.f32.mrb[0].mxu0
        %4469 = vmatprep.mubr.f32.mxu0 0.0
        %4470 = vmatmul.mubr.f32.gmra.mrb[0].mxu0 %v3558
        %v4471 = vpop.f32.mrb[0].mxu0
        %v4472 = vadd.f32 %v4354, %v4471
        %v4473 = vpop.f32.mrb[0].mxu0
        %4474 = vmatprep.mubr.f32.mxu0 0.0
        %4475 = vmatmul.mubr.f32.gmra.mrb[0].mxu0 %v3561
        %v4476 = vpop.f32.mrb[0].mxu0
        %v4477 = vadd.f32 %v4359, %v4476
        %v4478 = vpop.f32.mrb[0].mxu0
        %4479 = vmatprep.mubr.f32.mxu0 0.0
        %4480 = vmatmul.mubr.f32.gmra.mrb[0].mxu0 %v3564
        %v4481 = vpop.f32.mrb[0].mxu0
        %v4482 = vadd.f32 %v4364, %v4481
        %v4483 = vpop.f32.mrb[0].mxu0
        %4484 = vmatprep.mubr.f32.mxu0 0.0
        %4485 = vmatmul.mubr.f32.gmra.mrb[0].mxu0 %v3567
        %v4486 = vpop.f32.mrb[0].mxu0
        %v4487 = vadd.f32 %v4369, %v4486
        %v4488 = vpop.f32.mrb[0].mxu0
        %4489 = vmatprep.mubr.f32.mxu0 0.0
        %4490 = vmatmul.mubr.f32.gmra.mrb[0].mxu0 %v3570
        %v4491 = vpop.f32.mrb[0].mxu0
        %v4492 = vadd.f32 %v4374, %v4491
        %v4493 = vpop.f32.mrb[0].mxu0
        %4494 = vmatprep.mubr.f32.mxu0 0.0
        %4495 = vmatmul.mubr.f32.gmra.mrb[0].mxu0 %v3573
        %v4496 = vpop.f32.mrb[0].mxu0
        %v4497 = vadd.f32 %v4379, %v4496
        %v4498 = vpop.f32.mrb[0].mxu0
        %4499 = vmatprep.mubr.f32.mxu0 0.0
        %4500 = vmatmul.mubr.f32.gmra.mrb[0].mxu0 %v3576
        %v4501 = vpop.f32.mrb[0].mxu0
        %v4502 = vadd.f32 %v4384, %v4501
        %v4503 = vpop.f32.mrb[0].mxu0
        %4504 = vmatprep.mubr.f32.mxu0 0.0
        %4505 = vmatmul.mubr.f32.gmra.mrb[0].mxu0 %v3579
        %v4506 = vpop.f32.mrb[0].mxu0
        %v4507 = vadd.f32 %v4389, %v4506
        %v4508 = vpop.f32.mrb[0].mxu0
        %4509 = vmatprep.mubr.f32.mxu0 0.0
        %4510 = vmatmul.mubr.f32.gmra.mrb[0].mxu0 %v3582
        %v4511 = vpop.f32.mrb[0].mxu0
        %v4512 = vadd.f32 %v4394, %v4511
        %v4513 = vpop.f32.mrb[0].mxu0
        %4514 = vdwg.mxu0
        %s4515 = scalar_lea.vmem %s5, 176
        %v4516 = vld [vmem:[%s4515] sm:$0xff]
        %v4517 = vld [vmem:[%s4515 + $0x8] sm:$0xff]
        %v4518 = vld [vmem:[%s4515 + $0x10] sm:$0xff]
        %v4519 = vld [vmem:[%s4515 + $0x18] sm:$0xff]
        %v4520 = vld [vmem:[%s4515 + $0x20] sm:$0xff]
        %v4521 = vld [vmem:[%s4515 + $0x28] sm:$0xff]
        %v4522 = vld [vmem:[%s4515 + $0x30] sm:$0xff]
        %v4523 = vld [vmem:[%s4515 + $0x38] sm:$0xff]
        %v4524 = vld [vmem:[%s4515 + $0x40] sm:$0xff]
        %v4525 = vld [vmem:[%s4515 + $0x48] sm:$0xff]
        %v4526 = vld [vmem:[%s4515 + $0x50] sm:$0xf]
        %v4528 = vsel %vm3587, %v4526, 0
        %4530 = vmatprep.subr.mxu0 0.0
        %4531 = vmatpush1.msra.mxu0 %v4516
        %4532 = vmatprep.subr.mxu0 0.0
        %4533 = vmatpush1.msra.mxu0 %v4517
        %4534 = vmatprep.subr.mxu0 0.0
        %4535 = vmatpush1.msra.mxu0 %v4518
        %4536 = vmatprep.subr.mxu0 0.0
        %4537 = vmatpush1.msra.mxu0 %v4519
        %4538 = vmatprep.subr.mxu0 0.0
        %4539 = vmatpush1.msra.mxu0 %v4520
        %4540 = vmatprep.subr.mxu0 0.0
        %4541 = vmatpush1.msra.mxu0 %v4521
        %4542 = vmatprep.subr.mxu0 0.0
        %4543 = vmatpush1.msra.mxu0 %v4522
        %4544 = vmatprep.subr.mxu0 0.0
        %4545 = vmatpush1.msra.mxu0 %v4523
        %4546 = vmatprep.subr.mxu0 0.0
        %4547 = vmatpush1.msra.mxu0 %v4524
        %4548 = vmatprep.subr.mxu0 0.0
        %4549 = vmatpush1.msra.mxu0 %v4525
        %4550 = vmatprep.subr.mxu0 0.0
        %4551 = vmatpush1.msra.mxu0 %v4528
        %4552 = vmatprep.subr.mxu0 0.0
        %4553 = vmatpush1.msra.mxu0 0.0
        %4554 = vmatprep.subr.mxu0 0.0
        %4555 = vmatpush1.msra.mxu0 0.0
        %4556 = vmatprep.subr.mxu0 0.0
        %4557 = vmatpush1.msra.mxu0 0.0
        %4558 = vmatprep.subr.mxu0 0.0
        %4559 = vmatpush1.msra.mxu0 0.0
        %4560 = vmatprep.subr.mxu0 0.0
        %4561 = vmatpush1.msra.mxu0 0.0
        %4562 = vmatprep.subr.mxu0 0.0
        %4563 = vmatpush1.msra.mxu0 0.0
        %4564 = vmatprep.subr.mxu0 0.0
        %4565 = vmatpush1.msra.mxu0 0.0
        %4566 = vmatprep.subr.mxu0 0.0
        %4567 = vmatpush1.msra.mxu0 0.0
        %4568 = vmatprep.subr.mxu0 0.0
        %4569 = vmatpush1.msra.mxu0 0.0
        %4570 = vmatprep.subr.mxu0 0.0
        %4571 = vmatpush1.msra.mxu0 0.0
        %4572 = vmatprep.subr.mxu0 0.0
        %4573 = vmatpush1.msra.mxu0 0.0
        %4574 = vmatprep.subr.mxu0 0.0
        %4575 = vmatpush1.msra.mxu0 0.0
        %4576 = vmatprep.subr.mxu0 0.0
        %4577 = vmatpush1.msra.mxu0 0.0
        %4578 = vmatprep.subr.mxu0 0.0
        %4579 = vmatpush1.msra.mxu0 0.0
        %4580 = vmatprep.subr.mxu0 0.0
        %4581 = vmatpush1.msra.mxu0 0.0
        %4582 = vmatprep.subr.mxu0 0.0
        %4583 = vmatpush1.msra.mxu0 0.0
        %4584 = vmatprep.subr.mxu0 0.0
        %4585 = vmatpush1.msra.mxu0 0.0
        %4586 = vmatprep.subr.mxu0 0.0
        %4587 = vmatpush1.msra.mxu0 0.0
        %4588 = vmatprep.subr.mxu0 0.0
        %4589 = vmatpush1.msra.mxu0 0.0
        %4590 = vmatprep.subr.mxu0 0.0
        %4591 = vmatpush1.msra.mxu0 0.0
        %4592 = vmatprep.subr.mxu0 0.0
        %4593 = vmatpush1.msra.mxu0 0.0
        %4594 = vmatprep.mubr.f32.mxu0 0.0
        %4595 = vmatmul.mubr.f32.gmra.mrb[0].mxu0 %v3561
        %v4596 = vpop.f32.mrb[0].mxu0
        %v4597 = vadd.f32 0.0, %v4596
        %v4598 = vpop.f32.mrb[0].mxu0
        %4599 = vmatprep.mubr.f32.mxu0 0.0
        %4600 = vmatmul.mubr.f32.gmra.mrb[0].mxu0 %v3564
        %v4601 = vpop.f32.mrb[0].mxu0
        %v4602 = vadd.f32 0.0, %v4601
        %v4603 = vpop.f32.mrb[0].mxu0
        %4604 = vmatprep.mubr.f32.mxu0 0.0
        %4605 = vmatmul.mubr.f32.gmra.mrb[0].mxu0 %v3567
        %v4606 = vpop.f32.mrb[0].mxu0
        %v4607 = vadd.f32 0.0, %v4606
        %v4608 = vpop.f32.mrb[0].mxu0
        %4609 = vmatprep.mubr.f32.mxu0 0.0
        %4610 = vmatmul.mubr.f32.gmra.mrb[0].mxu0 %v3570
        %v4611 = vpop.f32.mrb[0].mxu0
        %v4612 = vadd.f32 0.0, %v4611
        %v4613 = vpop.f32.mrb[0].mxu0
        %4614 = vmatprep.mubr.f32.mxu0 0.0
        %4615 = vmatmul.mubr.f32.gmra.mrb[0].mxu0 %v3573
        %v4616 = vpop.f32.mrb[0].mxu0
        %v4617 = vadd.f32 0.0, %v4616
        %v4618 = vpop.f32.mrb[0].mxu0
        %4619 = vmatprep.mubr.f32.mxu0 0.0
        %4620 = vmatmul.mubr.f32.gmra.mrb[0].mxu0 %v3576
        %v4621 = vpop.f32.mrb[0].mxu0
        %v4622 = vadd.f32 0.0, %v4621
        %v4623 = vpop.f32.mrb[0].mxu0
        %4624 = vmatprep.mubr.f32.mxu0 0.0
        %4625 = vmatmul.mubr.f32.gmra.mrb[0].mxu0 %v3579
        %v4626 = vpop.f32.mrb[0].mxu0
        %v4627 = vadd.f32 0.0, %v4626
        %v4628 = vpop.f32.mrb[0].mxu0
        %4629 = vmatprep.mubr.f32.mxu0 0.0
        %4630 = vmatmul.mubr.f32.gmra.mrb[0].mxu0 %v3582
        %v4631 = vpop.f32.mrb[0].mxu0
        %v4632 = vadd.f32 0.0, %v4631
        %v4633 = vpop.f32.mrb[0].mxu0
        %4634 = vmatprep.mubr.f32.mxu0 0.0
        %4635 = vmatmul.mubr.f32.gmra.mrb[0].mxu0 %v3585
        %v4636 = vpop.f32.mrb[0].mxu0
        %v4637 = vadd.f32 0.0, %v4636
        %v4638 = vpop.f32.mrb[0].mxu0
        %4639 = vmatprep.mubr.f32.mxu0 0.0
        %4640 = vmatmul.mubr.f32.gmra.mrb[0].mxu0 %v3840
        %v4641 = vpop.f32.mrb[0].mxu0
        %v4642 = vadd.f32 0.0, %v4641
        %v4643 = vpop.f32.mrb[0].mxu0
        %4644 = vdwg.mxu0
        %v4645 = vadd.f32 %v4467, %v4597
        %v4646 = vadd.f32 %v4472, %v4602
        %v4647 = vadd.f32 %v4477, %v4607
        %v4648 = vadd.f32 %v4482, %v4612
        %v4649 = vadd.f32 %v4487, %v4617
        %v4650 = vadd.f32 %v4492, %v4622
        %v4651 = vadd.f32 %v4497, %v4627
        %v4652 = vadd.f32 %v4502, %v4632
        %v4653 = vadd.f32 %v4507, %v4637
        %v4654 = vadd.f32 %v4512, %v4642
        %s4655 = scalar_lea.vmem %s5, 264
        %v4656 = vld [vmem:[%s4655] sm:$0xff]
        %v4657 = vld [vmem:[%s4655 + $0x8] sm:$0xff]
        %v4658 = vld [vmem:[%s4655 + $0x10] sm:$0xff]
        %v4659 = vld [vmem:[%s4655 + $0x18] sm:$0xff]
        %v4660 = vld [vmem:[%s4655 + $0x20] sm:$0xff]
        %v4661 = vld [vmem:[%s4655 + $0x28] sm:$0xff]
        %v4662 = vld [vmem:[%s4655 + $0x30] sm:$0xff]
        %v4663 = vld [vmem:[%s4655 + $0x38] sm:$0xff]
        %v4664 = vld [vmem:[%s4655 + $0x40] sm:$0xff]
        %v4665 = vld [vmem:[%s4655 + $0x48] sm:$0xff]
        %v4666 = vld [vmem:[%s4655 + $0x50] sm:$0xf]
        %v4668 = vsel %vm3587, %v4666, 0
        %4670 = vmatprep.subr.mxu0 0.0
        %4671 = vmatpush1.msra.mxu0 %v4656
        %4672 = vmatprep.subr.mxu0 0.0
        %4673 = vmatpush1.msra.mxu0 %v4657
        %4674 = vmatprep.subr.mxu0 0.0
        %4675 = vmatpush1.msra.mxu0 %v4658
        %4676 = vmatprep.subr.mxu0 0.0
        %4677 = vmatpush1.msra.mxu0 %v4659
        %4678 = vmatprep.subr.mxu0 0.0
        %4679 = vmatpush1.msra.mxu0 %v4660
        %4680 = vmatprep.subr.mxu0 0.0
        %4681 = vmatpush1.msra.mxu0 %v4661
        %4682 = vmatprep.subr.mxu0 0.0
        %4683 = vmatpush1.msra.mxu0 %v4662
        %4684 = vmatprep.subr.mxu0 0.0
        %4685 = vmatpush1.msra.mxu0 %v4663
        %4686 = vmatprep.subr.mxu0 0.0
        %4687 = vmatpush1.msra.mxu0 %v4664
        %4688 = vmatprep.subr.mxu0 0.0
        %4689 = vmatpush1.msra.mxu0 %v4665
        %4690 = vmatprep.subr.mxu0 0.0
        %4691 = vmatpush1.msra.mxu0 %v4668
        %4692 = vmatprep.subr.mxu0 0.0
        %4693 = vmatpush1.msra.mxu0 0.0
        %4694 = vmatprep.subr.mxu0 0.0
        %4695 = vmatpush1.msra.mxu0 0.0
        %4696 = vmatprep.subr.mxu0 0.0
        %4697 = vmatpush1.msra.mxu0 0.0
        %4698 = vmatprep.subr.mxu0 0.0
        %4699 = vmatpush1.msra.mxu0 0.0
        %4700 = vmatprep.subr.mxu0 0.0
        %4701 = vmatpush1.msra.mxu0 0.0
        %4702 = vmatprep.subr.mxu0 0.0
        %4703 = vmatpush1.msra.mxu0 0.0
        %4704 = vmatprep.subr.mxu0 0.0
        %4705 = vmatpush1.msra.mxu0 0.0
        %4706 = vmatprep.subr.mxu0 0.0
        %4707 = vmatpush1.msra.mxu0 0.0
        %4708 = vmatprep.subr.mxu0 0.0
        %4709 = vmatpush1.msra.mxu0 0.0
        %4710 = vmatprep.subr.mxu0 0.0
        %4711 = vmatpush1.msra.mxu0 0.0
        %4712 = vmatprep.subr.mxu0 0.0
        %4713 = vmatpush1.msra.mxu0 0.0
        %4714 = vmatprep.subr.mxu0 0.0
        %4715 = vmatpush1.msra.mxu0 0.0
        %4716 = vmatprep.subr.mxu0 0.0
        %4717 = vmatpush1.msra.mxu0 0.0
        %4718 = vmatprep.subr.mxu0 0.0
        %4719 = vmatpush1.msra.mxu0 0.0
        %4720 = vmatprep.subr.mxu0 0.0
        %4721 = vmatpush1.msra.mxu0 0.0
        %4722 = vmatprep.subr.mxu0 0.0
        %4723 = vmatpush1.msra.mxu0 0.0
        %4724 = vmatprep.subr.mxu0 0.0
        %4725 = vmatpush1.msra.mxu0 0.0
        %4726 = vmatprep.subr.mxu0 0.0
        %4727 = vmatpush1.msra.mxu0 0.0
        %4728 = vmatprep.subr.mxu0 0.0
        %4729 = vmatpush1.msra.mxu0 0.0
        %4730 = vmatprep.subr.mxu0 0.0
        %4731 = vmatpush1.msra.mxu0 0.0
        %4732 = vmatprep.subr.mxu0 0.0
        %4733 = vmatpush1.msra.mxu0 0.0
        %4734 = vmatprep.mubr.f32.mxu0 0.0
        %4735 = vmatmul.mubr.f32.gmra.mrb[0].mxu0 %v3564
        %v4736 = vpop.f32.mrb[0].mxu0
        %v4737 = vadd.f32 0.0, %v4736
        %v4738 = vpop.f32.mrb[0].mxu0
        %4739 = vmatprep.mubr.f32.mxu0 0.0
        %4740 = vmatmul.mubr.f32.gmra.mrb[0].mxu0 %v3567
        %v4741 = vpop.f32.mrb[0].mxu0
        %v4742 = vadd.f32 0.0, %v4741
        %v4743 = vpop.f32.mrb[0].mxu0
        %4744 = vmatprep.mubr.f32.mxu0 0.0
        %4745 = vmatmul.mubr.f32.gmra.mrb[0].mxu0 %v3570
        %v4746 = vpop.f32.mrb[0].mxu0
        %v4747 = vadd.f32 0.0, %v4746
        %v4748 = vpop.f32.mrb[0].mxu0
        %4749 = vmatprep.mubr.f32.mxu0 0.0
        %4750 = vmatmul.mubr.f32.gmra.mrb[0].mxu0 %v3573
        %v4751 = vpop.f32.mrb[0].mxu0
        %v4752 = vadd.f32 0.0, %v4751
        %v4753 = vpop.f32.mrb[0].mxu0
        %4754 = vmatprep.mubr.f32.mxu0 0.0
        %4755 = vmatmul.mubr.f32.gmra.mrb[0].mxu0 %v3576
        %v4756 = vpop.f32.mrb[0].mxu0
        %v4757 = vadd.f32 0.0, %v4756
        %v4758 = vpop.f32.mrb[0].mxu0
        %4759 = vmatprep.mubr.f32.mxu0 0.0
        %4760 = vmatmul.mubr.f32.gmra.mrb[0].mxu0 %v3579
        %v4761 = vpop.f32.mrb[0].mxu0
        %v4762 = vadd.f32 0.0, %v4761
        %v4763 = vpop.f32.mrb[0].mxu0
        %4764 = vmatprep.mubr.f32.mxu0 0.0
        %4765 = vmatmul.mubr.f32.gmra.mrb[0].mxu0 %v3582
        %v4766 = vpop.f32.mrb[0].mxu0
        %v4767 = vadd.f32 0.0, %v4766
        %v4768 = vpop.f32.mrb[0].mxu0
        %4769 = vmatprep.mubr.f32.mxu0 0.0
        %4770 = vmatmul.mubr.f32.gmra.mrb[0].mxu0 %v3585
        %v4771 = vpop.f32.mrb[0].mxu0
        %v4772 = vadd.f32 0.0, %v4771
        %v4773 = vpop.f32.mrb[0].mxu0
        %4774 = vmatprep.mubr.f32.mxu0 0.0
        %4775 = vmatmul.mubr.f32.gmra.mrb[0].mxu0 %v3840
        %v4776 = vpop.f32.mrb[0].mxu0
        %v4777 = vadd.f32 0.0, %v4776
        %v4778 = vpop.f32.mrb[0].mxu0
        %4779 = vmatprep.mubr.f32.mxu0 0.0
        %4780 = vmatmul.mubr.f32.gmra.mrb[0].mxu0 %v3983
        %v4781 = vpop.f32.mrb[0].mxu0
        %v4782 = vadd.f32 0.0, %v4781
        %v4783 = vpop.f32.mrb[0].mxu0
        %4784 = vdwg.mxu0
        %v4785 = vadd.f32 %v4645, %v4737
        %v4786 = vadd.f32 %v4646, %v4742
        %v4787 = vadd.f32 %v4647, %v4747
        %v4788 = vadd.f32 %v4648, %v4752
        %v4789 = vadd.f32 %v4649, %v4757
        %v4790 = vadd.f32 %v4650, %v4762
        %v4791 = vadd.f32 %v4651, %v4767
        %v4792 = vadd.f32 %v4652, %v4772
        %v4793 = vadd.f32 %v4653, %v4777
        %v4794 = vadd.f32 %v4654, %v4782
        %s4795 = scalar_lea.vmem %s5, 352
        %v4796 = vld [vmem:[%s4795] sm:$0xff]
        %v4797 = vld [vmem:[%s4795 + $0x8] sm:$0xff]
        %v4798 = vld [vmem:[%s4795 + $0x10] sm:$0xff]
        %v4799 = vld [vmem:[%s4795 + $0x18] sm:$0xff]
        %v4800 = vld [vmem:[%s4795 + $0x20] sm:$0xff]
        %v4801 = vld [vmem:[%s4795 + $0x28] sm:$0xff]
        %v4802 = vld [vmem:[%s4795 + $0x30] sm:$0xff]
        %v4803 = vld [vmem:[%s4795 + $0x38] sm:$0xff]
        %v4804 = vld [vmem:[%s4795 + $0x40] sm:$0xff]
        %v4805 = vld [vmem:[%s4795 + $0x48] sm:$0xff]
        %v4806 = vld [vmem:[%s4795 + $0x50] sm:$0xf]
        %v4808 = vsel %vm3587, %v4806, 0
        %4810 = vmatprep.subr.mxu0 0.0
        %4811 = vmatpush1.msra.mxu0 %v4796
        %4812 = vmatprep.subr.mxu0 0.0
        %4813 = vmatpush1.msra.mxu0 %v4797
        %4814 = vmatprep.subr.mxu0 0.0
        %4815 = vmatpush1.msra.mxu0 %v4798
        %4816 = vmatprep.subr.mxu0 0.0
        %4817 = vmatpush1.msra.mxu0 %v4799
        %4818 = vmatprep.subr.mxu0 0.0
        %4819 = vmatpush1.msra.mxu0 %v4800
        %4820 = vmatprep.subr.mxu0 0.0
        %4821 = vmatpush1.msra.mxu0 %v4801
        %4822 = vmatprep.subr.mxu0 0.0
        %4823 = vmatpush1.msra.mxu0 %v4802
        %4824 = vmatprep.subr.mxu0 0.0
        %4825 = vmatpush1.msra.mxu0 %v4803
        %4826 = vmatprep.subr.mxu0 0.0
        %4827 = vmatpush1.msra.mxu0 %v4804
        %4828 = vmatprep.subr.mxu0 0.0
        %4829 = vmatpush1.msra.mxu0 %v4805
        %4830 = vmatprep.subr.mxu0 0.0
        %4831 = vmatpush1.msra.mxu0 %v4808
        %4832 = vmatprep.subr.mxu0 0.0
        %4833 = vmatpush1.msra.mxu0 0.0
        %4834 = vmatprep.subr.mxu0 0.0
        %4835 = vmatpush1.msra.mxu0 0.0
        %4836 = vmatprep.subr.mxu0 0.0
        %4837 = vmatpush1.msra.mxu0 0.0
        %4838 = vmatprep.subr.mxu0 0.0
        %4839 = vmatpush1.msra.mxu0 0.0
        %4840 = vmatprep.subr.mxu0 0.0
        %4841 = vmatpush1.msra.mxu0 0.0
        %4842 = vmatprep.subr.mxu0 0.0
        %4843 = vmatpush1.msra.mxu0 0.0
        %4844 = vmatprep.subr.mxu0 0.0
        %4845 = vmatpush1.msra.mxu0 0.0
        %4846 = vmatprep.subr.mxu0 0.0
        %4847 = vmatpush1.msra.mxu0 0.0
        %4848 = vmatprep.subr.mxu0 0.0
        %4849 = vmatpush1.msra.mxu0 0.0
        %4850 = vmatprep.subr.mxu0 0.0
        %4851 = vmatpush1.msra.mxu0 0.0
        %4852 = vmatprep.subr.mxu0 0.0
        %4853 = vmatpush1.msra.mxu0 0.0
        %4854 = vmatprep.subr.mxu0 0.0
        %4855 = vmatpush1.msra.mxu0 0.0
        %4856 = vmatprep.subr.mxu0 0.0
        %4857 = vmatpush1.msra.mxu0 0.0
        %4858 = vmatprep.subr.mxu0 0.0
        %4859 = vmatpush1.msra.mxu0 0.0
        %4860 = vmatprep.subr.mxu0 0.0
        %4861 = vmatpush1.msra.mxu0 0.0
        %4862 = vmatprep.subr.mxu0 0.0
        %4863 = vmatpush1.msra.mxu0 0.0
        %4864 = vmatprep.subr.mxu0 0.0
        %4865 = vmatpush1.msra.mxu0 0.0
        %4866 = vmatprep.subr.mxu0 0.0
        %4867 = vmatpush1.msra.mxu0 0.0
        %4868 = vmatprep.subr.mxu0 0.0
        %4869 = vmatpush1.msra.mxu0 0.0
        %4870 = vmatprep.subr.mxu0 0.0
        %4871 = vmatpush1.msra.mxu0 0.0
        %4872 = vmatprep.subr.mxu0 0.0
        %4873 = vmatpush1.msra.mxu0 0.0
        %4874 = vmatprep.mubr.f32.mxu0 0.0
        %4875 = vmatmul.mubr.f32.gmra.mrb[0].mxu0 %v3567
        %v4876 = vpop.f32.mrb[0].mxu0
        %v4877 = vadd.f32 0.0, %v4876
        %v4878 = vpop.f32.mrb[0].mxu0
        %4879 = vmatprep.mubr.f32.mxu0 0.0
        %4880 = vmatmul.mubr.f32.gmra.mrb[0].mxu0 %v3570
        %v4881 = vpop.f32.mrb[0].mxu0
        %v4882 = vadd.f32 0.0, %v4881
        %v4883 = vpop.f32.mrb[0].mxu0
        %4884 = vmatprep.mubr.f32.mxu0 0.0
        %4885 = vmatmul.mubr.f32.gmra.mrb[0].mxu0 %v3573
        %v4886 = vpop.f32.mrb[0].mxu0
        %v4887 = vadd.f32 0.0, %v4886
        %v4888 = vpop.f32.mrb[0].mxu0
        %4889 = vmatprep.mubr.f32.mxu0 0.0
        %4890 = vmatmul.mubr.f32.gmra.mrb[0].mxu0 %v3576
        %v4891 = vpop.f32.mrb[0].mxu0
        %v4892 = vadd.f32 0.0, %v4891
        %v4893 = vpop.f32.mrb[0].mxu0
        %4894 = vmatprep.mubr.f32.mxu0 0.0
        %4895 = vmatmul.mubr.f32.gmra.mrb[0].mxu0 %v3579
        %v4896 = vpop.f32.mrb[0].mxu0
        %v4897 = vadd.f32 0.0, %v4896
        %v4898 = vpop.f32.mrb[0].mxu0
        %4899 = vmatprep.mubr.f32.mxu0 0.0
        %4900 = vmatmul.mubr.f32.gmra.mrb[0].mxu0 %v3582
        %v4901 = vpop.f32.mrb[0].mxu0
        %v4902 = vadd.f32 0.0, %v4901
        %v4903 = vpop.f32.mrb[0].mxu0
        %4904 = vmatprep.mubr.f32.mxu0 0.0
        %4905 = vmatmul.mubr.f32.gmra.mrb[0].mxu0 %v3585
        %v4906 = vpop.f32.mrb[0].mxu0
        %v4907 = vadd.f32 0.0, %v4906
        %v4908 = vpop.f32.mrb[0].mxu0
        %4909 = vmatprep.mubr.f32.mxu0 0.0
        %4910 = vmatmul.mubr.f32.gmra.mrb[0].mxu0 %v3840
        %v4911 = vpop.f32.mrb[0].mxu0
        %v4912 = vadd.f32 0.0, %v4911
        %v4913 = vpop.f32.mrb[0].mxu0
        %4914 = vmatprep.mubr.f32.mxu0 0.0
        %4915 = vmatmul.mubr.f32.gmra.mrb[0].mxu0 %v3983
        %v4916 = vpop.f32.mrb[0].mxu0
        %v4917 = vadd.f32 0.0, %v4916
        %v4918 = vpop.f32.mrb[0].mxu0
        %4919 = vmatprep.mubr.f32.mxu0 0.0
        %4920 = vmatmul.mubr.f32.gmra.mrb[0].mxu0 %v4126
        %v4921 = vpop.f32.mrb[0].mxu0
        %v4922 = vadd.f32 0.0, %v4921
        %v4923 = vpop.f32.mrb[0].mxu0
        %4924 = vdwg.mxu0
        %v4925 = vadd.f32 %v4785, %v4877
        %v4926 = vadd.f32 %v4786, %v4882
        %v4927 = vadd.f32 %v4787, %v4887
        %v4928 = vadd.f32 %v4788, %v4892
        %v4929 = vadd.f32 %v4789, %v4897
        %v4930 = vadd.f32 %v4790, %v4902
        %v4931 = vadd.f32 %v4791, %v4907
        %v4932 = vadd.f32 %v4792, %v4912
        %v4933 = vadd.f32 %v4793, %v4917
        %v4934 = vadd.f32 %v4794, %v4922
        %v4935 = vmax.f32 %v4246, %v4925
        %v4936 = vmax.f32 %v4247, %v4926
        %v4937 = vmax.f32 %v4248, %v4927
        %v4938 = vmax.f32 %v4249, %v4928
        %v4939 = vmax.f32 %v4250, %v4929
        %v4940 = vmax.f32 %v4251, %v4930
        %v4941 = vmax.f32 %v4252, %v4931
        %v4942 = vmax.f32 %v4253, %v4932
        %v4943 = vmax.f32 %v4254, %v4933
        %v4944 = vmax.f32 %v4255, %v4934
        %v4945 = vld [vmem:[%s6] sm:$0x1]
        %v4947 = vlaneseq
        %v4948 = vshrl.u32 %v4947, 7
        %v4949 = vsub.s32 0, %v4948
        %v4950 = vrot.slane %v4945, %v4949
        %v4952 = vadd.f32 %v4935, %v4950
        %v4953 = vadd.f32 %v4936, %v4950
        %v4954 = vadd.f32 %v4937, %v4950
        %v4955 = vadd.f32 %v4938, %v4950
        %v4956 = vadd.f32 %v4939, %v4950
        %v4957 = vadd.f32 %v4940, %v4950
        %v4958 = vadd.f32 %v4941, %v4950
        %v4959 = vadd.f32 %v4942, %v4950
        %v4960 = vadd.f32 %v4943, %v4950
        %v4961 = vadd.f32 %v4944, %v4950
        %v4962 = vmax.f32 %v4952, 0.0
        %v4963 = vmax.f32 %v4953, 0.0
        %v4964 = vmax.f32 %v4954, 0.0
        %v4965 = vmax.f32 %v4955, 0.0
        %v4966 = vmax.f32 %v4956, 0.0
        %v4967 = vmax.f32 %v4957, 0.0
        %v4968 = vmax.f32 %v4958, 0.0
        %v4969 = vmax.f32 %v4959, 0.0
        %v4970 = vmax.f32 %v4960, 0.0
        %v4971 = vmax.f32 %v4961, 0.0
        %v4972 = vmax.f32 %v4962, %v4963
        %v4973 = vmax.f32 %v4964, %v4965
        %v4974 = vmax.f32 %v4966, %v4967
        %v4975 = vmax.f32 %v4968, %v4969
        %v4976 = vmax.f32 %v4970, %v4971
        %v4977 = vld [vmem:[%s7] sm:$0xff]
        %v4978 = vld [vmem:[%s7 + $0x8] sm:$0xff]
        %v4979 = vld [vmem:[%s7 + $0x10] sm:$0xff]
        %v4980 = vld [vmem:[%s7 + $0x18] sm:$0xff]
        %v4981 = vld [vmem:[%s7 + $0x20] sm:$0xff]
        %v4982 = vld [vmem:[%s7 + $0x28] sm:$0xff]
        %v4983 = vld [vmem:[%s7 + $0x30] sm:$0xff]
        %v4984 = vld [vmem:[%s7 + $0x38] sm:$0xff]
        %v4985 = vld [vmem:[%s7 + $0x40] sm:$0xff]
        %v4986 = vld [vmem:[%s7 + $0x48] sm:$0xff]
        %s4987 = scalar_lea.vmem %s7, 80
        %v4988 = vld [vmem:[%s4987] sm:$0xff]
        %v4989 = vld [vmem:[%s4987 + $0x8] sm:$0xff]
        %v4990 = vld [vmem:[%s4987 + $0x10] sm:$0xff]
        %v4991 = vld [vmem:[%s4987 + $0x18] sm:$0xff]
        %v4992 = vld [vmem:[%s4987 + $0x20] sm:$0xff]
        %v4993 = vld [vmem:[%s4987 + $0x28] sm:$0xff]
        %v4994 = vld [vmem:[%s4987 + $0x30] sm:$0xff]
        %v4995 = vld [vmem:[%s4987 + $0x38] sm:$0xff]
        %v4996 = vld [vmem:[%s4987 + $0x40] sm:$0xff]
        %v4997 = vld [vmem:[%s4987 + $0x48] sm:$0xff]
        %vm4998 = vcmask 654336
        %v5000 = vsel %vm4998, %v4973, 0
        %5002 = vmatprep.subr.mxu0 0.0
        %5003 = vmatpush1.msra.mxu0 %v4988
        %5004 = vmatprep.subr.mxu0 0.0
        %5005 = vmatpush1.msra.mxu0 %v4989
        %5006 = vmatprep.subr.mxu0 0.0
        %5007 = vmatpush1.msra.mxu0 %v4990
        %5008 = vmatprep.subr.mxu0 0.0
        %5009 = vmatpush1.msra.mxu0 %v4991
        %5010 = vmatprep.subr.mxu0 0.0
        %5011 = vmatpush1.msra.mxu0 %v4992
        %5012 = vmatprep.subr.mxu0 0.0
        %5013 = vmatpush1.msra.mxu0 %v4993
        %5014 = vmatprep.subr.mxu0 0.0
        %5015 = vmatpush1.msra.mxu0 %v4994
        %5016 = vmatprep.subr.mxu0 0.0
        %5017 = vmatpush1.msra.mxu0 %v4995
        %5018 = vmatprep.subr.mxu0 0.0
        %5019 = vmatpush1.msra.mxu0 %v4996
        %5020 = vmatprep.subr.mxu0 0.0
        %5021 = vmatpush1.msra.mxu0 %v4997
        %5022 = vmatprep.subr.mxu0 0.0
        %5023 = vmatpush1.msra.mxu0 0.0
        %5024 = vmatprep.subr.mxu0 0.0
        %5025 = vmatpush1.msra.mxu0 0.0
        %5026 = vmatprep.subr.mxu0 0.0
        %5027 = vmatpush1.msra.mxu0 0.0
        %5028 = vmatprep.subr.mxu0 0.0
        %5029 = vmatpush1.msra.mxu0 0.0
        %5030 = vmatprep.subr.mxu0 0.0
        %5031 = vmatpush1.msra.mxu0 0.0
        %5032 = vmatprep.subr.mxu0 0.0
        %5033 = vmatpush1.msra.mxu0 0.0
        %5034 = vmatprep.subr.mxu0 0.0
        %5035 = vmatpush1.msra.mxu0 0.0
        %5036 = vmatprep.subr.mxu0 0.0
        %5037 = vmatpush1.msra.mxu0 0.0
        %5038 = vmatprep.subr.mxu0 0.0
        %5039 = vmatpush1.msra.mxu0 0.0
        %5040 = vmatprep.subr.mxu0 0.0
        %5041 = vmatpush1.msra.mxu0 0.0
        %5042 = vmatprep.subr.mxu0 0.0
        %5043 = vmatpush1.msra.mxu0 0.0
        %5044 = vmatprep.subr.mxu0 0.0
        %5045 = vmatpush1.msra.mxu0 0.0
        %5046 = vmatprep.subr.mxu0 0.0
        %5047 = vmatpush1.msra.mxu0 0.0
        %5048 = vmatprep.subr.mxu0 0.0
        %5049 = vmatpush1.msra.mxu0 0.0
        %5050 = vmatprep.subr.mxu0 0.0
        %5051 = vmatpush1.msra.mxu0 0.0
        %5052 = vmatprep.subr.mxu0 0.0
        %5053 = vmatpush1.msra.mxu0 0.0
        %5054 = vmatprep.subr.mxu0 0.0
        %5055 = vmatpush1.msra.mxu0 0.0
        %5056 = vmatprep.subr.mxu0 0.0
        %5057 = vmatpush1.msra.mxu0 0.0
        %5058 = vmatprep.subr.mxu0 0.0
        %5059 = vmatpush1.msra.mxu0 0.0
        %5060 = vmatprep.subr.mxu0 0.0
        %5061 = vmatpush1.msra.mxu0 0.0
        %5062 = vmatprep.subr.mxu0 0.0
        %5063 = vmatpush1.msra.mxu0 0.0
        %5064 = vmatprep.subr.mxu0 0.0
        %5065 = vmatpush1.msra.mxu0 0.0
        %5066 = vmatprep.mubr.f32.mxu0 0.0
        %5067 = vmatmul.mubr.f32.gmra.mrb[0].mxu0 %v5000
        %v5068 = vpop.f32.mrb[0].mxu0
        %v5069 = vadd.f32 0.0, %v5068
        %v5070 = vpop.f32.mrb[0].mxu0
        %5071 = vdwg.mxu0
        %v5073 = vsel %vm4998, %v4972, 0
        %5075 = vmatprep.subr.mxu0 0.0
        %5076 = vmatpush1.msra.mxu0 %v4977
        %5077 = vmatprep.subr.mxu0 0.0
        %5078 = vmatpush1.msra.mxu0 %v4978
        %5079 = vmatprep.subr.mxu0 0.0
        %5080 = vmatpush1.msra.mxu0 %v4979
        %5081 = vmatprep.subr.mxu0 0.0
        %5082 = vmatpush1.msra.mxu0 %v4980
        %5083 = vmatprep.subr.mxu0 0.0
        %5084 = vmatpush1.msra.mxu0 %v4981
        %5085 = vmatprep.subr.mxu0 0.0
        %5086 = vmatpush1.msra.mxu0 %v4982
        %5087 = vmatprep.subr.mxu0 0.0
        %5088 = vmatpush1.msra.mxu0 %v4983
        %5089 = vmatprep.subr.mxu0 0.0
        %5090 = vmatpush1.msra.mxu0 %v4984
        %5091 = vmatprep.subr.mxu0 0.0
        %5092 = vmatpush1.msra.mxu0 %v4985
        %5093 = vmatprep.subr.mxu0 0.0
        %5094 = vmatpush1.msra.mxu0 %v4986
        %5095 = vmatprep.subr.mxu0 0.0
        %5096 = vmatpush1.msra.mxu0 0.0
        %5097 = vmatprep.subr.mxu0 0.0
        %5098 = vmatpush1.msra.mxu0 0.0
        %5099 = vmatprep.subr.mxu0 0.0
        %5100 = vmatpush1.msra.mxu0 0.0
        %5101 = vmatprep.subr.mxu0 0.0
        %5102 = vmatpush1.msra.mxu0 0.0
        %5103 = vmatprep.subr.mxu0 0.0
        %5104 = vmatpush1.msra.mxu0 0.0
        %5105 = vmatprep.subr.mxu0 0.0
        %5106 = vmatpush1.msra.mxu0 0.0
        %5107 = vmatprep.subr.mxu0 0.0
        %5108 = vmatpush1.msra.mxu0 0.0
        %5109 = vmatprep.subr.mxu0 0.0
        %5110 = vmatpush1.msra.mxu0 0.0
        %5111 = vmatprep.subr.mxu0 0.0
        %5112 = vmatpush1.msra.mxu0 0.0
        %5113 = vmatprep.subr.mxu0 0.0
        %5114 = vmatpush1.msra.mxu0 0.0
        %5115 = vmatprep.subr.mxu0 0.0
        %5116 = vmatpush1.msra.mxu0 0.0
        %5117 = vmatprep.subr.mxu0 0.0
        %5118 = vmatpush1.msra.mxu0 0.0
        %5119 = vmatprep.subr.mxu0 0.0
        %5120 = vmatpush1.msra.mxu0 0.0
        %5121 = vmatprep.subr.mxu0 0.0
        %5122 = vmatpush1.msra.mxu0 0.0
        %5123 = vmatprep.subr.mxu0 0.0
        %5124 = vmatpush1.msra.mxu0 0.0
        %5125 = vmatprep.subr.mxu0 0.0
        %5126 = vmatpush1.msra.mxu0 0.0
        %5127 = vmatprep.subr.mxu0 0.0
        %5128 = vmatpush1.msra.mxu0 0.0
        %5129 = vmatprep.subr.mxu0 0.0
        %5130 = vmatpush1.msra.mxu0 0.0
        %5131 = vmatprep.subr.mxu0 0.0
        %5132 = vmatpush1.msra.mxu0 0.0
        %5133 = vmatprep.subr.mxu0 0.0
        %5134 = vmatpush1.msra.mxu0 0.0
        %5135 = vmatprep.subr.mxu0 0.0
        %5136 = vmatpush1.msra.mxu0 0.0
        %5137 = vmatprep.subr.mxu0 0.0
        %5138 = vmatpush1.msra.mxu0 0.0
        %5139 = vmatprep.mubr.f32.mxu0 0.0
        %5140 = vmatmul.mubr.f32.gmra.mrb[0].mxu0 %v5073
        %v5141 = vpop.f32.mrb[0].mxu0
        %v5142 = vadd.f32 %v5069, %v5141
        %v5143 = vpop.f32.mrb[0].mxu0
        %5144 = vdwg.mxu0
        %s5145 = scalar_lea.vmem %s7, 160
        %v5146 = vld [vmem:[%s5145] sm:$0xff]
        %v5147 = vld [vmem:[%s5145 + $0x8] sm:$0xff]
        %v5148 = vld [vmem:[%s5145 + $0x10] sm:$0xff]
        %v5149 = vld [vmem:[%s5145 + $0x18] sm:$0xff]
        %v5150 = vld [vmem:[%s5145 + $0x20] sm:$0xff]
        %v5151 = vld [vmem:[%s5145 + $0x28] sm:$0xff]
        %v5152 = vld [vmem:[%s5145 + $0x30] sm:$0xff]
        %v5153 = vld [vmem:[%s5145 + $0x38] sm:$0xff]
        %v5154 = vld [vmem:[%s5145 + $0x40] sm:$0xff]
        %v5155 = vld [vmem:[%s5145 + $0x48] sm:$0xff]
        %v5157 = vsel %vm4998, %v4974, 0
        %5159 = vmatprep.subr.mxu0 0.0
        %5160 = vmatpush1.msra.mxu0 %v5146
        %5161 = vmatprep.subr.mxu0 0.0
        %5162 = vmatpush1.msra.mxu0 %v5147
        %5163 = vmatprep.subr.mxu0 0.0
        %5164 = vmatpush1.msra.mxu0 %v5148
        %5165 = vmatprep.subr.mxu0 0.0
        %5166 = vmatpush1.msra.mxu0 %v5149
        %5167 = vmatprep.subr.mxu0 0.0
        %5168 = vmatpush1.msra.mxu0 %v5150
        %5169 = vmatprep.subr.mxu0 0.0
        %5170 = vmatpush1.msra.mxu0 %v5151
        %5171 = vmatprep.subr.mxu0 0.0
        %5172 = vmatpush1.msra.mxu0 %v5152
        %5173 = vmatprep.subr.mxu0 0.0
        %5174 = vmatpush1.msra.mxu0 %v5153
        %5175 = vmatprep.subr.mxu0 0.0
        %5176 = vmatpush1.msra.mxu0 %v5154
        %5177 = vmatprep.subr.mxu0 0.0
        %5178 = vmatpush1.msra.mxu0 %v5155
        %5179 = vmatprep.subr.mxu0 0.0
        %5180 = vmatpush1.msra.mxu0 0.0
        %5181 = vmatprep.subr.mxu0 0.0
        %5182 = vmatpush1.msra.mxu0 0.0
        %5183 = vmatprep.subr.mxu0 0.0
        %5184 = vmatpush1.msra.mxu0 0.0
        %5185 = vmatprep.subr.mxu0 0.0
        %5186 = vmatpush1.msra.mxu0 0.0
        %5187 = vmatprep.subr.mxu0 0.0
        %5188 = vmatpush1.msra.mxu0 0.0
        %5189 = vmatprep.subr.mxu0 0.0
        %5190 = vmatpush1.msra.mxu0 0.0
        %5191 = vmatprep.subr.mxu0 0.0
        %5192 = vmatpush1.msra.mxu0 0.0
        %5193 = vmatprep.subr.mxu0 0.0
        %5194 = vmatpush1.msra.mxu0 0.0
        %5195 = vmatprep.subr.mxu0 0.0
        %5196 = vmatpush1.msra.mxu0 0.0
        %5197 = vmatprep.subr.mxu0 0.0
        %5198 = vmatpush1.msra.mxu0 0.0
        %5199 = vmatprep.subr.mxu0 0.0
        %5200 = vmatpush1.msra.mxu0 0.0
        %5201 = vmatprep.subr.mxu0 0.0
        %5202 = vmatpush1.msra.mxu0 0.0
        %5203 = vmatprep.subr.mxu0 0.0
        %5204 = vmatpush1.msra.mxu0 0.0
        %5205 = vmatprep.subr.mxu0 0.0
        %5206 = vmatpush1.msra.mxu0 0.0
        %5207 = vmatprep.subr.mxu0 0.0
        %5208 = vmatpush1.msra.mxu0 0.0
        %5209 = vmatprep.subr.mxu0 0.0
        %5210 = vmatpush1.msra.mxu0 0.0
        %5211 = vmatprep.subr.mxu0 0.0
        %5212 = vmatpush1.msra.mxu0 0.0
        %5213 = vmatprep.subr.mxu0 0.0
        %5214 = vmatpush1.msra.mxu0 0.0
        %5215 = vmatprep.subr.mxu0 0.0
        %5216 = vmatpush1.msra.mxu0 0.0
        %5217 = vmatprep.subr.mxu0 0.0
        %5218 = vmatpush1.msra.mxu0 0.0
        %5219 = vmatprep.subr.mxu0 0.0
        %5220 = vmatpush1.msra.mxu0 0.0
        %5221 = vmatprep.subr.mxu0 0.0
        %5222 = vmatpush1.msra.mxu0 0.0
        %5223 = vmatprep.mubr.f32.mxu0 0.0
        %5224 = vmatmul.mubr.f32.gmra.mrb[0].mxu0 %v5157
        %v5225 = vpop.f32.mrb[0].mxu0
        %v5226 = vadd.f32 0.0, %v5225
        %v5227 = vpop.f32.mrb[0].mxu0
        %5228 = vdwg.mxu0
        %v5229 = vadd.f32 %v5142, %v5226
        %s5230 = scalar_lea.vmem %s7, 240
        %v5231 = vld [vmem:[%s5230] sm:$0xff]
        %v5232 = vld [vmem:[%s5230 + $0x8] sm:$0xff]
        %v5233 = vld [vmem:[%s5230 + $0x10] sm:$0xff]
        %v5234 = vld [vmem:[%s5230 + $0x18] sm:$0xff]
        %v5235 = vld [vmem:[%s5230 + $0x20] sm:$0xff]
        %v5236 = vld [vmem:[%s5230 + $0x28] sm:$0xff]
        %v5237 = vld [vmem:[%s5230 + $0x30] sm:$0xff]
        %v5238 = vld [vmem:[%s5230 + $0x38] sm:$0xff]
        %v5239 = vld [vmem:[%s5230 + $0x40] sm:$0xff]
        %v5240 = vld [vmem:[%s5230 + $0x48] sm:$0xff]
        %v5242 = vsel %vm4998, %v4975, 0
        %5244 = vmatprep.subr.mxu0 0.0
        %5245 = vmatpush1.msra.mxu0 %v5231
        %5246 = vmatprep.subr.mxu0 0.0
        %5247 = vmatpush1.msra.mxu0 %v5232
        %5248 = vmatprep.subr.mxu0 0.0
        %5249 = vmatpush1.msra.mxu0 %v5233
        %5250 = vmatprep.subr.mxu0 0.0
        %5251 = vmatpush1.msra.mxu0 %v5234
        %5252 = vmatprep.subr.mxu0 0.0
        %5253 = vmatpush1.msra.mxu0 %v5235
        %5254 = vmatprep.subr.mxu0 0.0
        %5255 = vmatpush1.msra.mxu0 %v5236
        %5256 = vmatprep.subr.mxu0 0.0
        %5257 = vmatpush1.msra.mxu0 %v5237
        %5258 = vmatprep.subr.mxu0 0.0
        %5259 = vmatpush1.msra.mxu0 %v5238
        %5260 = vmatprep.subr.mxu0 0.0
        %5261 = vmatpush1.msra.mxu0 %v5239
        %5262 = vmatprep.subr.mxu0 0.0
        %5263 = vmatpush1.msra.mxu0 %v5240
        %5264 = vmatprep.subr.mxu0 0.0
        %5265 = vmatpush1.msra.mxu0 0.0
        %5266 = vmatprep.subr.mxu0 0.0
        %5267 = vmatpush1.msra.mxu0 0.0
        %5268 = vmatprep.subr.mxu0 0.0
        %5269 = vmatpush1.msra.mxu0 0.0
        %5270 = vmatprep.subr.mxu0 0.0
        %5271 = vmatpush1.msra.mxu0 0.0
        %5272 = vmatprep.subr.mxu0 0.0
        %5273 = vmatpush1.msra.mxu0 0.0
        %5274 = vmatprep.subr.mxu0 0.0
        %5275 = vmatpush1.msra.mxu0 0.0
        %5276 = vmatprep.subr.mxu0 0.0
        %5277 = vmatpush1.msra.mxu0 0.0
        %5278 = vmatprep.subr.mxu0 0.0
        %5279 = vmatpush1.msra.mxu0 0.0
        %5280 = vmatprep.subr.mxu0 0.0
        %5281 = vmatpush1.msra.mxu0 0.0
        %5282 = vmatprep.subr.mxu0 0.0
        %5283 = vmatpush1.msra.mxu0 0.0
        %5284 = vmatprep.subr.mxu0 0.0
        %5285 = vmatpush1.msra.mxu0 0.0
        %5286 = vmatprep.subr.mxu0 0.0
        %5287 = vmatpush1.msra.mxu0 0.0
        %5288 = vmatprep.subr.mxu0 0.0
        %5289 = vmatpush1.msra.mxu0 0.0
        %5290 = vmatprep.subr.mxu0 0.0
        %5291 = vmatpush1.msra.mxu0 0.0
        %5292 = vmatprep.subr.mxu0 0.0
        %5293 = vmatpush1.msra.mxu0 0.0
        %5294 = vmatprep.subr.mxu0 0.0
        %5295 = vmatpush1.msra.mxu0 0.0
        %5296 = vmatprep.subr.mxu0 0.0
        %5297 = vmatpush1.msra.mxu0 0.0
        %5298 = vmatprep.subr.mxu0 0.0
        %5299 = vmatpush1.msra.mxu0 0.0
        %5300 = vmatprep.subr.mxu0 0.0
        %5301 = vmatpush1.msra.mxu0 0.0
        %5302 = vmatprep.subr.mxu0 0.0
        %5303 = vmatpush1.msra.mxu0 0.0
        %5304 = vmatprep.subr.mxu0 0.0
        %5305 = vmatpush1.msra.mxu0 0.0
        %5306 = vmatprep.subr.mxu0 0.0
        %5307 = vmatpush1.msra.mxu0 0.0
        %5308 = vmatprep.mubr.f32.mxu0 0.0
        %5309 = vmatmul.mubr.f32.gmra.mrb[0].mxu0 %v5242
        %v5310 = vpop.f32.mrb[0].mxu0
        %v5311 = vadd.f32 0.0, %v5310
        %v5312 = vpop.f32.mrb[0].mxu0
        %5313 = vdwg.mxu0
        %v5314 = vadd.f32 %v5229, %v5311
        %s5315 = scalar_lea.vmem %s7, 320
        %v5316 = vld [vmem:[%s5315] sm:$0xff]
        %v5317 = vld [vmem:[%s5315 + $0x8] sm:$0xff]
        %v5318 = vld [vmem:[%s5315 + $0x10] sm:$0xff]
        %v5319 = vld [vmem:[%s5315 + $0x18] sm:$0xff]
        %v5320 = vld [vmem:[%s5315 + $0x20] sm:$0xff]
        %v5321 = vld [vmem:[%s5315 + $0x28] sm:$0xff]
        %v5322 = vld [vmem:[%s5315 + $0x30] sm:$0xff]
        %v5323 = vld [vmem:[%s5315 + $0x38] sm:$0xff]
        %v5324 = vld [vmem:[%s5315 + $0x40] sm:$0xff]
        %v5325 = vld [vmem:[%s5315 + $0x48] sm:$0xff]
        %v5327 = vsel %vm4998, %v4976, 0
        %5329 = vmatprep.subr.mxu0 0.0
        %5330 = vmatpush1.msra.mxu0 %v5316
        %5331 = vmatprep.subr.mxu0 0.0
        %5332 = vmatpush1.msra.mxu0 %v5317
        %5333 = vmatprep.subr.mxu0 0.0
        %5334 = vmatpush1.msra.mxu0 %v5318
        %5335 = vmatprep.subr.mxu0 0.0
        %5336 = vmatpush1.msra.mxu0 %v5319
        %5337 = vmatprep.subr.mxu0 0.0
        %5338 = vmatpush1.msra.mxu0 %v5320
        %5339 = vmatprep.subr.mxu0 0.0
        %5340 = vmatpush1.msra.mxu0 %v5321
        %5341 = vmatprep.subr.mxu0 0.0
        %5342 = vmatpush1.msra.mxu0 %v5322
        %5343 = vmatprep.subr.mxu0 0.0
        %5344 = vmatpush1.msra.mxu0 %v5323
        %5345 = vmatprep.subr.mxu0 0.0
        %5346 = vmatpush1.msra.mxu0 %v5324
        %5347 = vmatprep.subr.mxu0 0.0
        %5348 = vmatpush1.msra.mxu0 %v5325
        %5349 = vmatprep.subr.mxu0 0.0
        %5350 = vmatpush1.msra.mxu0 0.0
        %5351 = vmatprep.subr.mxu0 0.0
        %5352 = vmatpush1.msra.mxu0 0.0
        %5353 = vmatprep.subr.mxu0 0.0
        %5354 = vmatpush1.msra.mxu0 0.0
        %5355 = vmatprep.subr.mxu0 0.0
        %5356 = vmatpush1.msra.mxu0 0.0
        %5357 = vmatprep.subr.mxu0 0.0
        %5358 = vmatpush1.msra.mxu0 0.0
        %5359 = vmatprep.subr.mxu0 0.0
        %5360 = vmatpush1.msra.mxu0 0.0
        %5361 = vmatprep.subr.mxu0 0.0
        %5362 = vmatpush1.msra.mxu0 0.0
        %5363 = vmatprep.subr.mxu0 0.0
        %5364 = vmatpush1.msra.mxu0 0.0
        %5365 = vmatprep.subr.mxu0 0.0
        %5366 = vmatpush1.msra.mxu0 0.0
        %5367 = vmatprep.subr.mxu0 0.0
        %5368 = vmatpush1.msra.mxu0 0.0
        %5369 = vmatprep.subr.mxu0 0.0
        %5370 = vmatpush1.msra.mxu0 0.0
        %5371 = vmatprep.subr.mxu0 0.0
        %5372 = vmatpush1.msra.mxu0 0.0
        %5373 = vmatprep.subr.mxu0 0.0
        %5374 = vmatpush1.msra.mxu0 0.0
        %5375 = vmatprep.subr.mxu0 0.0
        %5376 = vmatpush1.msra.mxu0 0.0
        %5377 = vmatprep.subr.mxu0 0.0
        %5378 = vmatpush1.msra.mxu0 0.0
        %5379 = vmatprep.subr.mxu0 0.0
        %5380 = vmatpush1.msra.mxu0 0.0
        %5381 = vmatprep.subr.mxu0 0.0
        %5382 = vmatpush1.msra.mxu0 0.0
        %5383 = vmatprep.subr.mxu0 0.0
        %5384 = vmatpush1.msra.mxu0 0.0
        %5385 = vmatprep.subr.mxu0 0.0
        %5386 = vmatpush1.msra.mxu0 0.0
        %5387 = vmatprep.subr.mxu0 0.0
        %5388 = vmatpush1.msra.mxu0 0.0
        %5389 = vmatprep.subr.mxu0 0.0
        %5390 = vmatpush1.msra.mxu0 0.0
        %5391 = vmatprep.subr.mxu0 0.0
        %5392 = vmatpush1.msra.mxu0 0.0
        %5393 = vmatprep.mubr.f32.mxu0 0.0
        %5394 = vmatmul.mubr.f32.gmra.mrb[0].mxu0 %v5327
        %v5395 = vpop.f32.mrb[0].mxu0
        %v5396 = vadd.f32 0.0, %v5395
        %v5397 = vpop.f32.mrb[0].mxu0
        %5398 = vdwg.mxu0
        %v5399 = vadd.f32 %v5314, %v5396
        %v5400 = vld [vmem:[%s8] sm:$0x1]
        %v5402 = vlaneseq
        %v5403 = vshrl.u32 %v5402, 7
        %v5404 = vsub.s32 0, %v5403
        %v5405 = vrot.slane %v5400, %v5404
        %v5407 = vadd.f32 %v5399, %v5405
        %v5408 = vmax.f32 %v5407, 0.0
        %v5409 = vld [vmem:[%s9] sm:$0xff]
        %v5410 = vld [vmem:[%s9 + $0x8] sm:$0xff]
        %v5411 = vld [vmem:[%s9 + $0x10] sm:$0xff]
        %v5412 = vld [vmem:[%s9 + $0x18] sm:$0xff]
        %v5413 = vld [vmem:[%s9 + $0x20] sm:$0xff]
        %v5414 = vld [vmem:[%s9 + $0x28] sm:$0xff]
        %v5415 = vld [vmem:[%s9 + $0x30] sm:$0xff]
        %v5416 = vld [vmem:[%s9 + $0x38] sm:$0xff]
        %v5417 = vld [vmem:[%s9 + $0x40] sm:$0xff]
        %v5418 = vld [vmem:[%s9 + $0x48] sm:$0xff]
        %v5419 = vld [vmem:[%s9 + $0x50] sm:$0xff]
        %v5420 = vld [vmem:[%s9 + $0x58] sm:$0xff]
        %v5421 = vld [vmem:[%s9 + $0x60] sm:$0xff]
        %v5422 = vld [vmem:[%s9 + $0x68] sm:$0xff]
        %v5423 = vld [vmem:[%s9 + $0x70] sm:$0xff]
        %v5424 = vld [vmem:[%s10] sm:$0x1]
        %v5426 = vlaneseq
        %v5427 = vshrl.u32 %v5426, 7
        %v5428 = vsub.s32 0, %v5427
        %v5429 = vrot.slane %v5424, %v5428
        %vm5431 = vcmask 982016
        %v5433 = vsel %vm5431, %v5408, 0
        %5435 = vmatprep.subr.mxu0 0.0
        %5436 = vmatpush1.msra.mxu0 %v5409
        %5437 = vmatprep.subr.mxu0 0.0
        %5438 = vmatpush1.msra.mxu0 %v5410
        %5439 = vmatprep.subr.mxu0 0.0
        %5440 = vmatpush1.msra.mxu0 %v5411
        %5441 = vmatprep.subr.mxu0 0.0
        %5442 = vmatpush1.msra.mxu0 %v5412
        %5443 = vmatprep.subr.mxu0 0.0
        %5444 = vmatpush1.msra.mxu0 %v5413
        %5445 = vmatprep.subr.mxu0 0.0
        %5446 = vmatpush1.msra.mxu0 %v5414
        %5447 = vmatprep.subr.mxu0 0.0
        %5448 = vmatpush1.msra.mxu0 %v5415
        %5449 = vmatprep.subr.mxu0 0.0
        %5450 = vmatpush1.msra.mxu0 %v5416
        %5451 = vmatprep.subr.mxu0 0.0
        %5452 = vmatpush1.msra.mxu0 %v5417
        %5453 = vmatprep.subr.mxu0 0.0
        %5454 = vmatpush1.msra.mxu0 %v5418
        %5455 = vmatprep.subr.mxu0 0.0
        %5456 = vmatpush1.msra.mxu0 %v5419
        %5457 = vmatprep.subr.mxu0 0.0
        %5458 = vmatpush1.msra.mxu0 %v5420
        %5459 = vmatprep.subr.mxu0 0.0
        %5460 = vmatpush1.msra.mxu0 %v5421
        %5461 = vmatprep.subr.mxu0 0.0
        %5462 = vmatpush1.msra.mxu0 %v5422
        %5463 = vmatprep.subr.mxu0 0.0
        %5464 = vmatpush1.msra.mxu0 %v5423
        %5465 = vmatprep.subr.mxu0 0.0
        %5466 = vmatpush1.msra.mxu0 0.0
        %5467 = vmatprep.subr.mxu0 0.0
        %5468 = vmatpush1.msra.mxu0 0.0
        %5469 = vmatprep.subr.mxu0 0.0
        %5470 = vmatpush1.msra.mxu0 0.0
        %5471 = vmatprep.subr.mxu0 0.0
        %5472 = vmatpush1.msra.mxu0 0.0
        %5473 = vmatprep.subr.mxu0 0.0
        %5474 = vmatpush1.msra.mxu0 0.0
        %5475 = vmatprep.subr.mxu0 0.0
        %5476 = vmatpush1.msra.mxu0 0.0
        %5477 = vmatprep.subr.mxu0 0.0
        %5478 = vmatpush1.msra.mxu0 0.0
        %5479 = vmatprep.subr.mxu0 0.0
        %5480 = vmatpush1.msra.mxu0 0.0
        %5481 = vmatprep.subr.mxu0 0.0
        %5482 = vmatpush1.msra.mxu0 0.0
        %5483 = vmatprep.subr.mxu0 0.0
        %5484 = vmatpush1.msra.mxu0 0.0
        %5485 = vmatprep.subr.mxu0 0.0
        %5486 = vmatpush1.msra.mxu0 0.0
        %5487 = vmatprep.subr.mxu0 0.0
        %5488 = vmatpush1.msra.mxu0 0.0
        %5489 = vmatprep.subr.mxu0 0.0
        %5490 = vmatpush1.msra.mxu0 0.0
        %5491 = vmatprep.subr.mxu0 0.0
        %5492 = vmatpush1.msra.mxu0 0.0
        %5493 = vmatprep.subr.mxu0 0.0
        %5494 = vmatpush1.msra.mxu0 0.0
        %5495 = vmatprep.subr.mxu0 0.0
        %5496 = vmatpush1.msra.mxu0 0.0
        %5497 = vmatprep.subr.mxu0 0.0
        %5498 = vmatpush1.msra.mxu0 0.0
        %5499 = vmatprep.mubr.f32.mxu0 0.0
        %5500 = vmatmul.mubr.f32.gmra.mrb[0].mxu0 %v5433
        %v5501 = vpop.f32.mrb[0].mxu0
        %v5502 = vadd.f32 %v5429, %v5501
        %v5503 = vpop.f32.mrb[0].mxu0
        %5504 = vdwg.mxu0
        %v5505 = vmax.f32 %v5502, 0.0
        %v5506 = vld [vmem:[%s11] sm:$0xff]
        %v5507 = vld [vmem:[%s11 + $0x8] sm:$0xff]
        %v5508 = vld [vmem:[%s11 + $0x10] sm:$0xff]
        %v5509 = vld [vmem:[%s11 + $0x18] sm:$0xff]
        %v5510 = vld [vmem:[%s11 + $0x20] sm:$0xff]
        %v5511 = vld [vmem:[%s11 + $0x28] sm:$0xff]
        %v5512 = vld [vmem:[%s11 + $0x30] sm:$0xff]
        %v5513 = vld [vmem:[%s11 + $0x38] sm:$0xff]
        %v5514 = vld [vmem:[%s11 + $0x40] sm:$0xff]
        %v5515 = vld [vmem:[%s11 + $0x48] sm:$0xff]
        %v5516 = vld [vmem:[%s11 + $0x50] sm:$0xf]
        %v5517 = vld [vmem:[%s12] sm:$0x1]
        %v5519 = vlaneseq
        %v5520 = vshrl.u32 %v5519, 7
        %v5521 = vsub.s32 0, %v5520
        %v5522 = vrot.slane %v5517, %v5521
        %v5525 = vsel %vm3556, %v5505, 0
        %v5528 = vsel %vm3587, %v5516, 0
        %5530 = vmatprep.subr.mxu0 0.0
        %5531 = vmatpush1.msra.mxu0 %v5506
        %5532 = vmatprep.subr.mxu0 0.0
        %5533 = vmatpush1.msra.mxu0 %v5507
        %5534 = vmatprep.subr.mxu0 0.0
        %5535 = vmatpush1.msra.mxu0 %v5508
        %5536 = vmatprep.subr.mxu0 0.0
        %5537 = vmatpush1.msra.mxu0 %v5509
        %5538 = vmatprep.subr.mxu0 0.0
        %5539 = vmatpush1.msra.mxu0 %v5510
        %5540 = vmatprep.subr.mxu0 0.0
        %5541 = vmatpush1.msra.mxu0 %v5511
        %5542 = vmatprep.subr.mxu0 0.0
        %5543 = vmatpush1.msra.mxu0 %v5512
        %5544 = vmatprep.subr.mxu0 0.0
        %5545 = vmatpush1.msra.mxu0 %v5513
        %5546 = vmatprep.subr.mxu0 0.0
        %5547 = vmatpush1.msra.mxu0 %v5514
        %5548 = vmatprep.subr.mxu0 0.0
        %5549 = vmatpush1.msra.mxu0 %v5515
        %5550 = vmatprep.subr.mxu0 0.0
        %5551 = vmatpush1.msra.mxu0 %v5528
        %5552 = vmatprep.subr.mxu0 0.0
        %5553 = vmatpush1.msra.mxu0 0.0
        %5554 = vmatprep.subr.mxu0 0.0
        %5555 = vmatpush1.msra.mxu0 0.0
        %5556 = vmatprep.subr.mxu0 0.0
        %5557 = vmatpush1.msra.mxu0 0.0
        %5558 = vmatprep.subr.mxu0 0.0
        %5559 = vmatpush1.msra.mxu0 0.0
        %5560 = vmatprep.subr.mxu0 0.0
        %5561 = vmatpush1.msra.mxu0 0.0
        %5562 = vmatprep.subr.mxu0 0.0
        %5563 = vmatpush1.msra.mxu0 0.0
        %5564 = vmatprep.subr.mxu0 0.0
        %5565 = vmatpush1.msra.mxu0 0.0
        %5566 = vmatprep.subr.mxu0 0.0
        %5567 = vmatpush1.msra.mxu0 0.0
        %5568 = vmatprep.subr.mxu0 0.0
        %5569 = vmatpush1.msra.mxu0 0.0
        %5570 = vmatprep.subr.mxu0 0.0
        %5571 = vmatpush1.msra.mxu0 0.0
        %5572 = vmatprep.subr.mxu0 0.0
        %5573 = vmatpush1.msra.mxu0 0.0
        %5574 = vmatprep.subr.mxu0 0.0
        %5575 = vmatpush1.msra.mxu0 0.0
        %5576 = vmatprep.subr.mxu0 0.0
        %5577 = vmatpush1.msra.mxu0 0.0
        %5578 = vmatprep.subr.mxu0 0.0
        %5579 = vmatpush1.msra.mxu0 0.0
        %5580 = vmatprep.subr.mxu0 0.0
        %5581 = vmatpush1.msra.mxu0 0.0
        %5582 = vmatprep.subr.mxu0 0.0
        %5583 = vmatpush1.msra.mxu0 0.0
        %5584 = vmatprep.subr.mxu0 0.0
        %5585 = vmatpush1.msra.mxu0 0.0
        %5586 = vmatprep.subr.mxu0 0.0
        %5587 = vmatpush1.msra.mxu0 0.0
        %5588 = vmatprep.subr.mxu0 0.0
        %5589 = vmatpush1.msra.mxu0 0.0
        %5590 = vmatprep.subr.mxu0 0.0
        %5591 = vmatpush1.msra.mxu0 0.0
        %5592 = vmatprep.subr.mxu0 0.0
        %5593 = vmatpush1.msra.mxu0 0.0
        %5594 = vmatprep.mubr.f32.mxu0 0.0
        %5595 = vmatmul.mubr.f32.gmra.mrb[0].mxu0 %v5525
        %v5596 = vpop.f32.mrb[0].mxu0
        %v5597 = vadd.f32 %v5522, %v5596
        %v5598 = vpop.f32.mrb[0].mxu0
        %5599 = vdwg.mxu0
        %5600 = vst [vmem:[%s596] sm:$0xff] %v5597
        %s5601 = sand.u32 %s313, 1
        %s5602 = scalar_lea.sflag [#allocation4], %s5601
        %s5603 = sand.u32 %s313, 1
        %s5604 = smul.addr %s5603, 8
        %s5605 = scalar_lea.vmem [#allocation3], %s5604
        // Predicated region
        $region111: #{lenet5_forward.1} parent=105 // pred_check
          %p5606 = pneg %p323
        $region112: #{lenet5_forward.1} parent=105 // pred_check_branch
          %5608 = sbr.rel (%p5606) target = $region114
        $region113: #{lenet5_forward.1} parent=105 // pred_region
          %s5610 = ssub.s32 128, 128
          %5611 = vsyncadd %s5602, %s5610
          %s5612 = smul.addr %s27, 128
          %s5613 = scalar_lea.hbm %s13, %s5612
          %s5615 = sshll.u32 %s5605, 4
          %s5616 = int_to_ptr.vmem [resolvable:$true] %s5615
          %5618 = dma.vmem_to_hbm [thread:$0]  %s5616, 128, %s5613, %s5602
        $region114: #{lenet5_forward.1} parent=105 // pred_fallthru
          _
      $region106: #{lenet5_forward.1} parent=5 // pred_fallthru
        _
      %p5619 = scmp.le.s32.totalorder 2, %s22
      // Predicated region
      $region115: #{lenet5_forward.1} parent=5 // pred_check
        %p5620 = pneg %p5619
      $region116: #{lenet5_forward.1} parent=5 // pred_check_branch
        %5622 = sbr.rel (%p5620) target = $region118
      $region117: #{lenet5_forward.1} parent=5 // pred_region
        %s5623 = ssub.s32 %s22, 2
        // Predicated region
        $region119: #{lenet5_forward.1} parent=117 // pred_check
          %p5624 = pneg %p329
        $region120: #{lenet5_forward.1} parent=117 // pred_check_branch
          %5626 = sbr.rel (%p5624) target = $region122
        $region121: #{lenet5_forward.1} parent=117 // pred_region
          %s5627 = sand.u32 %s314, 1
          %s5628 = scalar_lea.sflag [#allocation4], %s5627
          %s5629 = sand.u32 %s314, 1
          %s5630 = smul.addr %s5629, 8
          %s5631 = scalar_lea.vmem [#allocation3], %s5630
          %5632 = dma.done %s5628, 128
        $region122: #{lenet5_forward.1} parent=117 // pred_fallthru
          _
      $region118: #{lenet5_forward.1} parent=5 // pred_fallthru
        _
    $region6: #{lenet5_forward.1} parent=1 // loop_footer
      %s26 = sadd.s32 1, %s22
    $region7: #{lenet5_forward.1} parent=1 // loop_footer_branch
      %21 = sbr.rel target = $region3
    $region8: #{lenet5_forward.1} parent=1 // loop_exit
      _
    %5633 = vsyncpa [#allocation4], 1
    %s5634 = scalar_lea.sflag [#allocation4], 1
    %5635 = vsyncpa %s5634, 1

</llo_original>
